<compile_context>
chip_gen: v7x
topology: tpu7x:2x2x1
jax: 0.10.0
libtpu: 0.0.40
codegen_flags: <defaults>
</compile_context>

<pallas_src>
import jax
import jax.numpy as jnp
from jax import lax
from jax.experimental import pallas as pl
from jax.experimental.pallas import tpu as pltpu


def _round_up(x, m):
    return (x + m - 1) // m * m


# -----------------------------------------------------------------------------
# Fused GAN kernel: per (batch b, sequence-tile s) grid step
#   ids tile -> embed -> generator MLP -> write `generated` tile
#            -> discriminator projection -> masked-mean partial pooling
#   final s step per batch: classifier matmul -> logits row
# -----------------------------------------------------------------------------
def gan_fused_kernel(ids_ref, pw_ref, emb_ref, w1_ref, b1_ref, w2_ref, b2_ref,
                     wd_ref, bd_ref, wc_ref, bc_ref,
                     gen_ref, logits_ref, psum_ref):
    s = pl.program_id(1)

    @pl.when(s == 0)
    def _():
        psum_ref[...] = jnp.zeros_like(psum_ref)

    ts = ids_ref.shape[0]
    vocab = emb_ref.shape[0]

    # Embedding gather fused as a one-hot MXU matmul against the resident
    # table (no jnp.take HBM round trip).  Fine for the small synthetic
    # vocab used here.
    # TODO(synk): for a 30k-word BERT vocab, replace with a manual DMA row
    # gather (table stays in HBM) instead of a one-hot matmul.
    onehot = (ids_ref[...] ==
              lax.broadcasted_iota(jnp.int32, (ts, vocab), 1)
              ).astype(jnp.bfloat16)                                  # [TS, V]
    x = jnp.dot(onehot, emb_ref[...],
                preferred_element_type=jnp.float32)                   # [TS, H] f32

    # ---- generator: residual GELU MLP (bf16 MXU operands, f32 elementwise) --
    h1 = jnp.dot(x.astype(jnp.bfloat16), w1_ref[...],
                 preferred_element_type=jnp.float32)                  # [TS, F]
    # NOTE: tanh-approximate GELU; PyTorch nn.GELU default is exact erf
    # (small numeric difference, the reference generator is synthetic anyway).
    h1 = jax.nn.gelu(h1 + b1_ref[...], approximate=True)
    y = jnp.dot(h1.astype(jnp.bfloat16), w2_ref[...],
                preferred_element_type=jnp.float32)                   # [TS, H]
    gen = x + y + b2_ref[...]                                         # f32 residual
    gen_ref[...] = gen.astype(gen_ref.dtype)   # f32 writeback, never re-read

    # ---- discriminator: projection + masked-mean pooling (fused in VMEM) ----
    hd = jnp.dot(gen.astype(jnp.bfloat16), wd_ref[...],
                 preferred_element_type=jnp.float32)                  # [TS, D]
    hd = jnp.tanh(hd + bd_ref[...])
    # pw already holds mask / count_b, so the masked mean is a VPU multiply +
    # cross-sublane reduction into the [1, D] accumulator (no MXU pass).
    psum_ref[...] += jnp.sum(hd * pw_ref[...], axis=0, keepdims=True)

    @pl.when(s == pl.num_programs(1) - 1)
    def _():
        logits_ref[...] = (
            jnp.dot(psum_ref[...].astype(jnp.bfloat16), wc_ref[...],
                    preferred_element_type=jnp.float32) + bc_ref[...])  # [1, Cpad]


# -----------------------------------------------------------------------------
# GAN.forward equivalent
# -----------------------------------------------------------------------------
def gan_forward(input_ids, attention_mask, gen_params, disc_params, *, ts=512):
    emb, w1, b1, w2, b2 = (gen_params["emb"], gen_params["w1"], gen_params["b1"],
                           gen_params["w2"], gen_params["b2"])
    wd, bd, wc, bc = (disc_params["wd"], disc_params["bd"],
                      disc_params["wc"], disc_params["bc"])
    B, S = input_ids.shape
    V, H = emb.shape
    F = w1.shape[1]
    D = wd.shape[1]
    C = wc.shape[1]
    c_pad = _round_up(max(C, 128), 128)          # lane-dense logits store

    # Sequence tile (token rows per grid step).  512+ rows keeps the ~0.35us
    # per-step pipeline overhead well below tile compute/DMA; clamped to S
    # for short sequences and rounded to the f32/int32 sublane quantum.
    ts = max(8, min(ts, _round_up(S, 8)))
    ts = _round_up(ts, 8)
    s_pad = _round_up(S, ts)
    n_s = s_pad // ts

    ids = input_ids.astype(jnp.int32)
    mask_f = attention_mask.astype(jnp.float32)
    counts = jnp.sum(mask_f, axis=1, keepdims=True)                   # [B, 1]
    # Fold the masked-mean divide into the pooling weights (exact f32 divide,
    # once per batch).  Fully-masked rows pool to ~0 instead of NaN/inf.
    poolw = mask_f / (counts + 1e-6)                                  # [B, S]
    if s_pad != S:
        ids = jnp.pad(ids, ((0, 0), (0, s_pad - S)))
        poolw = jnp.pad(poolw, ((0, 0), (0, s_pad - S)))              # zero weight
    ids3 = ids[..., None]                     # [B, s_pad, 1] int32
    pw3 = poolw[..., None]                    # [B, s_pad, 1] f32

    wc_p = jnp.pad(wc, ((0, 0), (0, c_pad - C)))
    bc_p = jnp.pad(bc, ((0, 0), (0, c_pad - C)))

    tok_map = lambda b, s: (b, s, 0)

    def run(single_buffer_weights):
        # Constant-index (resident) blocks: single-buffer them to halve their
        # VMEM footprint (Pallas double-buffers by default even when the
        # block index never changes) -- matters at realistic H/F on v7x's
        # 64 MiB VMEM.
        kw = dict(pipeline_mode=pl.Buffered(1)) if single_buffer_weights else {}

        def rspec(shape):
            return pl.BlockSpec(shape, lambda b, s: (0, 0), **kw)

        return pl.pallas_call(
            gan_fused_kernel,
            out_shape=(
                jax.ShapeDtypeStruct((B, s_pad, H), jnp.float32),   # generated
                jax.ShapeDtypeStruct((B, 1, c_pad), jnp.float32),   # logits
            ),
            grid=(B, n_s),
            in_specs=[
                pl.BlockSpec((None, ts, 1), tok_map),     # input-id tile
                pl.BlockSpec((None, ts, 1), tok_map),     # pooling-weight tile
                rspec((V, H)),                            # embedding table
                rspec((H, F)), rspec((1, F)),             # generator MLP
                rspec((F, H)), rspec((1, H)),
                rspec((H, D)), rspec((1, D)),             # discriminator proj
                rspec((D, c_pad)), rspec((1, c_pad)),     # classifier (padded)
            ],
            out_specs=(
                pl.BlockSpec((None, ts, H), tok_map),
                pl.BlockSpec((None, 1, c_pad), lambda b, s: (b, 0, 0)),
            ),
            scratch_shapes=[pltpu.VMEM((1, D), jnp.float32)],  # pooled partial sum
            compiler_params=pltpu.CompilerParams(
                # batch axis parallel (v7x megacore split); sequence axis is
                # the pooling reduction -> arbitrary, trailing.
                dimension_semantics=("parallel", "arbitrary"),
                # Above v5e's 16 MiB / v6e-v7x's 32 MiB scoped defaults,
                # below v7x's 64 MiB physical VMEM.
                vmem_limit_bytes=48 * 1024 * 1024,
            ),
        )(ids3, pw3, emb, w1, b1, w2, b2, wd, bd, wc_p, bc_p)

    try:
        generated_p, logits_p = run(True)
    except Exception:
        # pipeline_mode=pl.Buffered(1) not supported on this jax build;
        # identical kernel, weights just get default double-buffering.
        generated_p, logits_p = run(False)

    generated = generated_p[:, :S, :]                 # [B, S, H] float32
    sentiment = logits_p[:, 0, :C]                    # [B, C]    float32
    return generated, sentiment
    # TODO(synk): un_freeze_weights (freeze/unfreeze) is a training-time
    # requires_grad toggle with no forward-pass compute; nothing to lower.


# -----------------------------------------------------------------------------
# Deterministic parameter init + pure-JAX reference + example run
# -----------------------------------------------------------------------------
def init_params(key, vocab, hidden, ffn, disc_dim, num_classes):
    ks = jax.random.split(key, 5)
    scale = 0.02
    gen_params = {
        "emb": (scale * jax.random.normal(ks[0], (vocab, hidden))
                ).astype(jnp.bfloat16),
        "w1": (scale * jax.random.normal(ks[1], (hidden, ffn))
               ).astype(jnp.bfloat16),
        "b1": jnp.zeros((1, ffn), jnp.float32),
        "w2": (scale * jax.random.normal(ks[2], (ffn, hidden))
               ).astype(jnp.bfloat16),
        "b2": jnp.zeros((1, hidden), jnp.float32),
    }
    disc_params = {
        "wd": (scale * jax.random.normal(ks[3], (hidden, disc_dim))
               ).astype(jnp.bfloat16),
        "bd": jnp.zeros((1, disc_dim), jnp.float32),
        "wc": (scale * jax.random.normal(ks[4], (disc_dim, num_classes))
               ).astype(jnp.bfloat16),
        "bc": jnp.zeros((1, num_classes), jnp.float32),
    }
    return gen_params, disc_params


def gan_reference(input_ids, attention_mask, gen_params, disc_params):
    """Pure-JAX reference mirroring the kernel's numerics (bf16 MXU, f32 acc)."""
    emb = gen_params["emb"]
    B, S = input_ids.shape
    H = emb.shape[1]
    x = emb[input_ids.reshape(-1)].astype(jnp.float32)                # [M, H]
    h1 = jnp.dot(x.astype(jnp.bfloat16), gen_params["w1"],
                 preferred_element_type=jnp.float32)
    h1 = jax.nn.gelu(h1 + gen_params["b1"], approximate=True)
    y = jnp.dot(h1.astype(jnp.bfloat16), gen_params["w2"],
                preferred_element_type=jnp.float32)
    gen = x + y + gen_params["b2"]                                    # [M, H] f32
    hd = jnp.dot(gen.astype(jnp.bfloat16), disc_params["wd"],
                 preferred_element_type=jnp.float32)
    hd = jnp.tanh(hd + disc_params["bd"])
    mask = attention_mask.astype(jnp.float32)
    w = (mask / (jnp.sum(mask, axis=1, keepdims=True) + 1e-6)).reshape(-1, 1)
    pooled = jnp.sum((hd * w).reshape(B, S, -1), axis=1)              # [B, D]
    logits = jnp.dot(pooled.astype(jnp.bfloat16), disc_params["wc"],
                     preferred_element_type=jnp.float32) + disc_params["bc"]
    return gen.reshape(B, S, H), logits


if __name__ == "__main__":
    B, S = 2, 128
    VOCAB = 128
    HIDDEN = 128        # lane-dense; on v6e/v7x, multiples of 256 fill the MXU better
    FFN = 256
    DISC_DIM = 128
    NUM_CLASSES = 2     # padded to 128 lanes inside the kernel

    key = jax.random.PRNGKey(0)
    k_ids, k_params = jax.random.split(key)

    input_ids = jax.random.randint(k_ids, (B, S), 0, VOCAB, dtype=jnp.int32)
    # first example fully attended, second example padded after position 100
    seq_lens = jnp.array([[S], [100]], dtype=jnp.int32)
    attention_mask = (jnp.arange(S)[None, :] < seq_lens).astype(jnp.int32)

    gen_params, disc_params = init_params(k_params, VOCAB, HIDDEN, FFN,
                                          DISC_DIM, NUM_CLASSES)

    # ts=64 here only to exercise the multi-tile pooling reduction at this toy
    # sequence length; production default is ts=512.
    generated, sentiment = gan_forward(input_ids, attention_mask,
                                       gen_params, disc_params, ts=64)
    jax.block_until_ready((generated, sentiment))

    assert generated.shape == (B, S, HIDDEN)
    assert sentiment.shape == (B, NUM_CLASSES)

    ref_gen, ref_sent = gan_reference(input_ids, attention_mask,
                                      gen_params, disc_params)
    assert jnp.allclose(generated, ref_gen, atol=5e-2, rtol=5e-2)
    assert jnp.allclose(sentiment, ref_sent, atol=5e-2, rtol=5e-2)

    print("KERNEL_OK")
</pallas_src>

<mosaic_0001>
module attributes {stable_mosaic.version = 11 : i64} {
  func.func @gan_fused_kernel(%arg0: i32, %arg1: i32, %arg2: memref<1x64x1xi32, #tpu.memory_space<vmem>>, %arg3: memref<1x64x1xf32, #tpu.memory_space<vmem>>, %arg4: memref<128x128xbf16, #tpu.memory_space<vmem>>, %arg5: memref<128x256xbf16, #tpu.memory_space<vmem>>, %arg6: memref<1x256xf32, #tpu.memory_space<vmem>>, %arg7: memref<256x128xbf16, #tpu.memory_space<vmem>>, %arg8: memref<1x128xf32, #tpu.memory_space<vmem>>, %arg9: memref<128x128xbf16, #tpu.memory_space<vmem>>, %arg10: memref<1x128xf32, #tpu.memory_space<vmem>>, %arg11: memref<128x128xbf16, #tpu.memory_space<vmem>>, %arg12: memref<1x128xf32, #tpu.memory_space<vmem>>, %arg13: memref<1x64x128xf32, #tpu.memory_space<vmem>>, %arg14: memref<1x1x128xf32, #tpu.memory_space<vmem>>, %arg15: memref<1x128xf32, #tpu.memory_space<vmem>>) attributes {dimension_semantics = [#tpu.dimension_semantics<parallel>, #tpu.dimension_semantics<arbitrary>], iteration_bounds = array<i64: 2, 2>, scalar_prefetch = 0 : i64, scratch_operands = 1 : i64, tpu.core_type = #tpu.core_type<tc>, window_params = [{transform_indices = @transform_0, window_bounds = array<i64: 1, 64, 1>}, {transform_indices = @transform_1, window_bounds = array<i64: 1, 64, 1>}, {pipeline_mode = #tpu.pipeline_mode<synchronous>, transform_indices = @transform_2, window_bounds = array<i64: 128, 128>}, {pipeline_mode = #tpu.pipeline_mode<synchronous>, transform_indices = @transform_3, window_bounds = array<i64: 128, 256>}, {pipeline_mode = #tpu.pipeline_mode<synchronous>, transform_indices = @transform_4, window_bounds = array<i64: 1, 256>}, {pipeline_mode = #tpu.pipeline_mode<synchronous>, transform_indices = @transform_5, window_bounds = array<i64: 256, 128>}, {pipeline_mode = #tpu.pipeline_mode<synchronous>, transform_indices = @transform_6, window_bounds = array<i64: 1, 128>}, {pipeline_mode = #tpu.pipeline_mode<synchronous>, transform_indices = @transform_7, window_bounds = array<i64: 128, 128>}, {pipeline_mode = #tpu.pipeline_mode<synchronous>, transform_indices = @transform_8, window_bounds = array<i64: 1, 128>}, {pipeline_mode = #tpu.pipeline_mode<synchronous>, transform_indices = @transform_9, window_bounds = array<i64: 128, 128>}, {pipeline_mode = #tpu.pipeline_mode<synchronous>, transform_indices = @transform_10, window_bounds = array<i64: 1, 128>}, {transform_indices = @transform_11, window_bounds = array<i64: 1, 64, 128>}, {transform_indices = @transform_12, window_bounds = array<i64: 1, 1, 128>}]} {
    %c0_i32 = arith.constant 0 : i32
    %0 = arith.cmpi eq, %arg1, %c0_i32 : i32
    %1 = arith.extui %0 : i1 to i32
    %c0_i32_0 = arith.constant 0 : i32
    %2 = arith.cmpi ne, %1, %c0_i32_0 : i32
    scf.if %2 {
      %cst_36 = arith.constant 0.000000e+00 : f32
      %61 = vector.broadcast %cst_36 : f32 to vector<1x128xf32>
      %c0_37 = arith.constant 0 : index
      %c0_38 = arith.constant 0 : index
      %62 = vector.load %arg15[%c0_37, %c0_38] : memref<1x128xf32, #tpu.memory_space<vmem>>, vector<1x128xf32>
      tpu.vector_store %arg15[%c0_37, %c0_38], %61 {strides = array<i32>} : memref<1x128xf32, #tpu.memory_space<vmem>>, vector<1x128xf32>,
    } else {
    }
    %c0 = arith.constant 0 : index
    %c0_1 = arith.constant 0 : index
    %c0_2 = arith.constant 0 : index
    %3 = vector.load %arg2[%c0, %c0_1, %c0_2] : memref<1x64x1xi32, #tpu.memory_space<vmem>>, vector<1x64x1xi32>
    %4 = vector.shape_cast %3 : vector<1x64x1xi32> to vector<64x1xi32>
    %5 = tpu.iota {dimensions = array<i32: 1>} : vector<64x128xi32>
    %6 = vector.broadcast %4 : vector<64x1xi32> to vector<64x128xi32>
    %7 = arith.cmpi eq, %6, %5 : vector<64x128xi32>
    %8 = arith.extui %7 : vector<64x128xi1> to vector<64x128xi32>
    %9 = arith.sitofp %8 : vector<64x128xi32> to vector<64x128xf32>
    %10 = arith.truncf %9 : vector<64x128xf32> to vector<64x128xbf16>
    %c0_3 = arith.constant 0 : index
    %c0_4 = arith.constant 0 : index
    %11 = vector.load %arg4[%c0_3, %c0_4] : memref<128x128xbf16, #tpu.memory_space<vmem>>, vector<128x128xbf16>
    %cst = arith.constant dense<0.000000e+00> : vector<64x128xf32>
    %12 = tpu.matmul %10, %11, %cst {dimension_numbers = #tpu.dot_dimension_numbers<[1], [0], [0], [1], [0, 0, 1, 1], [], []>} : vector<64x128xbf16>, vector<128x128xbf16>, vector<64x128xf32> -> vector<64x128xf32>
    %13 = arith.truncf %12 : vector<64x128xf32> to vector<64x128xbf16>
    %c0_5 = arith.constant 0 : index
    %c0_6 = arith.constant 0 : index
    %14 = vector.load %arg5[%c0_5, %c0_6] : memref<128x256xbf16, #tpu.memory_space<vmem>>, vector<128x256xbf16>
    %cst_7 = arith.constant dense<0.000000e+00> : vector<64x256xf32>
    %15 = tpu.matmul %13, %14, %cst_7 {dimension_numbers = #tpu.dot_dimension_numbers<[1], [0], [0], [1], [0, 0, 1, 1], [], []>} : vector<64x128xbf16>, vector<128x256xbf16>, vector<64x256xf32> -> vector<64x256xf32>
    %c0_8 = arith.constant 0 : index
    %c0_9 = arith.constant 0 : index
    %16 = vector.load %arg6[%c0_8, %c0_9] : memref<1x256xf32, #tpu.memory_space<vmem>>, vector<1x256xf32>
    %17 = vector.broadcast %16 : vector<1x256xf32> to vector<64x256xf32>
    %18 = arith.addf %15, %17 : vector<64x256xf32>
    %19 = arith.mulf %18, %18 : vector<64x256xf32>
    %20 = arith.mulf %18, %19 : vector<64x256xf32>
    %cst_10 = arith.constant 4.471500e-02 : f32
    %21 = vector.broadcast %cst_10 : f32 to vector<64x256xf32>
    %22 = arith.mulf %21, %20 : vector<64x256xf32>
    %23 = arith.addf %18, %22 : vector<64x256xf32>
    %cst_11 = arith.constant 0.797884583 : f32
    %24 = vector.broadcast %cst_11 : f32 to vector<64x256xf32>
    %25 = arith.mulf %24, %23 : vector<64x256xf32>
    %26 = math.tanh %25 : vector<64x256xf32>
    %cst_12 = arith.constant 1.000000e+00 : f32
    %27 = vector.broadcast %cst_12 : f32 to vector<64x256xf32>
    %28 = arith.addf %27, %26 : vector<64x256xf32>
    %cst_13 = arith.constant 5.000000e-01 : f32
    %29 = vector.broadcast %cst_13 : f32 to vector<64x256xf32>
    %30 = arith.mulf %29, %28 : vector<64x256xf32>
    %31 = arith.mulf %18, %30 : vector<64x256xf32>
    %32 = arith.truncf %31 : vector<64x256xf32> to vector<64x256xbf16>
    %c0_14 = arith.constant 0 : index
    %c0_15 = arith.constant 0 : index
    %33 = vector.load %arg7[%c0_14, %c0_15] : memref<256x128xbf16, #tpu.memory_space<vmem>>, vector<256x128xbf16>
    %cst_16 = arith.constant dense<0.000000e+00> : vector<64x128xf32>
    %34 = tpu.matmul %32, %33, %cst_16 {dimension_numbers = #tpu.dot_dimension_numbers<[1], [0], [0], [1], [0, 0, 1, 1], [], []>} : vector<64x256xbf16>, vector<256x128xbf16>, vector<64x128xf32> -> vector<64x128xf32>
    %35 = arith.addf %12, %34 : vector<64x128xf32>
    %c0_17 = arith.constant 0 : index
    %c0_18 = arith.constant 0 : index
    %36 = vector.load %arg8[%c0_17, %c0_18] : memref<1x128xf32, #tpu.memory_space<vmem>>, vector<1x128xf32>
    %37 = vector.broadcast %36 : vector<1x128xf32> to vector<64x128xf32>
    %38 = arith.addf %35, %37 : vector<64x128xf32>
    %c0_19 = arith.constant 0 : index
    %c0_20 = arith.constant 0 : index
    %c0_21 = arith.constant 0 : index
    %39 = vector.load %arg13[%c0_19, %c0_20, %c0_21] : memref<1x64x128xf32, #tpu.memory_space<vmem>>, vector<1x64x128xf32>
    %40 = vector.shape_cast %39 : vector<1x64x128xf32> to vector<64x128xf32>
    %41 = vector.shape_cast %38 : vector<64x128xf32> to vector<1x64x128xf32>
    tpu.vector_store %arg13[%c0_19, %c0_20, %c0_21], %41 {strides = array<i32>} : memref<1x64x128xf32, #tpu.memory_space<vmem>>, vector<1x64x128xf32>,
    %42 = arith.truncf %38 : vector<64x128xf32> to vector<64x128xbf16>
    %c0_22 = arith.constant 0 : index
    %c0_23 = arith.constant 0 : index
    %43 = vector.load %arg9[%c0_22, %c0_23] : memref<128x128xbf16, #tpu.memory_space<vmem>>, vector<128x128xbf16>
    %cst_24 = arith.constant dense<0.000000e+00> : vector<64x128xf32>
    %44 = tpu.matmul %42, %43, %cst_24 {dimension_numbers = #tpu.dot_dimension_numbers<[1], [0], [0], [1], [0, 0, 1, 1], [], []>} : vector<64x128xbf16>, vector<128x128xbf16>, vector<64x128xf32> -> vector<64x128xf32>
    %c0_25 = arith.constant 0 : index
    %c0_26 = arith.constant 0 : index
    %45 = vector.load %arg10[%c0_25, %c0_26] : memref<1x128xf32, #tpu.memory_space<vmem>>, vector<1x128xf32>
    %46 = vector.broadcast %45 : vector<1x128xf32> to vector<64x128xf32>
    %47 = arith.addf %44, %46 : vector<64x128xf32>
    %48 = math.tanh %47 : vector<64x128xf32>
    %c0_27 = arith.constant 0 : index
    %c0_28 = arith.constant 0 : index
    %49 = vector.load %arg15[%c0_27, %c0_28] : memref<1x128xf32, #tpu.memory_space<vmem>>, vector<1x128xf32>
    %c0_29 = arith.constant 0 : index
    %c0_30 = arith.constant 0 : index
    %c0_31 = arith.constant 0 : index
    %50 = vector.load %arg3[%c0_29, %c0_30, %c0_31] : memref<1x64x1xf32, #tpu.memory_space<vmem>>, vector<1x64x1xf32>
    %51 = vector.shape_cast %50 : vector<1x64x1xf32> to vector<64x1xf32>
    %52 = vector.broadcast %51 : vector<64x1xf32> to vector<64x128xf32>
    %53 = arith.mulf %48, %52 : vector<64x128xf32>
    %cst_32 = arith.constant dense<0.000000e+00> : vector<128xf32>
    %54 = vector.multi_reduction <add>, %53, %cst_32 [0] : vector<64x128xf32> to vector<128xf32>
    %55 = vector.shape_cast %54 : vector<128xf32> to vector<1x128xf32>
    %56 = arith.addf %49, %55 : vector<1x128xf32>
    %c0_33 = arith.constant 0 : index
    %c0_34 = arith.constant 0 : index
    %57 = vector.load %arg15[%c0_33, %c0_34] : memref<1x128xf32, #tpu.memory_space<vmem>>, vector<1x128xf32>
    tpu.vector_store %arg15[%c0_33, %c0_34], %56 {strides = array<i32>} : memref<1x128xf32, #tpu.memory_space<vmem>>, vector<1x128xf32>,
    %c1_i32 = arith.constant 1 : i32
    %58 = arith.cmpi eq, %arg1, %c1_i32 : i32
    %59 = arith.extui %58 : i1 to i32
    %c0_i32_35 = arith.constant 0 : i32
    %60 = arith.cmpi ne, %59, %c0_i32_35 : i32
    scf.if %60 {
      %c0_36 = arith.constant 0 : index
      %c0_37 = arith.constant 0 : index
      %61 = vector.load %arg15[%c0_36, %c0_37] : memref<1x128xf32, #tpu.memory_space<vmem>>, vector<1x128xf32>
      %62 = arith.truncf %61 : vector<1x128xf32> to vector<1x128xbf16>
      %c0_38 = arith.constant 0 : index
      %c0_39 = arith.constant 0 : index
      %63 = vector.load %arg11[%c0_38, %c0_39] : memref<128x128xbf16, #tpu.memory_space<vmem>>, vector<128x128xbf16>
      %cst_40 = arith.constant dense<0.000000e+00> : vector<1x128xf32>
      %64 = tpu.matmul %62, %63, %cst_40 {dimension_numbers = #tpu.dot_dimension_numbers<[1], [0], [0], [1], [0, 0, 1, 1], [], []>} : vector<1x128xbf16>, vector<128x128xbf16>, vector<1x128xf32> -> vector<1x128xf32>
      %c0_41 = arith.constant 0 : index
      %c0_42 = arith.constant 0 : index
      %65 = vector.load %arg12[%c0_41, %c0_42] : memref<1x128xf32, #tpu.memory_space<vmem>>, vector<1x128xf32>
      %66 = arith.addf %64, %65 : vector<1x128xf32>
      %c0_43 = arith.constant 0 : index
      %c0_44 = arith.constant 0 : index
      %c0_45 = arith.constant 0 : index
      %67 = vector.load %arg14[%c0_43, %c0_44, %c0_45] : memref<1x1x128xf32, #tpu.memory_space<vmem>>, vector<1x1x128xf32>
      %68 = vector.shape_cast %67 : vector<1x1x128xf32> to vector<1x128xf32>
      %69 = vector.shape_cast %66 : vector<1x128xf32> to vector<1x1x128xf32>
      tpu.vector_store %arg14[%c0_43, %c0_44, %c0_45], %69 {strides = array<i32>} : memref<1x1x128xf32, #tpu.memory_space<vmem>>, vector<1x1x128xf32>,
    } else {
    }
    return
  }
  func.func @transform_0(%arg0: i32, %arg1: i32) -> (i32, i32, i32) {
    %c0_i32 = arith.constant 0 : i32
    %c0_i32_0 = arith.constant 0 : i32
    return %arg0, %arg1, %c0_i32 : i32, i32, i32
  }
  func.func @transform_1(%arg0: i32, %arg1: i32) -> (i32, i32, i32) {
    %c0_i32 = arith.constant 0 : i32
    %c0_i32_0 = arith.constant 0 : i32
    return %arg0, %arg1, %c0_i32 : i32, i32, i32
  }
  func.func @transform_2(%arg0: i32, %arg1: i32) -> (i32, i32) {
    %c0_i32 = arith.constant 0 : i32
    %c0_i32_0 = arith.constant 0 : i32
    %c0_i32_1 = arith.constant 0 : i32
    return %c0_i32, %c0_i32_0 : i32, i32
  }
  func.func @transform_3(%arg0: i32, %arg1: i32) -> (i32, i32) {
    %c0_i32 = arith.constant 0 : i32
    %c0_i32_0 = arith.constant 0 : i32
    %c0_i32_1 = arith.constant 0 : i32
    return %c0_i32, %c0_i32_0 : i32, i32
  }
  func.func @transform_4(%arg0: i32, %arg1: i32) -> (i32, i32) {
    %c0_i32 = arith.constant 0 : i32
    %c0_i32_0 = arith.constant 0 : i32
    %c0_i32_1 = arith.constant 0 : i32
    return %c0_i32, %c0_i32_0 : i32, i32
  }
  func.func @transform_5(%arg0: i32, %arg1: i32) -> (i32, i32) {
    %c0_i32 = arith.constant 0 : i32
    %c0_i32_0 = arith.constant 0 : i32
    %c0_i32_1 = arith.constant 0 : i32
    return %c0_i32, %c0_i32_0 : i32, i32
  }
  func.func @transform_6(%arg0: i32, %arg1: i32) -> (i32, i32) {
    %c0_i32 = arith.constant 0 : i32
    %c0_i32_0 = arith.constant 0 : i32
    %c0_i32_1 = arith.constant 0 : i32
    return %c0_i32, %c0_i32_0 : i32, i32
  }
  func.func @transform_7(%arg0: i32, %arg1: i32) -> (i32, i32) {
    %c0_i32 = arith.constant 0 : i32
    %c0_i32_0 = arith.constant 0 : i32
    %c0_i32_1 = arith.constant 0 : i32
    return %c0_i32, %c0_i32_0 : i32, i32
  }
  func.func @transform_8(%arg0: i32, %arg1: i32) -> (i32, i32) {
    %c0_i32 = arith.constant 0 : i32
    %c0_i32_0 = arith.constant 0 : i32
    %c0_i32_1 = arith.constant 0 : i32
    return %c0_i32, %c0_i32_0 : i32, i32
  }
  func.func @transform_9(%arg0: i32, %arg1: i32) -> (i32, i32) {
    %c0_i32 = arith.constant 0 : i32
    %c0_i32_0 = arith.constant 0 : i32
    %c0_i32_1 = arith.constant 0 : i32
    return %c0_i32, %c0_i32_0 : i32, i32
  }
  func.func @transform_10(%arg0: i32, %arg1: i32) -> (i32, i32) {
    %c0_i32 = arith.constant 0 : i32
    %c0_i32_0 = arith.constant 0 : i32
    %c0_i32_1 = arith.constant 0 : i32
    return %c0_i32, %c0_i32_0 : i32, i32
  }
  func.func @transform_11(%arg0: i32, %arg1: i32) -> (i32, i32, i32) {
    %c0_i32 = arith.constant 0 : i32
    %c0_i32_0 = arith.constant 0 : i32
    return %arg0, %arg1, %c0_i32 : i32, i32, i32
  }
  func.func @transform_12(%arg0: i32, %arg1: i32) -> (i32, i32, i32) {
    %c0_i32 = arith.constant 0 : i32
    %c0_i32_0 = arith.constant 0 : i32
    %c0_i32_1 = arith.constant 0 : i32
    return %arg0, %c0_i32, %c0_i32_0 : i32, i32, i32
  }
}

module attributes {stable_mosaic.version = 11 : i64} {
  func.func @gan_fused_kernel(%arg0: i32, %arg1: i32, %arg2: memref<1x64x1xi32, #tpu.memory_space<vmem>>, %arg3: memref<1x64x1xf32, #tpu.memory_space<vmem>>, %arg4: memref<128x128xbf16, #tpu.memory_space<vmem>>, %arg5: memref<128x256xbf16, #tpu.memory_space<vmem>>, %arg6: memref<1x256xf32, #tpu.memory_space<vmem>>, %arg7: memref<256x128xbf16, #tpu.memory_space<vmem>>, %arg8: memref<1x128xf32, #tpu.memory_space<vmem>>, %arg9: memref<128x128xbf16, #tpu.memory_space<vmem>>, %arg10: memref<1x128xf32, #tpu.memory_space<vmem>>, %arg11: memref<128x128xbf16, #tpu.memory_space<vmem>>, %arg12: memref<1x128xf32, #tpu.memory_space<vmem>>, %arg13: memref<1x64x128xf32, #tpu.memory_space<vmem>>, %arg14: memref<1x1x128xf32, #tpu.memory_space<vmem>>, %arg15: memref<1x128xf32, #tpu.memory_space<vmem>>) attributes {dimension_semantics = [#tpu.dimension_semantics<parallel>, #tpu.dimension_semantics<arbitrary>], iteration_bounds = array<i64: 2, 2>, scalar_prefetch = 0 : i64, scratch_operands = 1 : i64, tpu.core_type = #tpu.core_type<tc>, window_params = [{transform_indices = @transform_0, window_bounds = array<i64: 1, 64, 1>}, {transform_indices = @transform_1, window_bounds = array<i64: 1, 64, 1>}, {pipeline_mode = #tpu.pipeline_mode<synchronous>, transform_indices = @transform_2, window_bounds = array<i64: 128, 128>}, {pipeline_mode = #tpu.pipeline_mode<synchronous>, transform_indices = @transform_3, window_bounds = array<i64: 128, 256>}, {pipeline_mode = #tpu.pipeline_mode<synchronous>, transform_indices = @transform_4, window_bounds = array<i64: 1, 256>}, {pipeline_mode = #tpu.pipeline_mode<synchronous>, transform_indices = @transform_5, window_bounds = array<i64: 256, 128>}, {pipeline_mode = #tpu.pipeline_mode<synchronous>, transform_indices = @transform_6, window_bounds = array<i64: 1, 128>}, {pipeline_mode = #tpu.pipeline_mode<synchronous>, transform_indices = @transform_7, window_bounds = array<i64: 128, 128>}, {pipeline_mode = #tpu.pipeline_mode<synchronous>, transform_indices = @transform_8, window_bounds = array<i64: 1, 128>}, {pipeline_mode = #tpu.pipeline_mode<synchronous>, transform_indices = @transform_9, window_bounds = array<i64: 128, 128>}, {pipeline_mode = #tpu.pipeline_mode<synchronous>, transform_indices = @transform_10, window_bounds = array<i64: 1, 128>}, {transform_indices = @transform_11, window_bounds = array<i64: 1, 64, 128>}, {transform_indices = @transform_12, window_bounds = array<i64: 1, 1, 128>}]} {
    %c0_i32 = arith.constant 0 : i32
    %0 = arith.cmpi eq, %arg1, %c0_i32 : i32
    %1 = arith.extui %0 : i1 to i32
    %c0_i32_0 = arith.constant 0 : i32
    %2 = arith.cmpi ne, %1, %c0_i32_0 : i32
    scf.if %2 {
      %cst_36 = arith.constant 0.000000e+00 : f32
      %61 = vector.broadcast %cst_36 : f32 to vector<1x128xf32>
      %c0_37 = arith.constant 0 : index
      %c0_38 = arith.constant 0 : index
      %62 = vector.load %arg15[%c0_37, %c0_38] : memref<1x128xf32, #tpu.memory_space<vmem>>, vector<1x128xf32>
      tpu.vector_store %arg15[%c0_37, %c0_38], %61 {strides = array<i32>} : memref<1x128xf32, #tpu.memory_space<vmem>>, vector<1x128xf32>,
    } else {
    }
    %c0 = arith.constant 0 : index
    %c0_1 = arith.constant 0 : index
    %c0_2 = arith.constant 0 : index
    %3 = vector.load %arg2[%c0, %c0_1, %c0_2] : memref<1x64x1xi32, #tpu.memory_space<vmem>>, vector<1x64x1xi32>
    %4 = vector.shape_cast %3 : vector<1x64x1xi32> to vector<64x1xi32>
    %5 = tpu.iota {dimensions = array<i32: 1>} : vector<64x128xi32>
    %6 = vector.broadcast %4 : vector<64x1xi32> to vector<64x128xi32>
    %7 = arith.cmpi eq, %6, %5 : vector<64x128xi32>
    %8 = arith.extui %7 : vector<64x128xi1> to vector<64x128xi32>
    %9 = arith.sitofp %8 : vector<64x128xi32> to vector<64x128xf32>
    %10 = arith.truncf %9 : vector<64x128xf32> to vector<64x128xbf16>
    %c0_3 = arith.constant 0 : index
    %c0_4 = arith.constant 0 : index
    %11 = vector.load %arg4[%c0_3, %c0_4] : memref<128x128xbf16, #tpu.memory_space<vmem>>, vector<128x128xbf16>
    %cst = arith.constant dense<0.000000e+00> : vector<64x128xf32>
    %12 = tpu.matmul %10, %11, %cst {dimension_numbers = #tpu.dot_dimension_numbers<[1], [0], [0], [1], [0, 0, 1, 1], [], []>} : vector<64x128xbf16>, vector<128x128xbf16>, vector<64x128xf32> -> vector<64x128xf32>
    %13 = arith.truncf %12 : vector<64x128xf32> to vector<64x128xbf16>
    %c0_5 = arith.constant 0 : index
    %c0_6 = arith.constant 0 : index
    %14 = vector.load %arg5[%c0_5, %c0_6] : memref<128x256xbf16, #tpu.memory_space<vmem>>, vector<128x256xbf16>
    %cst_7 = arith.constant dense<0.000000e+00> : vector<64x256xf32>
    %15 = tpu.matmul %13, %14, %cst_7 {dimension_numbers = #tpu.dot_dimension_numbers<[1], [0], [0], [1], [0, 0, 1, 1], [], []>} : vector<64x128xbf16>, vector<128x256xbf16>, vector<64x256xf32> -> vector<64x256xf32>
    %c0_8 = arith.constant 0 : index
    %c0_9 = arith.constant 0 : index
    %16 = vector.load %arg6[%c0_8, %c0_9] : memref<1x256xf32, #tpu.memory_space<vmem>>, vector<1x256xf32>
    %17 = vector.broadcast %16 : vector<1x256xf32> to vector<64x256xf32>
    %18 = arith.addf %15, %17 : vector<64x256xf32>
    %19 = arith.mulf %18, %18 : vector<64x256xf32>
    %20 = arith.mulf %18, %19 : vector<64x256xf32>
    %cst_10 = arith.constant 4.471500e-02 : f32
    %21 = vector.broadcast %cst_10 : f32 to vector<64x256xf32>
    %22 = arith.mulf %21, %20 : vector<64x256xf32>
    %23 = arith.addf %18, %22 : vector<64x256xf32>
    %cst_11 = arith.constant 0.797884583 : f32
    %24 = vector.broadcast %cst_11 : f32 to vector<64x256xf32>
    %25 = arith.mulf %24, %23 : vector<64x256xf32>
    %26 = math.tanh %25 : vector<64x256xf32>
    %cst_12 = arith.constant 1.000000e+00 : f32
    %27 = vector.broadcast %cst_12 : f32 to vector<64x256xf32>
    %28 = arith.addf %27, %26 : vector<64x256xf32>
    %cst_13 = arith.constant 5.000000e-01 : f32
    %29 = vector.broadcast %cst_13 : f32 to vector<64x256xf32>
    %30 = arith.mulf %29, %28 : vector<64x256xf32>
    %31 = arith.mulf %18, %30 : vector<64x256xf32>
    %32 = arith.truncf %31 : vector<64x256xf32> to vector<64x256xbf16>
    %c0_14 = arith.constant 0 : index
    %c0_15 = arith.constant 0 : index
    %33 = vector.load %arg7[%c0_14, %c0_15] : memref<256x128xbf16, #tpu.memory_space<vmem>>, vector<256x128xbf16>
    %cst_16 = arith.constant dense<0.000000e+00> : vector<64x128xf32>
    %34 = tpu.matmul %32, %33, %cst_16 {dimension_numbers = #tpu.dot_dimension_numbers<[1], [0], [0], [1], [0, 0, 1, 1], [], []>} : vector<64x256xbf16>, vector<256x128xbf16>, vector<64x128xf32> -> vector<64x128xf32>
    %35 = arith.addf %12, %34 : vector<64x128xf32>
    %c0_17 = arith.constant 0 : index
    %c0_18 = arith.constant 0 : index
    %36 = vector.load %arg8[%c0_17, %c0_18] : memref<1x128xf32, #tpu.memory_space<vmem>>, vector<1x128xf32>
    %37 = vector.broadcast %36 : vector<1x128xf32> to vector<64x128xf32>
    %38 = arith.addf %35, %37 : vector<64x128xf32>
    %c0_19 = arith.constant 0 : index
    %c0_20 = arith.constant 0 : index
    %c0_21 = arith.constant 0 : index
    %39 = vector.load %arg13[%c0_19, %c0_20, %c0_21] : memref<1x64x128xf32, #tpu.memory_space<vmem>>, vector<1x64x128xf32>
    %40 = vector.shape_cast %39 : vector<1x64x128xf32> to vector<64x128xf32>
    %41 = vector.shape_cast %38 : vector<64x128xf32> to vector<1x64x128xf32>
    tpu.vector_store %arg13[%c0_19, %c0_20, %c0_21], %41 {strides = array<i32>} : memref<1x64x128xf32, #tpu.memory_space<vmem>>, vector<1x64x128xf32>,
    %42 = arith.truncf %38 : vector<64x128xf32> to vector<64x128xbf16>
    %c0_22 = arith.constant 0 : index
    %c0_23 = arith.constant 0 : index
    %43 = vector.load %arg9[%c0_22, %c0_23] : memref<128x128xbf16, #tpu.memory_space<vmem>>, vector<128x128xbf16>
    %cst_24 = arith.constant dense<0.000000e+00> : vector<64x128xf32>
    %44 = tpu.matmul %42, %43, %cst_24 {dimension_numbers = #tpu.dot_dimension_numbers<[1], [0], [0], [1], [0, 0, 1, 1], [], []>} : vector<64x128xbf16>, vector<128x128xbf16>, vector<64x128xf32> -> vector<64x128xf32>
    %c0_25 = arith.constant 0 : index
    %c0_26 = arith.constant 0 : index
    %45 = vector.load %arg10[%c0_25, %c0_26] : memref<1x128xf32, #tpu.memory_space<vmem>>, vector<1x128xf32>
    %46 = vector.broadcast %45 : vector<1x128xf32> to vector<64x128xf32>
    %47 = arith.addf %44, %46 : vector<64x128xf32>
    %48 = math.tanh %47 : vector<64x128xf32>
    %c0_27 = arith.constant 0 : index
    %c0_28 = arith.constant 0 : index
    %49 = vector.load %arg15[%c0_27, %c0_28] : memref<1x128xf32, #tpu.memory_space<vmem>>, vector<1x128xf32>
    %c0_29 = arith.constant 0 : index
    %c0_30 = arith.constant 0 : index
    %c0_31 = arith.constant 0 : index
    %50 = vector.load %arg3[%c0_29, %c0_30, %c0_31] : memref<1x64x1xf32, #tpu.memory_space<vmem>>, vector<1x64x1xf32>
    %51 = vector.shape_cast %50 : vector<1x64x1xf32> to vector<64x1xf32>
    %52 = vector.broadcast %51 : vector<64x1xf32> to vector<64x128xf32>
    %53 = arith.mulf %48, %52 : vector<64x128xf32>
    %cst_32 = arith.constant dense<0.000000e+00> : vector<128xf32>
    %54 = vector.multi_reduction <add>, %53, %cst_32 [0] : vector<64x128xf32> to vector<128xf32>
    %55 = vector.shape_cast %54 : vector<128xf32> to vector<1x128xf32>
    %56 = arith.addf %49, %55 : vector<1x128xf32>
    %c0_33 = arith.constant 0 : index
    %c0_34 = arith.constant 0 : index
    %57 = vector.load %arg15[%c0_33, %c0_34] : memref<1x128xf32, #tpu.memory_space<vmem>>, vector<1x128xf32>
    tpu.vector_store %arg15[%c0_33, %c0_34], %56 {strides = array<i32>} : memref<1x128xf32, #tpu.memory_space<vmem>>, vector<1x128xf32>,
    %c1_i32 = arith.constant 1 : i32
    %58 = arith.cmpi eq, %arg1, %c1_i32 : i32
    %59 = arith.extui %58 : i1 to i32
    %c0_i32_35 = arith.constant 0 : i32
    %60 = arith.cmpi ne, %59, %c0_i32_35 : i32
    scf.if %60 {
      %c0_36 = arith.constant 0 : index
      %c0_37 = arith.constant 0 : index
      %61 = vector.load %arg15[%c0_36, %c0_37] : memref<1x128xf32, #tpu.memory_space<vmem>>, vector<1x128xf32>
      %62 = arith.truncf %61 : vector<1x128xf32> to vector<1x128xbf16>
      %c0_38 = arith.constant 0 : index
      %c0_39 = arith.constant 0 : index
      %63 = vector.load %arg11[%c0_38, %c0_39] : memref<128x128xbf16, #tpu.memory_space<vmem>>, vector<128x128xbf16>
      %cst_40 = arith.constant dense<0.000000e+00> : vector<1x128xf32>
      %64 = tpu.matmul %62, %63, %cst_40 {dimension_numbers = #tpu.dot_dimension_numbers<[1], [0], [0], [1], [0, 0, 1, 1], [], []>} : vector<1x128xbf16>, vector<128x128xbf16>, vector<1x128xf32> -> vector<1x128xf32>
      %c0_41 = arith.constant 0 : index
      %c0_42 = arith.constant 0 : index
      %65 = vector.load %arg12[%c0_41, %c0_42] : memref<1x128xf32, #tpu.memory_space<vmem>>, vector<1x128xf32>
      %66 = arith.addf %64, %65 : vector<1x128xf32>
      %c0_43 = arith.constant 0 : index
      %c0_44 = arith.constant 0 : index
      %c0_45 = arith.constant 0 : index
      %67 = vector.load %arg14[%c0_43, %c0_44, %c0_45] : memref<1x1x128xf32, #tpu.memory_space<vmem>>, vector<1x1x128xf32>
      %68 = vector.shape_cast %67 : vector<1x1x128xf32> to vector<1x128xf32>
      %69 = vector.shape_cast %66 : vector<1x128xf32> to vector<1x1x128xf32>
      tpu.vector_store %arg14[%c0_43, %c0_44, %c0_45], %69 {strides = array<i32>} : memref<1x1x128xf32, #tpu.memory_space<vmem>>, vector<1x1x128xf32>,
    } else {
    }
    return
  }
  func.func @transform_0(%arg0: i32, %arg1: i32) -> (i32, i32, i32) {
    %c0_i32 = arith.constant 0 : i32
    %c0_i32_0 = arith.constant 0 : i32
    return %arg0, %arg1, %c0_i32 : i32, i32, i32
  }
  func.func @transform_1(%arg0: i32, %arg1: i32) -> (i32, i32, i32) {
    %c0_i32 = arith.constant 0 : i32
    %c0_i32_0 = arith.constant 0 : i32
    return %arg0, %arg1, %c0_i32 : i32, i32, i32
  }
  func.func @transform_2(%arg0: i32, %arg1: i32) -> (i32, i32) {
    %c0_i32 = arith.constant 0 : i32
    %c0_i32_0 = arith.constant 0 : i32
    %c0_i32_1 = arith.constant 0 : i32
    return %c0_i32, %c0_i32_0 : i32, i32
  }
  func.func @transform_3(%arg0: i32, %arg1: i32) -> (i32, i32) {
    %c0_i32 = arith.constant 0 : i32
    %c0_i32_0 = arith.constant 0 : i32
    %c0_i32_1 = arith.constant 0 : i32
    return %c0_i32, %c0_i32_0 : i32, i32
  }
  func.func @transform_4(%arg0: i32, %arg1: i32) -> (i32, i32) {
    %c0_i32 = arith.constant 0 : i32
    %c0_i32_0 = arith.constant 0 : i32
    %c0_i32_1 = arith.constant 0 : i32
    return %c0_i32, %c0_i32_0 : i32, i32
  }
  func.func @transform_5(%arg0: i32, %arg1: i32) -> (i32, i32) {
    %c0_i32 = arith.constant 0 : i32
    %c0_i32_0 = arith.constant 0 : i32
    %c0_i32_1 = arith.constant 0 : i32
    return %c0_i32, %c0_i32_0 : i32, i32
  }
  func.func @transform_6(%arg0: i32, %arg1: i32) -> (i32, i32) {
    %c0_i32 = arith.constant 0 : i32
    %c0_i32_0 = arith.constant 0 : i32
    %c0_i32_1 = arith.constant 0 : i32
    return %c0_i32, %c0_i32_0 : i32, i32
  }
  func.func @transform_7(%arg0: i32, %arg1: i32) -> (i32, i32) {
    %c0_i32 = arith.constant 0 : i32
    %c0_i32_0 = arith.constant 0 : i32
    %c0_i32_1 = arith.constant 0 : i32
    return %c0_i32, %c0_i32_0 : i32, i32
  }
  func.func @transform_8(%arg0: i32, %arg1: i32) -> (i32, i32) {
    %c0_i32 = arith.constant 0 : i32
    %c0_i32_0 = arith.constant 0 : i32
    %c0_i32_1 = arith.constant 0 : i32
    return %c0_i32, %c0_i32_0 : i32, i32
  }
  func.func @transform_9(%arg0: i32, %arg1: i32) -> (i32, i32) {
    %c0_i32 = arith.constant 0 : i32
    %c0_i32_0 = arith.constant 0 : i32
    %c0_i32_1 = arith.constant 0 : i32
    return %c0_i32, %c0_i32_0 : i32, i32
  }
  func.func @transform_10(%arg0: i32, %arg1: i32) -> (i32, i32) {
    %c0_i32 = arith.constant 0 : i32
    %c0_i32_0 = arith.constant 0 : i32
    %c0_i32_1 = arith.constant 0 : i32
    return %c0_i32, %c0_i32_0 : i32, i32
  }
  func.func @transform_11(%arg0: i32, %arg1: i32) -> (i32, i32, i32) {
    %c0_i32 = arith.constant 0 : i32
    %c0_i32_0 = arith.constant 0 : i32
    return %arg0, %arg1, %c0_i32 : i32, i32, i32
  }
  func.func @transform_12(%arg0: i32, %arg1: i32) -> (i32, i32, i32) {
    %c0_i32 = arith.constant 0 : i32
    %c0_i32_0 = arith.constant 0 : i32
    %c0_i32_1 = arith.constant 0 : i32
    return %arg0, %c0_i32, %c0_i32_0 : i32, i32, i32
  }
}

</mosaic_0001>

<llo_original>
// kernel: tpu_custom_call.1
$region0: #{tpu_custom_call.1}
  #allocation0 [shape = 'u32[]', space=smem, size = 0x4, offset = 0x4, fixed_abs, tag = 'smem constant byte address 0x4 - core index']
  #allocation1 [shape = 'u32[144,128]{1,0:T(1,128)}', space=vmem, size = 0x12000, scoped, tag = 'internal scratch']
  #allocation2 [shape = 'f32[1,128]{1,0:T(1,128)}', space=vmem, size = 0x200, scoped, tag = 'scratch operand']
  %s0 = inlined_call_operand.vmem [shape: s32[2,128,1], index: 0, kind: input, shape index: {}]
  %s1 = inlined_call_operand.vmem [shape: f32[2,128,1], index: 1, kind: input, shape index: {}]
  %s2 = inlined_call_operand.vmem [shape: bf16[128,128], index: 2, kind: input, shape index: {}]
  %s3 = inlined_call_operand.vmem [shape: bf16[128,256], index: 3, kind: input, shape index: {}]
  %s4 = inlined_call_operand.vmem [shape: f32[1,256], index: 4, kind: input, shape index: {}]
  %s5 = inlined_call_operand.vmem [shape: bf16[256,128], index: 5, kind: input, shape index: {}]
  %s6 = inlined_call_operand.vmem [shape: f32[1,128], index: 6, kind: input, shape index: {}]
  %s7 = inlined_call_operand.vmem [shape: bf16[128,128], index: 7, kind: input, shape index: {}]
  %s8 = inlined_call_operand.vmem [shape: f32[1,128], index: 8, kind: input, shape index: {}]
  %s9 = inlined_call_operand.vmem [shape: bf16[128,128], index: 9, kind: input, shape index: {}]
  %s10 = inlined_call_operand.vmem [shape: f32[1,128], index: 10, kind: input, shape index: {}]
  %s11 = inlined_call_operand.hbm [shape: f32[2,128,128], index: 11, kind: output, shape index: {0}]
  %s12 = inlined_call_operand.hbm [shape: f32[2,1,128], index: 12, kind: output, shape index: {1}]
  %13 = xla_tuple %s11, %s12
  %s14 = sld [smem:[#allocation0]]
  $region93: #{tpu_custom_call.1} parent=0
    _
  %s16 = ssub.s32 1, %s14
  %s17 = scalar_select 0, %s16, %s14
  $region1: #{tpu_custom_call.1} parent=0
    #allocation3 [shape = 'u8[65536]{0}', space=vmem, size = 0x10000, scoped, tag = 'output window, operand 0']
    #allocation4 [shape = 's32[2]{0}', space=sflag, size = 0x8, scoped, tag = 'scoped memory for tpu_custom_call.1']
    #allocation5 [shape = 'u8[1024]{0}', space=vmem, size = 0x400, scoped, tag = 'output window, operand 1']
    #allocation6 [shape = 's32[2]{0}', space=sflag, size = 0x8, scoped, tag = 'scoped memory for tpu_custom_call.1']
    %18 = vsyncpa [#allocation4], 0
    %s19 = scalar_lea.sflag [#allocation4], 1
    %20 = vsyncpa %s19, 0
    %21 = vsyncpa [#allocation6], 0
    %s22 = scalar_lea.sflag [#allocation6], 1
    %23 = vsyncpa %s22, 0
    loop: start=0, step=1, limit=6
    $region2: #{tpu_custom_call.1} parent=1 // loop_pre_header
      _
    $region3: #{tpu_custom_call.1} parent=1 // loop_header
      %s25 = sphi 0, %s29
      %p26 = scmp.ge.s32.totalorder %s25, 6
      %s32 = sphi 0, %s44
      %s33 = sphi 0, %s40
      %s34 = sphi 0, %s32
      %s35 = sphi 0, %s33
      %s36 = sphi 0, %s34
      %s37 = sphi 0, %s35
      %s49 = sphi 0, %s51
      %s52 = sphi 0, %s49
      %s53 = sphi 0, %s52
      %s69 = sphi 0, %s53
      %s77 = sphi 0, %s79
      %s80 = sphi 0, %s77
      %s81 = sphi 0, %s80
      %s97 = sphi 0, %s81
      %s101 = sphi 0, %s101
      %s103 = sphi 0, %s101
      %s104 = sphi 0, %s103
      %s118 = sphi 0, %s104
      %s122 = sphi 0, %s122
      %s124 = sphi 0, %s122
      %s125 = sphi 0, %s124
      %s139 = sphi 0, %s125
      %s143 = sphi 0, %s143
      %s145 = sphi 0, %s143
      %s146 = sphi 0, %s145
      %s160 = sphi 0, %s146
      %s164 = sphi 0, %s164
      %s166 = sphi 0, %s164
      %s167 = sphi 0, %s166
      %s181 = sphi 0, %s167
      %s185 = sphi 0, %s185
      %s187 = sphi 0, %s185
      %s188 = sphi 0, %s187
      %s202 = sphi 0, %s188
      %s206 = sphi 0, %s206
      %s208 = sphi 0, %s206
      %s209 = sphi 0, %s208
      %s223 = sphi 0, %s209
      %s227 = sphi 0, %s227
      %s229 = sphi 0, %s227
      %s230 = sphi 0, %s229
      %s244 = sphi 0, %s230
      %s248 = sphi 0, %s248
      %s250 = sphi 0, %s248
      %s251 = sphi 0, %s250
      %s265 = sphi 0, %s251
      %s269 = sphi 0, %s269
      %s271 = sphi 0, %s269
      %s272 = sphi 0, %s271
      %s286 = sphi 0, %s272
      %s294 = sphi 0, %s296
      %s297 = sphi 0, %s294
      %s298 = sphi 0, %s297
      %s314 = sphi 0, %s298
      %s320 = sphi 0, %s322
      %s323 = sphi 0, %s320
      %s324 = sphi 0, %s323
      %s340 = sphi 0, %s324
    $region4: #{tpu_custom_call.1} parent=1 // loop_header_branch
      %28 = sbr.rel (%p26) target = $region8
    $region5: #{tpu_custom_call.1} parent=1 // loop_body
      %s30 = ssub.s32 %s25, 1
      %s31 = ssub.s32 %s25, 2
      %s38 = sadd.s32 1, %s33
      %p39 = scmp.ge.s32.totalorder %s38, 2
      %s40 = scalar_select %p39, 0, %s38
      %s41 = sadd.s32 1, %s32
      %s42 = scalar_select %p39, %s41, %s32
      %p43 = scmp.ge.s32.totalorder %s42, 2
      %s44 = scalar_select %p43, 0, %s42
      %s45 = ssub.s32 %s32, %s44
      %s46 = ssub.s32 %s33, %s40
      %s47 = sor.u32 %s45, %s46
      %p48 = scmp.eq.s32.totalorder %s47, 0
      %s50 = sadd.s32 %s49, 1
      %s51 = scalar_select %p48, %s49, %s50
      %p54 = pneg %p48
      %p55 = scmp.eq.s32.totalorder %s25, 3
      %p56 = por %p54, %p55
      %p57 = scmp.ne.s32.totalorder %s49, %s52
      %p58 = scmp.eq.s32.totalorder %s25, 0
      %p59 = por %p57, %p58
      %p60 = scmp.ne.s32.totalorder %s49, %s52
      %p61 = scmp.eq.s32.totalorder %s30, 3
      %p62 = por %p60, %p61
      %p63 = scmp.ne.s32.totalorder %s52, %s53
      %p64 = scmp.eq.s32.totalorder %s30, 0
      %p65 = por %p63, %p64
      %p66 = scmp.ne.s32.totalorder %s52, %s53
      %p67 = scmp.eq.s32.totalorder %s31, 3
      %p68 = por %p66, %p67
      %p70 = scmp.ne.s32.totalorder %s53, %s69
      %p71 = scmp.eq.s32.totalorder %s31, 0
      %p72 = por %p70, %p71
      %s73 = ssub.s32 %s32, %s44
      %s74 = ssub.s32 %s33, %s40
      %s75 = sor.u32 %s73, %s74
      %p76 = scmp.eq.s32.totalorder %s75, 0
      %s78 = sadd.s32 %s77, 1
      %s79 = scalar_select %p76, %s77, %s78
      %p82 = pneg %p76
      %p83 = scmp.eq.s32.totalorder %s25, 3
      %p84 = por %p82, %p83
      %p85 = scmp.ne.s32.totalorder %s77, %s80
      %p86 = scmp.eq.s32.totalorder %s25, 0
      %p87 = por %p85, %p86
      %p88 = scmp.ne.s32.totalorder %s77, %s80
      %p89 = scmp.eq.s32.totalorder %s30, 3
      %p90 = por %p88, %p89
      %p91 = scmp.ne.s32.totalorder %s80, %s81
      %p92 = scmp.eq.s32.totalorder %s30, 0
      %p93 = por %p91, %p92
      %p94 = scmp.ne.s32.totalorder %s80, %s81
      %p95 = scmp.eq.s32.totalorder %s31, 3
      %p96 = por %p94, %p95
      %p98 = scmp.ne.s32.totalorder %s81, %s97
      %p99 = scmp.eq.s32.totalorder %s31, 0
      %p100 = por %p98, %p99
      %s102 = sadd.s32 %s101, 1
      %p105 = scmp.eq.s32.totalorder %s25, 3
      %p106 = scmp.ne.s32.totalorder %s101, %s103
      %p107 = scmp.eq.s32.totalorder %s25, 0
      %p108 = por %p106, %p107
      %p109 = scmp.ne.s32.totalorder %s101, %s103
      %p110 = scmp.eq.s32.totalorder %s30, 3
      %p111 = por %p109, %p110
      %p112 = scmp.ne.s32.totalorder %s103, %s104
      %p113 = scmp.eq.s32.totalorder %s30, 0
      %p114 = por %p112, %p113
      %p115 = scmp.ne.s32.totalorder %s103, %s104
      %p116 = scmp.eq.s32.totalorder %s31, 3
      %p117 = por %p115, %p116
      %p119 = scmp.ne.s32.totalorder %s104, %s118
      %p120 = scmp.eq.s32.totalorder %s31, 0
      %p121 = por %p119, %p120
      %s123 = sadd.s32 %s122, 1
      %p126 = scmp.eq.s32.totalorder %s25, 3
      %p127 = scmp.ne.s32.totalorder %s122, %s124
      %p128 = scmp.eq.s32.totalorder %s25, 0
      %p129 = por %p127, %p128
      %p130 = scmp.ne.s32.totalorder %s122, %s124
      %p131 = scmp.eq.s32.totalorder %s30, 3
      %p132 = por %p130, %p131
      %p133 = scmp.ne.s32.totalorder %s124, %s125
      %p134 = scmp.eq.s32.totalorder %s30, 0
      %p135 = por %p133, %p134
      %p136 = scmp.ne.s32.totalorder %s124, %s125
      %p137 = scmp.eq.s32.totalorder %s31, 3
      %p138 = por %p136, %p137
      %p140 = scmp.ne.s32.totalorder %s125, %s139
      %p141 = scmp.eq.s32.totalorder %s31, 0
      %p142 = por %p140, %p141
      %s144 = sadd.s32 %s143, 1
      %p147 = scmp.eq.s32.totalorder %s25, 3
      %p148 = scmp.ne.s32.totalorder %s143, %s145
      %p149 = scmp.eq.s32.totalorder %s25, 0
      %p150 = por %p148, %p149
      %p151 = scmp.ne.s32.totalorder %s143, %s145
      %p152 = scmp.eq.s32.totalorder %s30, 3
      %p153 = por %p151, %p152
      %p154 = scmp.ne.s32.totalorder %s145, %s146
      %p155 = scmp.eq.s32.totalorder %s30, 0
      %p156 = por %p154, %p155
      %p157 = scmp.ne.s32.totalorder %s145, %s146
      %p158 = scmp.eq.s32.totalorder %s31, 3
      %p159 = por %p157, %p158
      %p161 = scmp.ne.s32.totalorder %s146, %s160
      %p162 = scmp.eq.s32.totalorder %s31, 0
      %p163 = por %p161, %p162
      %s165 = sadd.s32 %s164, 1
      %p168 = scmp.eq.s32.totalorder %s25, 3
      %p169 = scmp.ne.s32.totalorder %s164, %s166
      %p170 = scmp.eq.s32.totalorder %s25, 0
      %p171 = por %p169, %p170
      %p172 = scmp.ne.s32.totalorder %s164, %s166
      %p173 = scmp.eq.s32.totalorder %s30, 3
      %p174 = por %p172, %p173
      %p175 = scmp.ne.s32.totalorder %s166, %s167
      %p176 = scmp.eq.s32.totalorder %s30, 0
      %p177 = por %p175, %p176
      %p178 = scmp.ne.s32.totalorder %s166, %s167
      %p179 = scmp.eq.s32.totalorder %s31, 3
      %p180 = por %p178, %p179
      %p182 = scmp.ne.s32.totalorder %s167, %s181
      %p183 = scmp.eq.s32.totalorder %s31, 0
      %p184 = por %p182, %p183
      %s186 = sadd.s32 %s185, 1
      %p189 = scmp.eq.s32.totalorder %s25, 3
      %p190 = scmp.ne.s32.totalorder %s185, %s187
      %p191 = scmp.eq.s32.totalorder %s25, 0
      %p192 = por %p190, %p191
      %p193 = scmp.ne.s32.totalorder %s185, %s187
      %p194 = scmp.eq.s32.totalorder %s30, 3
      %p195 = por %p193, %p194
      %p196 = scmp.ne.s32.totalorder %s187, %s188
      %p197 = scmp.eq.s32.totalorder %s30, 0
      %p198 = por %p196, %p197
      %p199 = scmp.ne.s32.totalorder %s187, %s188
      %p200 = scmp.eq.s32.totalorder %s31, 3
      %p201 = por %p199, %p200
      %p203 = scmp.ne.s32.totalorder %s188, %s202
      %p204 = scmp.eq.s32.totalorder %s31, 0
      %p205 = por %p203, %p204
      %s207 = sadd.s32 %s206, 1
      %p210 = scmp.eq.s32.totalorder %s25, 3
      %p211 = scmp.ne.s32.totalorder %s206, %s208
      %p212 = scmp.eq.s32.totalorder %s25, 0
      %p213 = por %p211, %p212
      %p214 = scmp.ne.s32.totalorder %s206, %s208
      %p215 = scmp.eq.s32.totalorder %s30, 3
      %p216 = por %p214, %p215
      %p217 = scmp.ne.s32.totalorder %s208, %s209
      %p218 = scmp.eq.s32.totalorder %s30, 0
      %p219 = por %p217, %p218
      %p220 = scmp.ne.s32.totalorder %s208, %s209
      %p221 = scmp.eq.s32.totalorder %s31, 3
      %p222 = por %p220, %p221
      %p224 = scmp.ne.s32.totalorder %s209, %s223
      %p225 = scmp.eq.s32.totalorder %s31, 0
      %p226 = por %p224, %p225
      %s228 = sadd.s32 %s227, 1
      %p231 = scmp.eq.s32.totalorder %s25, 3
      %p232 = scmp.ne.s32.totalorder %s227, %s229
      %p233 = scmp.eq.s32.totalorder %s25, 0
      %p234 = por %p232, %p233
      %p235 = scmp.ne.s32.totalorder %s227, %s229
      %p236 = scmp.eq.s32.totalorder %s30, 3
      %p237 = por %p235, %p236
      %p238 = scmp.ne.s32.totalorder %s229, %s230
      %p239 = scmp.eq.s32.totalorder %s30, 0
      %p240 = por %p238, %p239
      %p241 = scmp.ne.s32.totalorder %s229, %s230
      %p242 = scmp.eq.s32.totalorder %s31, 3
      %p243 = por %p241, %p242
      %p245 = scmp.ne.s32.totalorder %s230, %s244
      %p246 = scmp.eq.s32.totalorder %s31, 0
      %p247 = por %p245, %p246
      %s249 = sadd.s32 %s248, 1
      %p252 = scmp.eq.s32.totalorder %s25, 3
      %p253 = scmp.ne.s32.totalorder %s248, %s250
      %p254 = scmp.eq.s32.totalorder %s25, 0
      %p255 = por %p253, %p254
      %p256 = scmp.ne.s32.totalorder %s248, %s250
      %p257 = scmp.eq.s32.totalorder %s30, 3
      %p258 = por %p256, %p257
      %p259 = scmp.ne.s32.totalorder %s250, %s251
      %p260 = scmp.eq.s32.totalorder %s30, 0
      %p261 = por %p259, %p260
      %p262 = scmp.ne.s32.totalorder %s250, %s251
      %p263 = scmp.eq.s32.totalorder %s31, 3
      %p264 = por %p262, %p263
      %p266 = scmp.ne.s32.totalorder %s251, %s265
      %p267 = scmp.eq.s32.totalorder %s31, 0
      %p268 = por %p266, %p267
      %s270 = sadd.s32 %s269, 1
      %p273 = scmp.eq.s32.totalorder %s25, 3
      %p274 = scmp.ne.s32.totalorder %s269, %s271
      %p275 = scmp.eq.s32.totalorder %s25, 0
      %p276 = por %p274, %p275
      %p277 = scmp.ne.s32.totalorder %s269, %s271
      %p278 = scmp.eq.s32.totalorder %s30, 3
      %p279 = por %p277, %p278
      %p280 = scmp.ne.s32.totalorder %s271, %s272
      %p281 = scmp.eq.s32.totalorder %s30, 0
      %p282 = por %p280, %p281
      %p283 = scmp.ne.s32.totalorder %s271, %s272
      %p284 = scmp.eq.s32.totalorder %s31, 3
      %p285 = por %p283, %p284
      %p287 = scmp.ne.s32.totalorder %s272, %s286
      %p288 = scmp.eq.s32.totalorder %s31, 0
      %p289 = por %p287, %p288
      %s290 = ssub.s32 %s32, %s44
      %s291 = ssub.s32 %s33, %s40
      %s292 = sor.u32 %s290, %s291
      %p293 = scmp.eq.s32.totalorder %s292, 0
      %s295 = sadd.s32 %s294, 1
      %s296 = scalar_select %p293, %s294, %s295
      %p299 = pneg %p293
      %p300 = scmp.eq.s32.totalorder %s25, 3
      %p301 = por %p299, %p300
      %p302 = scmp.ne.s32.totalorder %s294, %s297
      %p303 = scmp.eq.s32.totalorder %s25, 0
      %p304 = por %p302, %p303
      %p305 = scmp.ne.s32.totalorder %s294, %s297
      %p306 = scmp.eq.s32.totalorder %s30, 3
      %p307 = por %p305, %p306
      %p308 = scmp.ne.s32.totalorder %s297, %s298
      %p309 = scmp.eq.s32.totalorder %s30, 0
      %p310 = por %p308, %p309
      %p311 = scmp.ne.s32.totalorder %s297, %s298
      %p312 = scmp.eq.s32.totalorder %s31, 3
      %p313 = por %p311, %p312
      %p315 = scmp.ne.s32.totalorder %s298, %s314
      %p316 = scmp.eq.s32.totalorder %s31, 0
      %p317 = por %p315, %p316
      %s318 = ssub.s32 %s32, %s44
      %p319 = scmp.eq.s32.totalorder %s318, 0
      %s321 = sadd.s32 %s320, 1
      %s322 = scalar_select %p319, %s320, %s321
      %p325 = pneg %p319
      %p326 = scmp.eq.s32.totalorder %s25, 3
      %p327 = por %p325, %p326
      %p328 = scmp.ne.s32.totalorder %s320, %s323
      %p329 = scmp.eq.s32.totalorder %s25, 0
      %p330 = por %p328, %p329
      %p331 = scmp.ne.s32.totalorder %s320, %s323
      %p332 = scmp.eq.s32.totalorder %s30, 3
      %p333 = por %p331, %p332
      %p334 = scmp.ne.s32.totalorder %s323, %s324
      %p335 = scmp.eq.s32.totalorder %s30, 0
      %p336 = por %p334, %p335
      %p337 = scmp.ne.s32.totalorder %s323, %s324
      %p338 = scmp.eq.s32.totalorder %s31, 3
      %p339 = por %p337, %p338
      %p341 = scmp.ne.s32.totalorder %s324, %s340
      %p342 = scmp.eq.s32.totalorder %s31, 0
      %p343 = por %p341, %p342
      %p344 = scmp.le.s32.totalorder 1, %s25
      %p345 = scmp.lt.s32.totalorder %s25, 5
      %p346 = pnand %p344, %p345
      %p347 = pneg %p346
      // Predicated region
      $region9: #{tpu_custom_call.1} parent=5 // pred_check
        _
      $region10: #{tpu_custom_call.1} parent=5 // pred_check_branch
        %349 = sbr.rel (%p346) target = $region12
      $region11: #{tpu_custom_call.1} parent=5 // pred_region
        %s350 = ssub.s32 %s25, 1
        // Predicated region
        $region13: #{tpu_custom_call.1} parent=11 // pred_check
          %p351 = pneg %p114
        $region14: #{tpu_custom_call.1} parent=11 // pred_check_branch
          %353 = sbr.rel (%p351) target = $region16
        $region15: #{tpu_custom_call.1} parent=11 // pred_region
          _
        $region16: #{tpu_custom_call.1} parent=11 // pred_fallthru
          _
        // Predicated region
        $region17: #{tpu_custom_call.1} parent=11 // pred_check
          %p354 = pneg %p135
        $region18: #{tpu_custom_call.1} parent=11 // pred_check_branch
          %356 = sbr.rel (%p354) target = $region20
        $region19: #{tpu_custom_call.1} parent=11 // pred_region
          _
        $region20: #{tpu_custom_call.1} parent=11 // pred_fallthru
          _
        // Predicated region
        $region21: #{tpu_custom_call.1} parent=11 // pred_check
          %p357 = pneg %p156
        $region22: #{tpu_custom_call.1} parent=11 // pred_check_branch
          %359 = sbr.rel (%p357) target = $region24
        $region23: #{tpu_custom_call.1} parent=11 // pred_region
          _
        $region24: #{tpu_custom_call.1} parent=11 // pred_fallthru
          _
        // Predicated region
        $region25: #{tpu_custom_call.1} parent=11 // pred_check
          %p360 = pneg %p177
        $region26: #{tpu_custom_call.1} parent=11 // pred_check_branch
          %362 = sbr.rel (%p360) target = $region28
        $region27: #{tpu_custom_call.1} parent=11 // pred_region
          _
        $region28: #{tpu_custom_call.1} parent=11 // pred_fallthru
          _
        // Predicated region
        $region29: #{tpu_custom_call.1} parent=11 // pred_check
          %p363 = pneg %p198
        $region30: #{tpu_custom_call.1} parent=11 // pred_check_branch
          %365 = sbr.rel (%p363) target = $region32
        $region31: #{tpu_custom_call.1} parent=11 // pred_region
          _
        $region32: #{tpu_custom_call.1} parent=11 // pred_fallthru
          _
        // Predicated region
        $region33: #{tpu_custom_call.1} parent=11 // pred_check
          %p366 = pneg %p219
        $region34: #{tpu_custom_call.1} parent=11 // pred_check_branch
          %368 = sbr.rel (%p366) target = $region36
        $region35: #{tpu_custom_call.1} parent=11 // pred_region
          _
        $region36: #{tpu_custom_call.1} parent=11 // pred_fallthru
          _
        // Predicated region
        $region37: #{tpu_custom_call.1} parent=11 // pred_check
          %p369 = pneg %p240
        $region38: #{tpu_custom_call.1} parent=11 // pred_check_branch
          %371 = sbr.rel (%p369) target = $region40
        $region39: #{tpu_custom_call.1} parent=11 // pred_region
          _
        $region40: #{tpu_custom_call.1} parent=11 // pred_fallthru
          _
        // Predicated region
        $region41: #{tpu_custom_call.1} parent=11 // pred_check
          %p372 = pneg %p261
        $region42: #{tpu_custom_call.1} parent=11 // pred_check_branch
          %374 = sbr.rel (%p372) target = $region44
        $region43: #{tpu_custom_call.1} parent=11 // pred_region
          _
        $region44: #{tpu_custom_call.1} parent=11 // pred_fallthru
          _
        // Predicated region
        $region45: #{tpu_custom_call.1} parent=11 // pred_check
          %p375 = pneg %p282
        $region46: #{tpu_custom_call.1} parent=11 // pred_check_branch
          %377 = sbr.rel (%p375) target = $region48
        $region47: #{tpu_custom_call.1} parent=11 // pred_region
          _
        $region48: #{tpu_custom_call.1} parent=11 // pred_fallthru
          _
      $region12: #{tpu_custom_call.1} parent=5 // pred_fallthru
        _
      %p378 = scmp.lt.s32.totalorder %s25, 4
      // Predicated region
      $region49: #{tpu_custom_call.1} parent=5 // pred_check
        %p379 = pneg %p378
      $region50: #{tpu_custom_call.1} parent=5 // pred_check_branch
        %381 = sbr.rel (%p379) target = $region52
      $region51: #{tpu_custom_call.1} parent=5 // pred_region
        // Predicated region
        $region53: #{tpu_custom_call.1} parent=51 // pred_check
          %p382 = pneg %p59
        $region54: #{tpu_custom_call.1} parent=51 // pred_check_branch
          %384 = sbr.rel (%p382) target = $region56
        $region55: #{tpu_custom_call.1} parent=51 // pred_region
          %s385 = smul.u32 8, %s33
          %p386 = scmp.lt.s32.totalorder %s32, 1
          %s387 = scalar_select %p386, %s32, 1
          %p388 = scmp.lt.s32.totalorder %s385, 15
          %s389 = scalar_select %p388, %s385, 15
          %s390 = smul.addr %s387, 16
          %s391 = sadd.s32 %s389, %s390
          %s392 = smul.addr %s391, 8
          %s393 = scalar_lea.vmem %s0, %s392
          %s394 = smul.u32 8, %s33
        $region56: #{tpu_custom_call.1} parent=51 // pred_fallthru
          _
        // Predicated region
        $region57: #{tpu_custom_call.1} parent=51 // pred_check
          %p395 = pneg %p87
        $region58: #{tpu_custom_call.1} parent=51 // pred_check_branch
          %397 = sbr.rel (%p395) target = $region60
        $region59: #{tpu_custom_call.1} parent=51 // pred_region
          %s398 = smul.u32 8, %s33
          %p399 = scmp.lt.s32.totalorder %s32, 1
          %s400 = scalar_select %p399, %s32, 1
          %p401 = scmp.lt.s32.totalorder %s398, 15
          %s402 = scalar_select %p401, %s398, 15
          %s403 = smul.addr %s400, 16
          %s404 = sadd.s32 %s402, %s403
          %s405 = smul.addr %s404, 8
          %s406 = scalar_lea.vmem %s1, %s405
          %s407 = smul.u32 8, %s33
        $region60: #{tpu_custom_call.1} parent=51 // pred_fallthru
          _
      $region52: #{tpu_custom_call.1} parent=5 // pred_fallthru
        _
      %p408 = scmp.le.s32.totalorder 1, %s25
      %p409 = scmp.lt.s32.totalorder %s25, 5
      %p410 = pnand %p408, %p409
      %p411 = pneg %p410
      // Predicated region
      $region61: #{tpu_custom_call.1} parent=5 // pred_check
        _
      $region62: #{tpu_custom_call.1} parent=5 // pred_check_branch
        %413 = sbr.rel (%p410) target = $region64
      $region63: #{tpu_custom_call.1} parent=5 // pred_region
        %s414 = ssub.s32 %s25, 1
        %s415 = smul.u32 8, %s35
        %p416 = scmp.lt.s32.totalorder %s34, 1
        %s417 = scalar_select %p416, %s34, 1
        %p418 = scmp.lt.s32.totalorder %s415, 15
        %s419 = scalar_select %p418, %s415, 15
        %s420 = smul.addr %s417, 16
        %s421 = sadd.s32 %s419, %s420
        %s422 = smul.addr %s421, 8
        %s423 = scalar_lea.vmem %s0, %s422
        %p424 = pneg %p65
        %p425 = pneg %p62
        %s426 = smul.u32 8, %s35
        %p427 = scmp.lt.s32.totalorder %s34, 1
        %s428 = scalar_select %p427, %s34, 1
        %p429 = scmp.lt.s32.totalorder %s426, 15
        %s430 = scalar_select %p429, %s426, 15
        %s431 = smul.addr %s428, 16
        %s432 = sadd.s32 %s430, %s431
        %s433 = smul.addr %s432, 8
        %s434 = scalar_lea.vmem %s1, %s433
        %p435 = pneg %p93
        %p436 = pneg %p90
        %p437 = pneg %p114
        %p438 = pneg %p111
        %p439 = pneg %p135
        %p440 = pneg %p132
        %p441 = pneg %p156
        %p442 = pneg %p153
        %p443 = pneg %p177
        %p444 = pneg %p174
        %p445 = pneg %p198
        %p446 = pneg %p195
        %p447 = pneg %p219
        %p448 = pneg %p216
        %p449 = pneg %p240
        %p450 = pneg %p237
        %p451 = pneg %p261
        %p452 = pneg %p258
        %p453 = pneg %p282
        %p454 = pneg %p279
        %p455 = pneg %p310
        %p456 = pneg %p307
        %s457 = sand.u32 %s297, 1
        %s458 = scalar_lea.sflag [#allocation4], %s457
        %s459 = sand.u32 %s297, 1
        %s460 = smul.addr %s459, 64
        %s461 = scalar_lea.vmem [#allocation3], %s460
        %p462 = pneg %p336
        %p463 = pneg %p333
        %s464 = sand.u32 %s323, 1
        %s465 = scalar_lea.sflag [#allocation6], %s464
        %s466 = sand.u32 %s323, 1
        %s467 = scalar_lea.vmem [#allocation5], %s466
        %s468 = smul.u32 8, %s35
        %p469 = scmp.lt.s32.totalorder %s34, 1
        %s470 = scalar_select %p469, %s34, 1
        %p471 = scmp.lt.s32.totalorder %s468, 15
        %s472 = scalar_select %p471, %s468, 15
        %s473 = smul.addr %s470, 16
        %s474 = sadd.s32 %s472, %s473
        %s475 = smul.addr %s474, 8
        %s476 = scalar_lea.vmem %s0, %s475
        %s477 = smul.u32 8, %s35
        %s478 = smul.u32 8, %s35
        %p479 = scmp.lt.s32.totalorder %s34, 1
        %s480 = scalar_select %p479, %s34, 1
        %p481 = scmp.lt.s32.totalorder %s478, 15
        %s482 = scalar_select %p481, %s478, 15
        %s483 = smul.addr %s480, 16
        %s484 = sadd.s32 %s482, %s483
        %s485 = smul.addr %s484, 8
        %s486 = scalar_lea.vmem %s1, %s485
        %s487 = smul.u32 8, %s35
        %s488 = smul.u32 8, %s35
        %p490 = scmp.eq.s32.totalorder %s35, 0
        // Predicated region
        $region65: #{tpu_custom_call.1} parent=63 // pred_check
          %p491 = pneg %p490
        $region66: #{tpu_custom_call.1} parent=63 // pred_check_branch
          %493 = sbr.rel (%p491) target = $region68
        $region67: #{tpu_custom_call.1} parent=63 // pred_region
          %494 = vst [vmem:[#allocation2] sm:$0x1] 0.0
        $region68: #{tpu_custom_call.1} parent=63 // pred_fallthru
          _
        %v495 = vld [vmem:[%s476] sm:$0xff]
        %v496 = vld [vmem:[%s476 + $0x8] sm:$0xff]
        %v497 = vld [vmem:[%s476 + $0x10] sm:$0xff]
        %v498 = vld [vmem:[%s476 + $0x18] sm:$0xff]
        %v499 = vld [vmem:[%s476 + $0x20] sm:$0xff]
        %v500 = vld [vmem:[%s476 + $0x28] sm:$0xff]
        %v501 = vld [vmem:[%s476 + $0x30] sm:$0xff]
        %v502 = vld [vmem:[%s476 + $0x38] sm:$0xff]
        %v503 = vlaneseq
        %v504 = vand.u32 %v503, 127
        %505 = vset.pattern.permute.xlu0 0
        %506 = vperm.xlu0 %505, %v495
        %v507 = vpop.permute.xlu0 %506
        %508 = vset.pattern.permute.xlu0 0
        %509 = vperm.xlu0 %508, %v496
        %v510 = vpop.permute.xlu0 %509
        %511 = vset.pattern.permute.xlu0 0
        %512 = vperm.xlu0 %511, %v497
        %v513 = vpop.permute.xlu0 %512
        %514 = vset.pattern.permute.xlu0 0
        %515 = vperm.xlu0 %514, %v498
        %v516 = vpop.permute.xlu0 %515
        %517 = vset.pattern.permute.xlu0 0
        %518 = vperm.xlu0 %517, %v499
        %v519 = vpop.permute.xlu0 %518
        %520 = vset.pattern.permute.xlu0 0
        %521 = vperm.xlu0 %520, %v500
        %v522 = vpop.permute.xlu0 %521
        %523 = vset.pattern.permute.xlu0 0
        %524 = vperm.xlu0 %523, %v501
        %v525 = vpop.permute.xlu0 %524
        %526 = vset.pattern.permute.xlu0 0
        %527 = vperm.xlu0 %526, %v502
        %v528 = vpop.permute.xlu0 %527
        %vm529 = vcmp.eq.s32.totalorder %v507, %v504
        %vm530 = vcmp.eq.s32.totalorder %v510, %v504
        %vm531 = vcmp.eq.s32.totalorder %v513, %v504
        %vm532 = vcmp.eq.s32.totalorder %v516, %v504
        %vm533 = vcmp.eq.s32.totalorder %v519, %v504
        %vm534 = vcmp.eq.s32.totalorder %v522, %v504
        %vm535 = vcmp.eq.s32.totalorder %v525, %v504
        %vm536 = vcmp.eq.s32.totalorder %v528, %v504
        %v537 = vsel %vm529, 1, 0
        %v538 = vsel %vm530, 1, 0
        %v539 = vsel %vm531, 1, 0
        %v540 = vsel %vm532, 1, 0
        %v541 = vsel %vm533, 1, 0
        %v542 = vsel %vm534, 1, 0
        %v543 = vsel %vm535, 1, 0
        %v544 = vsel %vm536, 1, 0
        %v545 = vcvt.s32.f32 %v537
        %v546 = vcvt.s32.f32 %v538
        %v547 = vcvt.s32.f32 %v539
        %v548 = vcvt.s32.f32 %v540
        %v549 = vcvt.s32.f32 %v541
        %v550 = vcvt.s32.f32 %v542
        %v551 = vcvt.s32.f32 %v543
        %v552 = vcvt.s32.f32 %v544
        %v553 = vpack.c.bf16 %v546, %v545
        %v554 = vpack.c.bf16 %v548, %v547
        %v555 = vpack.c.bf16 %v550, %v549
        %v556 = vpack.c.bf16 %v552, %v551
        %v557 = vld [vmem:[%s2] sm:$0xf]
        %v558 = vld [vmem:[%s2 + $0x4] sm:$0xf]
        %v559 = vld [vmem:[%s2 + $0x8] sm:$0xf]
        %v560 = vld [vmem:[%s2 + $0xc] sm:$0xf]
        %v561 = vld [vmem:[%s2 + $0x10] sm:$0xf]
        %v562 = vld [vmem:[%s2 + $0x14] sm:$0xf]
        %v563 = vld [vmem:[%s2 + $0x18] sm:$0xf]
        %v564 = vld [vmem:[%s2 + $0x1c] sm:$0xf]
        %v565 = vld [vmem:[%s2 + $0x20] sm:$0xf]
        %v566 = vld [vmem:[%s2 + $0x24] sm:$0xf]
        %v567 = vld [vmem:[%s2 + $0x28] sm:$0xf]
        %v568 = vld [vmem:[%s2 + $0x2c] sm:$0xf]
        %v569 = vld [vmem:[%s2 + $0x30] sm:$0xf]
        %v570 = vld [vmem:[%s2 + $0x34] sm:$0xf]
        %v571 = vld [vmem:[%s2 + $0x38] sm:$0xf]
        %v572 = vld [vmem:[%s2 + $0x3c] sm:$0xf]
        %v589 = vunpack.c.l.b16 %v557
        %v590 = vunpack.c.l.b16 %v558
        %v591 = vunpack.c.l.b16 %v559
        %v592 = vunpack.c.l.b16 %v560
        %v593 = vunpack.c.l.b16 %v561
        %v594 = vunpack.c.l.b16 %v562
        %v595 = vunpack.c.l.b16 %v563
        %v596 = vunpack.c.l.b16 %v564
        %v597 = vunpack.c.l.b16 %v565
        %v598 = vunpack.c.l.b16 %v566
        %v599 = vunpack.c.l.b16 %v567
        %v600 = vunpack.c.l.b16 %v568
        %v601 = vunpack.c.l.b16 %v569
        %v602 = vunpack.c.l.b16 %v570
        %v603 = vunpack.c.l.b16 %v571
        %v604 = vunpack.c.l.b16 %v572
        %v605 = vpack.c.b16 %v590, %v589
        %v606 = vpack.c.b16 %v592, %v591
        %v607 = vpack.c.b16 %v594, %v593
        %v608 = vpack.c.b16 %v596, %v595
        %v609 = vpack.c.b16 %v598, %v597
        %v610 = vpack.c.b16 %v600, %v599
        %v611 = vpack.c.b16 %v602, %v601
        %v612 = vpack.c.b16 %v604, %v603
        %621 = vmatprep.subr.bf16.mxu0 0
        %622 = vmatpush1.bf16.msra.mxu0 %v605
        %623 = vmatprep.subr.bf16.mxu0 0
        %624 = vmatpush1.bf16.msra.mxu0 %v606
        %625 = vmatprep.subr.bf16.mxu0 0
        %626 = vmatpush1.bf16.msra.mxu0 %v607
        %627 = vmatprep.subr.bf16.mxu0 0
        %628 = vmatpush1.bf16.msra.mxu0 %v608
        %629 = vmatprep.subr.bf16.mxu0 0
        %630 = vmatpush1.bf16.msra.mxu0 %v609
        %631 = vmatprep.subr.bf16.mxu0 0
        %632 = vmatpush1.bf16.msra.mxu0 %v610
        %633 = vmatprep.subr.bf16.mxu0 0
        %634 = vmatpush1.bf16.msra.mxu0 %v611
        %635 = vmatprep.subr.bf16.mxu0 0
        %636 = vmatpush1.bf16.msra.mxu0 %v612
        %637 = vmatprep.subr.bf16.mxu0 0
        %638 = vmatpush1.bf16.msra.mxu0 0
        %639 = vmatprep.subr.bf16.mxu0 0
        %640 = vmatpush1.bf16.msra.mxu0 0
        %641 = vmatprep.subr.bf16.mxu0 0
        %642 = vmatpush1.bf16.msra.mxu0 0
        %643 = vmatprep.subr.bf16.mxu0 0
        %644 = vmatpush1.bf16.msra.mxu0 0
        %645 = vmatprep.subr.bf16.mxu0 0
        %646 = vmatpush1.bf16.msra.mxu0 0
        %647 = vmatprep.subr.bf16.mxu0 0
        %648 = vmatpush1.bf16.msra.mxu0 0
        %649 = vmatprep.subr.bf16.mxu0 0
        %650 = vmatpush1.bf16.msra.mxu0 0
        %651 = vmatprep.subr.bf16.mxu0 0
        %652 = vmatpush1.bf16.msra.mxu0 0
        %653 = vmatprep.mubr.bf16.mxu0 0
        %654 = vmatmul.mubr.bf16.gmra.mrb[0].mxu0 %v553
        %v655 = vpop.f32.mrb[0].mxu0
        %v656 = vadd.f32 0.0, %v655
        %v657 = vpop.f32.mrb[0].mxu0
        %v658 = vpop.f32.mrb[0].mxu0
        %v659 = vadd.f32 0.0, %v658
        %v660 = vpop.f32.mrb[0].mxu0
        %661 = vmatprep.mubr.bf16.mxu0 0
        %662 = vmatmul.mubr.bf16.gmra.mrb[0].mxu0 %v554
        %v663 = vpop.f32.mrb[0].mxu0
        %v664 = vadd.f32 0.0, %v663
        %v665 = vpop.f32.mrb[0].mxu0
        %v666 = vpop.f32.mrb[0].mxu0
        %v667 = vadd.f32 0.0, %v666
        %v668 = vpop.f32.mrb[0].mxu0
        %669 = vmatprep.mubr.bf16.mxu0 0
        %670 = vmatmul.mubr.bf16.gmra.mrb[0].mxu0 %v555
        %v671 = vpop.f32.mrb[0].mxu0
        %v672 = vadd.f32 0.0, %v671
        %v673 = vpop.f32.mrb[0].mxu0
        %v674 = vpop.f32.mrb[0].mxu0
        %v675 = vadd.f32 0.0, %v674
        %v676 = vpop.f32.mrb[0].mxu0
        %677 = vmatprep.mubr.bf16.mxu0 0
        %678 = vmatmul.mubr.bf16.gmra.mrb[0].mxu0 %v556
        %v679 = vpop.f32.mrb[0].mxu0
        %v680 = vadd.f32 0.0, %v679
        %v681 = vpop.f32.mrb[0].mxu0
        %v682 = vpop.f32.mrb[0].mxu0
        %v683 = vadd.f32 0.0, %v682
        %v684 = vpop.f32.mrb[0].mxu0
        %685 = vdwg.mxu0
        %v686 = vpack.c.bf16 %v659, %v656
        %v687 = vpack.c.bf16 %v667, %v664
        %v688 = vpack.c.bf16 %v675, %v672
        %v689 = vpack.c.bf16 %v683, %v680
        %v690 = vld [vmem:[%s3] sm:$0xff]
        %v691 = vld [vmem:[%s3 + $0x8] sm:$0xff]
        %v692 = vld [vmem:[%s3 + $0x10] sm:$0xff]
        %v693 = vld [vmem:[%s3 + $0x18] sm:$0xff]
        %v694 = vld [vmem:[%s3 + $0x20] sm:$0xff]
        %v695 = vld [vmem:[%s3 + $0x28] sm:$0xff]
        %v696 = vld [vmem:[%s3 + $0x30] sm:$0xff]
        %v697 = vld [vmem:[%s3 + $0x38] sm:$0xff]
        %v698 = vld [vmem:[%s3 + $0x40] sm:$0xff]
        %v699 = vld [vmem:[%s3 + $0x48] sm:$0xff]
        %v700 = vld [vmem:[%s3 + $0x50] sm:$0xff]
        %v701 = vld [vmem:[%s3 + $0x58] sm:$0xff]
        %v702 = vld [vmem:[%s3 + $0x60] sm:$0xff]
        %v703 = vld [vmem:[%s3 + $0x68] sm:$0xff]
        %v704 = vld [vmem:[%s3 + $0x70] sm:$0xff]
        %v705 = vld [vmem:[%s3 + $0x78] sm:$0xff]
        %v706 = vld [vmem:[%s4] sm:$0x3]
        %v708 = vlaneseq
        %v709 = vshrl.u32 %v708, 7
        %v710 = vsub.s32 0, %v709
        %v711 = vrot.slane %v706, %v710
        %v712 = vlaneseq
        %v713 = vshrl.u32 %v712, 7
        %v714 = vsub.s32 1, %v713
        %v715 = vrot.slane %v706, %v714
        %v734 = vunpack.c.l.b16 %v690
        %v735 = vunpack.c.h.b16 %v690
        %v736 = vunpack.c.l.b16 %v691
        %v737 = vunpack.c.h.b16 %v691
        %v738 = vunpack.c.l.b16 %v692
        %v739 = vunpack.c.h.b16 %v692
        %v740 = vunpack.c.l.b16 %v693
        %v741 = vunpack.c.h.b16 %v693
        %v742 = vunpack.c.l.b16 %v694
        %v743 = vunpack.c.h.b16 %v694
        %v744 = vunpack.c.l.b16 %v695
        %v745 = vunpack.c.h.b16 %v695
        %v746 = vunpack.c.l.b16 %v696
        %v747 = vunpack.c.h.b16 %v696
        %v748 = vunpack.c.l.b16 %v697
        %v749 = vunpack.c.h.b16 %v697
        %v750 = vunpack.c.l.b16 %v698
        %v751 = vunpack.c.h.b16 %v698
        %v752 = vunpack.c.l.b16 %v699
        %v753 = vunpack.c.h.b16 %v699
        %v754 = vunpack.c.l.b16 %v700
        %v755 = vunpack.c.h.b16 %v700
        %v756 = vunpack.c.l.b16 %v701
        %v757 = vunpack.c.h.b16 %v701
        %v758 = vunpack.c.l.b16 %v702
        %v759 = vunpack.c.h.b16 %v702
        %v760 = vunpack.c.l.b16 %v703
        %v761 = vunpack.c.h.b16 %v703
        %v762 = vunpack.c.l.b16 %v704
        %v763 = vunpack.c.h.b16 %v704
        %v764 = vunpack.c.l.b16 %v705
        %v765 = vunpack.c.h.b16 %v705
        %v766 = vpack.c.b16 %v736, %v734
        %v767 = vpack.c.b16 %v737, %v735
        %v768 = vpack.c.b16 %v740, %v738
        %v769 = vpack.c.b16 %v741, %v739
        %v770 = vpack.c.b16 %v744, %v742
        %v771 = vpack.c.b16 %v745, %v743
        %v772 = vpack.c.b16 %v748, %v746
        %v773 = vpack.c.b16 %v749, %v747
        %v774 = vpack.c.b16 %v752, %v750
        %v775 = vpack.c.b16 %v753, %v751
        %v776 = vpack.c.b16 %v756, %v754
        %v777 = vpack.c.b16 %v757, %v755
        %v778 = vpack.c.b16 %v760, %v758
        %v779 = vpack.c.b16 %v761, %v759
        %v780 = vpack.c.b16 %v764, %v762
        %v781 = vpack.c.b16 %v765, %v763
        %798 = vmatprep.subr.bf16.mxu0 %v767
        %799 = vmatpush1.bf16.msra.mxu0 %v766
        %800 = vmatprep.subr.bf16.mxu0 %v769
        %801 = vmatpush1.bf16.msra.mxu0 %v768
        %802 = vmatprep.subr.bf16.mxu0 %v771
        %803 = vmatpush1.bf16.msra.mxu0 %v770
        %804 = vmatprep.subr.bf16.mxu0 %v773
        %805 = vmatpush1.bf16.msra.mxu0 %v772
        %806 = vmatprep.subr.bf16.mxu0 %v775
        %807 = vmatpush1.bf16.msra.mxu0 %v774
        %808 = vmatprep.subr.bf16.mxu0 %v777
        %809 = vmatpush1.bf16.msra.mxu0 %v776
        %810 = vmatprep.subr.bf16.mxu0 %v779
        %811 = vmatpush1.bf16.msra.mxu0 %v778
        %812 = vmatprep.subr.bf16.mxu0 %v781
        %813 = vmatpush1.bf16.msra.mxu0 %v780
        %814 = vmatprep.subr.bf16.mxu0 0
        %815 = vmatpush1.bf16.msra.mxu0 0
        %816 = vmatprep.subr.bf16.mxu0 0
        %817 = vmatpush1.bf16.msra.mxu0 0
        %818 = vmatprep.subr.bf16.mxu0 0
        %819 = vmatpush1.bf16.msra.mxu0 0
        %820 = vmatprep.subr.bf16.mxu0 0
        %821 = vmatpush1.bf16.msra.mxu0 0
        %822 = vmatprep.subr.bf16.mxu0 0
        %823 = vmatpush1.bf16.msra.mxu0 0
        %824 = vmatprep.subr.bf16.mxu0 0
        %825 = vmatpush1.bf16.msra.mxu0 0
        %826 = vmatprep.subr.bf16.mxu0 0
        %827 = vmatpush1.bf16.msra.mxu0 0
        %828 = vmatprep.subr.bf16.mxu0 0
        %829 = vmatpush1.bf16.msra.mxu0 0
        %830 = vmatprep.mubr.bf16.mxu0 0
        %831 = vmatmul.mubr.bf16.gmra.mrb[0].mxu0 %v686
        %v832 = vpop.f32.mrb[0].mxu0
        %v833 = vadd.f32 %v711, %v832
        %v834 = vpop.f32.mrb[0].mxu0
        %v835 = vadd.f32 %v715, %v834
        %v836 = vpop.f32.mrb[0].mxu0
        %v837 = vadd.f32 %v711, %v836
        %v838 = vpop.f32.mrb[0].mxu0
        %v839 = vadd.f32 %v715, %v838
        %840 = vmatprep.mubr.bf16.mxu0 0
        %841 = vmatmul.mubr.bf16.gmra.mrb[0].mxu0 %v687
        %v842 = vpop.f32.mrb[0].mxu0
        %v843 = vadd.f32 %v711, %v842
        %v844 = vpop.f32.mrb[0].mxu0
        %v845 = vadd.f32 %v715, %v844
        %v846 = vpop.f32.mrb[0].mxu0
        %v847 = vadd.f32 %v711, %v846
        %v848 = vpop.f32.mrb[0].mxu0
        %v849 = vadd.f32 %v715, %v848
        %850 = vmatprep.mubr.bf16.mxu0 0
        %851 = vmatmul.mubr.bf16.gmra.mrb[0].mxu0 %v688
        %v852 = vpop.f32.mrb[0].mxu0
        %v853 = vadd.f32 %v711, %v852
        %v854 = vpop.f32.mrb[0].mxu0
        %v855 = vadd.f32 %v715, %v854
        %v856 = vpop.f32.mrb[0].mxu0
        %v857 = vadd.f32 %v711, %v856
        %v858 = vpop.f32.mrb[0].mxu0
        %v859 = vadd.f32 %v715, %v858
        %860 = vmatprep.mubr.bf16.mxu0 0
        %861 = vmatmul.mubr.bf16.gmra.mrb[0].mxu0 %v689
        %v862 = vpop.f32.mrb[0].mxu0
        %v863 = vadd.f32 %v711, %v862
        %v864 = vpop.f32.mrb[0].mxu0
        %v865 = vadd.f32 %v715, %v864
        %v866 = vpop.f32.mrb[0].mxu0
        %v867 = vadd.f32 %v711, %v866
        %v868 = vpop.f32.mrb[0].mxu0
        %v869 = vadd.f32 %v715, %v868
        %870 = vdwg.mxu0
        %v871 = vmul.f32 %v833, %v833
        %v872 = vmul.f32 %v835, %v835
        %v873 = vmul.f32 %v837, %v837
        %v874 = vmul.f32 %v839, %v839
        %v875 = vmul.f32 %v843, %v843
        %v876 = vmul.f32 %v845, %v845
        %v877 = vmul.f32 %v847, %v847
        %v878 = vmul.f32 %v849, %v849
        %v879 = vmul.f32 %v853, %v853
        %v880 = vmul.f32 %v855, %v855
        %v881 = vmul.f32 %v857, %v857
        %v882 = vmul.f32 %v859, %v859
        %v883 = vmul.f32 %v863, %v863
        %v884 = vmul.f32 %v865, %v865
        %v885 = vmul.f32 %v867, %v867
        %v886 = vmul.f32 %v869, %v869
        %v887 = vmul.f32 %v833, %v871
        %v888 = vmul.f32 %v835, %v872
        %v889 = vmul.f32 %v837, %v873
        %v890 = vmul.f32 %v839, %v874
        %v891 = vmul.f32 %v843, %v875
        %v892 = vmul.f32 %v845, %v876
        %v893 = vmul.f32 %v847, %v877
        %v894 = vmul.f32 %v849, %v878
        %v895 = vmul.f32 %v853, %v879
        %v896 = vmul.f32 %v855, %v880
        %v897 = vmul.f32 %v857, %v881
        %v898 = vmul.f32 %v859, %v882
        %v899 = vmul.f32 %v863, %v883
        %v900 = vmul.f32 %v865, %v884
        %v901 = vmul.f32 %v867, %v885
        %v902 = vmul.f32 %v869, %v886
        %v903 = vmul.f32 %v887, 0.044715
        %v904 = vmul.f32 %v888, 0.044715
        %v905 = vmul.f32 %v889, 0.044715
        %v906 = vmul.f32 %v890, 0.044715
        %v907 = vmul.f32 %v891, 0.044715
        %v908 = vmul.f32 %v892, 0.044715
        %v909 = vmul.f32 %v893, 0.044715
        %v910 = vmul.f32 %v894, 0.044715
        %v911 = vmul.f32 %v895, 0.044715
        %v912 = vmul.f32 %v896, 0.044715
        %v913 = vmul.f32 %v897, 0.044715
        %v914 = vmul.f32 %v898, 0.044715
        %v915 = vmul.f32 %v899, 0.044715
        %v916 = vmul.f32 %v900, 0.044715
        %v917 = vmul.f32 %v901, 0.044715
        %v918 = vmul.f32 %v902, 0.044715
        %v919 = vadd.f32 %v833, %v903
        %v920 = vadd.f32 %v835, %v904
        %v921 = vadd.f32 %v837, %v905
        %v922 = vadd.f32 %v839, %v906
        %v923 = vadd.f32 %v843, %v907
        %v924 = vadd.f32 %v845, %v908
        %v925 = vadd.f32 %v847, %v909
        %v926 = vadd.f32 %v849, %v910
        %v927 = vadd.f32 %v853, %v911
        %v928 = vadd.f32 %v855, %v912
        %v929 = vadd.f32 %v857, %v913
        %v930 = vadd.f32 %v859, %v914
        %v931 = vadd.f32 %v863, %v915
        %v932 = vadd.f32 %v865, %v916
        %v933 = vadd.f32 %v867, %v917
        %v934 = vadd.f32 %v869, %v918
        %v935 = vmul.f32 %v919, 0.7978846
        %v936 = vmul.f32 %v920, 0.7978846
        %v937 = vmul.f32 %v921, 0.7978846
        %v938 = vmul.f32 %v922, 0.7978846
        %v939 = vmul.f32 %v923, 0.7978846
        %v940 = vmul.f32 %v924, 0.7978846
        %v941 = vmul.f32 %v925, 0.7978846
        %v942 = vmul.f32 %v926, 0.7978846
        %v943 = vmul.f32 %v927, 0.7978846
        %v944 = vmul.f32 %v928, 0.7978846
        %v945 = vmul.f32 %v929, 0.7978846
        %v946 = vmul.f32 %v930, 0.7978846
        %v947 = vmul.f32 %v931, 0.7978846
        %v948 = vmul.f32 %v932, 0.7978846
        %v949 = vmul.f32 %v933, 0.7978846
        %v950 = vmul.f32 %v934, 0.7978846
        %v951 = vtanh.pop %v935
        %v952 = vtanh.pop %v936
        %v953 = vtanh.pop %v937
        %v954 = vtanh.pop %v938
        %v955 = vtanh.pop %v939
        %v956 = vtanh.pop %v940
        %v957 = vtanh.pop %v941
        %v958 = vtanh.pop %v942
        %v959 = vtanh.pop %v943
        %v960 = vtanh.pop %v944
        %v961 = vtanh.pop %v945
        %v962 = vtanh.pop %v946
        %v963 = vtanh.pop %v947
        %v964 = vtanh.pop %v948
        %v965 = vtanh.pop %v949
        %v966 = vtanh.pop %v950
        %v967 = vadd.f32 %v951, 1.0
        %v968 = vadd.f32 %v952, 1.0
        %v969 = vadd.f32 %v953, 1.0
        %v970 = vadd.f32 %v954, 1.0
        %v971 = vadd.f32 %v955, 1.0
        %v972 = vadd.f32 %v956, 1.0
        %v973 = vadd.f32 %v957, 1.0
        %v974 = vadd.f32 %v958, 1.0
        %v975 = vadd.f32 %v959, 1.0
        %v976 = vadd.f32 %v960, 1.0
        %v977 = vadd.f32 %v961, 1.0
        %v978 = vadd.f32 %v962, 1.0
        %v979 = vadd.f32 %v963, 1.0
        %v980 = vadd.f32 %v964, 1.0
        %v981 = vadd.f32 %v965, 1.0
        %v982 = vadd.f32 %v966, 1.0
        %v983 = vmul.f32 %v967, 0.5
        %v984 = vmul.f32 %v968, 0.5
        %v985 = vmul.f32 %v969, 0.5
        %v986 = vmul.f32 %v970, 0.5
        %v987 = vmul.f32 %v971, 0.5
        %v988 = vmul.f32 %v972, 0.5
        %v989 = vmul.f32 %v973, 0.5
        %v990 = vmul.f32 %v974, 0.5
        %v991 = vmul.f32 %v975, 0.5
        %v992 = vmul.f32 %v976, 0.5
        %v993 = vmul.f32 %v977, 0.5
        %v994 = vmul.f32 %v978, 0.5
        %v995 = vmul.f32 %v979, 0.5
        %v996 = vmul.f32 %v980, 0.5
        %v997 = vmul.f32 %v981, 0.5
        %v998 = vmul.f32 %v982, 0.5
        %v999 = vmul.f32 %v833, %v983
        %v1000 = vmul.f32 %v835, %v984
        %v1001 = vmul.f32 %v837, %v985
        %v1002 = vmul.f32 %v839, %v986
        %v1003 = vmul.f32 %v843, %v987
        %v1004 = vmul.f32 %v845, %v988
        %v1005 = vmul.f32 %v847, %v989
        %v1006 = vmul.f32 %v849, %v990
        %v1007 = vmul.f32 %v853, %v991
        %v1008 = vmul.f32 %v855, %v992
        %v1009 = vmul.f32 %v857, %v993
        %v1010 = vmul.f32 %v859, %v994
        %v1011 = vmul.f32 %v863, %v995
        %v1012 = vmul.f32 %v865, %v996
        %v1013 = vmul.f32 %v867, %v997
        %v1014 = vmul.f32 %v869, %v998
        %v1015 = vpack.c.bf16 %v1001, %v999
        %v1016 = vpack.c.bf16 %v1002, %v1000
        %v1017 = vpack.c.bf16 %v1005, %v1003
        %v1018 = vpack.c.bf16 %v1006, %v1004
        %v1019 = vpack.c.bf16 %v1009, %v1007
        %v1020 = vpack.c.bf16 %v1010, %v1008
        %v1021 = vpack.c.bf16 %v1013, %v1011
        %v1022 = vpack.c.bf16 %v1014, %v1012
        %v1023 = vld [vmem:[%s5] sm:$0xf]
        %v1024 = vld [vmem:[%s5 + $0x4] sm:$0xf]
        %v1025 = vld [vmem:[%s5 + $0x8] sm:$0xf]
        %v1026 = vld [vmem:[%s5 + $0xc] sm:$0xf]
        %v1027 = vld [vmem:[%s5 + $0x10] sm:$0xf]
        %v1028 = vld [vmem:[%s5 + $0x14] sm:$0xf]
        %v1029 = vld [vmem:[%s5 + $0x18] sm:$0xf]
        %v1030 = vld [vmem:[%s5 + $0x1c] sm:$0xf]
        %v1031 = vld [vmem:[%s5 + $0x20] sm:$0xf]
        %v1032 = vld [vmem:[%s5 + $0x24] sm:$0xf]
        %v1033 = vld [vmem:[%s5 + $0x28] sm:$0xf]
        %v1034 = vld [vmem:[%s5 + $0x2c] sm:$0xf]
        %v1035 = vld [vmem:[%s5 + $0x30] sm:$0xf]
        %v1036 = vld [vmem:[%s5 + $0x34] sm:$0xf]
        %v1037 = vld [vmem:[%s5 + $0x38] sm:$0xf]
        %v1038 = vld [vmem:[%s5 + $0x3c] sm:$0xf]
        %v1039 = vld [vmem:[%s5 + $0x40] sm:$0xf]
        %v1040 = vld [vmem:[%s5 + $0x44] sm:$0xf]
        %v1041 = vld [vmem:[%s5 + $0x48] sm:$0xf]
        %v1042 = vld [vmem:[%s5 + $0x4c] sm:$0xf]
        %v1043 = vld [vmem:[%s5 + $0x50] sm:$0xf]
        %v1044 = vld [vmem:[%s5 + $0x54] sm:$0xf]
        %v1045 = vld [vmem:[%s5 + $0x58] sm:$0xf]
        %v1046 = vld [vmem:[%s5 + $0x5c] sm:$0xf]
        %v1047 = vld [vmem:[%s5 + $0x60] sm:$0xf]
        %v1048 = vld [vmem:[%s5 + $0x64] sm:$0xf]
        %v1049 = vld [vmem:[%s5 + $0x68] sm:$0xf]
        %v1050 = vld [vmem:[%s5 + $0x6c] sm:$0xf]
        %v1051 = vld [vmem:[%s5 + $0x70] sm:$0xf]
        %v1052 = vld [vmem:[%s5 + $0x74] sm:$0xf]
        %v1053 = vld [vmem:[%s5 + $0x78] sm:$0xf]
        %v1054 = vld [vmem:[%s5 + $0x7c] sm:$0xf]
        %v1087 = vunpack.c.l.b16 %v1023
        %v1088 = vunpack.c.l.b16 %v1024
        %v1089 = vunpack.c.l.b16 %v1025
        %v1090 = vunpack.c.l.b16 %v1026
        %v1091 = vunpack.c.l.b16 %v1027
        %v1092 = vunpack.c.l.b16 %v1028
        %v1093 = vunpack.c.l.b16 %v1029
        %v1094 = vunpack.c.l.b16 %v1030
        %v1095 = vunpack.c.l.b16 %v1031
        %v1096 = vunpack.c.l.b16 %v1032
        %v1097 = vunpack.c.l.b16 %v1033
        %v1098 = vunpack.c.l.b16 %v1034
        %v1099 = vunpack.c.l.b16 %v1035
        %v1100 = vunpack.c.l.b16 %v1036
        %v1101 = vunpack.c.l.b16 %v1037
        %v1102 = vunpack.c.l.b16 %v1038
        %v1103 = vunpack.c.l.b16 %v1039
        %v1104 = vunpack.c.l.b16 %v1040
        %v1105 = vunpack.c.l.b16 %v1041
        %v1106 = vunpack.c.l.b16 %v1042
        %v1107 = vunpack.c.l.b16 %v1043
        %v1108 = vunpack.c.l.b16 %v1044
        %v1109 = vunpack.c.l.b16 %v1045
        %v1110 = vunpack.c.l.b16 %v1046
        %v1111 = vunpack.c.l.b16 %v1047
        %v1112 = vunpack.c.l.b16 %v1048
        %v1113 = vunpack.c.l.b16 %v1049
        %v1114 = vunpack.c.l.b16 %v1050
        %v1115 = vunpack.c.l.b16 %v1051
        %v1116 = vunpack.c.l.b16 %v1052
        %v1117 = vunpack.c.l.b16 %v1053
        %v1118 = vunpack.c.l.b16 %v1054
        %v1119 = vpack.c.b16 %v1088, %v1087
        %v1120 = vpack.c.b16 %v1090, %v1089
        %v1121 = vpack.c.b16 %v1092, %v1091
        %v1122 = vpack.c.b16 %v1094, %v1093
        %v1123 = vpack.c.b16 %v1096, %v1095
        %v1124 = vpack.c.b16 %v1098, %v1097
        %v1125 = vpack.c.b16 %v1100, %v1099
        %v1126 = vpack.c.b16 %v1102, %v1101
        %v1127 = vpack.c.b16 %v1104, %v1103
        %v1128 = vpack.c.b16 %v1106, %v1105
        %v1129 = vpack.c.b16 %v1108, %v1107
        %v1130 = vpack.c.b16 %v1110, %v1109
        %v1131 = vpack.c.b16 %v1112, %v1111
        %v1132 = vpack.c.b16 %v1114, %v1113
        %v1133 = vpack.c.b16 %v1116, %v1115
        %v1134 = vpack.c.b16 %v1118, %v1117
        %1151 = vmatprep.subr.bf16.mxu0 0
        %1152 = vmatpush1.bf16.msra.mxu0 %v1119
        %1153 = vmatprep.subr.bf16.mxu0 0
        %1154 = vmatpush1.bf16.msra.mxu0 %v1120
        %1155 = vmatprep.subr.bf16.mxu0 0
        %1156 = vmatpush1.bf16.msra.mxu0 %v1121
        %1157 = vmatprep.subr.bf16.mxu0 0
        %1158 = vmatpush1.bf16.msra.mxu0 %v1122
        %1159 = vmatprep.subr.bf16.mxu0 0
        %1160 = vmatpush1.bf16.msra.mxu0 %v1123
        %1161 = vmatprep.subr.bf16.mxu0 0
        %1162 = vmatpush1.bf16.msra.mxu0 %v1124
        %1163 = vmatprep.subr.bf16.mxu0 0
        %1164 = vmatpush1.bf16.msra.mxu0 %v1125
        %1165 = vmatprep.subr.bf16.mxu0 0
        %1166 = vmatpush1.bf16.msra.mxu0 %v1126
        %1167 = vmatprep.subr.bf16.mxu0 0
        %1168 = vmatpush1.bf16.msra.mxu0 %v1127
        %1169 = vmatprep.subr.bf16.mxu0 0
        %1170 = vmatpush1.bf16.msra.mxu0 %v1128
        %1171 = vmatprep.subr.bf16.mxu0 0
        %1172 = vmatpush1.bf16.msra.mxu0 %v1129
        %1173 = vmatprep.subr.bf16.mxu0 0
        %1174 = vmatpush1.bf16.msra.mxu0 %v1130
        %1175 = vmatprep.subr.bf16.mxu0 0
        %1176 = vmatpush1.bf16.msra.mxu0 %v1131
        %1177 = vmatprep.subr.bf16.mxu0 0
        %1178 = vmatpush1.bf16.msra.mxu0 %v1132
        %1179 = vmatprep.subr.bf16.mxu0 0
        %1180 = vmatpush1.bf16.msra.mxu0 %v1133
        %1181 = vmatprep.subr.bf16.mxu0 0
        %1182 = vmatpush1.bf16.msra.mxu0 %v1134
        %1183 = vmatprep.mubr.bf16.mxu0 %v1016
        %1184 = vmatmul.mubr.bf16.gmra.mrb[0].mxu0 %v1015
        %v1185 = vpop.f32.mrb[0].mxu0
        %v1186 = vadd.f32 0.0, %v1185
        %v1187 = vpop.f32.mrb[0].mxu0
        %v1188 = vpop.f32.mrb[0].mxu0
        %v1189 = vadd.f32 0.0, %v1188
        %v1190 = vpop.f32.mrb[0].mxu0
        %1191 = vmatprep.mubr.bf16.mxu0 %v1018
        %1192 = vmatmul.mubr.bf16.gmra.mrb[0].mxu0 %v1017
        %v1193 = vpop.f32.mrb[0].mxu0
        %v1194 = vadd.f32 0.0, %v1193
        %v1195 = vpop.f32.mrb[0].mxu0
        %v1196 = vpop.f32.mrb[0].mxu0
        %v1197 = vadd.f32 0.0, %v1196
        %v1198 = vpop.f32.mrb[0].mxu0
        %1199 = vmatprep.mubr.bf16.mxu0 %v1020
        %1200 = vmatmul.mubr.bf16.gmra.mrb[0].mxu0 %v1019
        %v1201 = vpop.f32.mrb[0].mxu0
        %v1202 = vadd.f32 0.0, %v1201
        %v1203 = vpop.f32.mrb[0].mxu0
        %v1204 = vpop.f32.mrb[0].mxu0
        %v1205 = vadd.f32 0.0, %v1204
        %v1206 = vpop.f32.mrb[0].mxu0
        %1207 = vmatprep.mubr.bf16.mxu0 %v1022
        %1208 = vmatmul.mubr.bf16.gmra.mrb[0].mxu0 %v1021
        %v1209 = vpop.f32.mrb[0].mxu0
        %v1210 = vadd.f32 0.0, %v1209
        %v1211 = vpop.f32.mrb[0].mxu0
        %v1212 = vpop.f32.mrb[0].mxu0
        %v1213 = vadd.f32 0.0, %v1212
        %v1214 = vpop.f32.mrb[0].mxu0
        %1215 = vdwg.mxu0
        %v1216 = vadd.f32 %v656, %v1186
        %v1217 = vadd.f32 %v659, %v1189
        %v1218 = vadd.f32 %v664, %v1194
        %v1219 = vadd.f32 %v667, %v1197
        %v1220 = vadd.f32 %v672, %v1202
        %v1221 = vadd.f32 %v675, %v1205
        %v1222 = vadd.f32 %v680, %v1210
        %v1223 = vadd.f32 %v683, %v1213
        %v1224 = vld [vmem:[%s6] sm:$0x1]
        %v1226 = vlaneseq
        %v1227 = vshrl.u32 %v1226, 7
        %v1228 = vsub.s32 0, %v1227
        %v1229 = vrot.slane %v1224, %v1228
        %v1231 = vadd.f32 %v1216, %v1229
        %v1232 = vadd.f32 %v1217, %v1229
        %v1233 = vadd.f32 %v1218, %v1229
        %v1234 = vadd.f32 %v1219, %v1229
        %v1235 = vadd.f32 %v1220, %v1229
        %v1236 = vadd.f32 %v1221, %v1229
        %v1237 = vadd.f32 %v1222, %v1229
        %v1238 = vadd.f32 %v1223, %v1229
        %1239 = vst [vmem:[%s461] sm:$0xff] %v1231
        %1240 = vst [vmem:[%s461 + $0x8] sm:$0xff] %v1232
        %1241 = vst [vmem:[%s461 + $0x10] sm:$0xff] %v1233
        %1242 = vst [vmem:[%s461 + $0x18] sm:$0xff] %v1234
        %1243 = vst [vmem:[%s461 + $0x20] sm:$0xff] %v1235
        %1244 = vst [vmem:[%s461 + $0x28] sm:$0xff] %v1236
        %1245 = vst [vmem:[%s461 + $0x30] sm:$0xff] %v1237
        %1246 = vst [vmem:[%s461 + $0x38] sm:$0xff] %v1238
        %v1247 = vpack.c.bf16 %v1232, %v1231
        %v1248 = vpack.c.bf16 %v1234, %v1233
        %v1249 = vpack.c.bf16 %v1236, %v1235
        %v1250 = vpack.c.bf16 %v1238, %v1237
        %v1251 = vld [vmem:[%s7] sm:$0xf]
        %v1252 = vld [vmem:[%s7 + $0x4] sm:$0xf]
        %v1253 = vld [vmem:[%s7 + $0x8] sm:$0xf]
        %v1254 = vld [vmem:[%s7 + $0xc] sm:$0xf]
        %v1255 = vld [vmem:[%s7 + $0x10] sm:$0xf]
        %v1256 = vld [vmem:[%s7 + $0x14] sm:$0xf]
        %v1257 = vld [vmem:[%s7 + $0x18] sm:$0xf]
        %v1258 = vld [vmem:[%s7 + $0x1c] sm:$0xf]
        %v1259 = vld [vmem:[%s7 + $0x20] sm:$0xf]
        %v1260 = vld [vmem:[%s7 + $0x24] sm:$0xf]
        %v1261 = vld [vmem:[%s7 + $0x28] sm:$0xf]
        %v1262 = vld [vmem:[%s7 + $0x2c] sm:$0xf]
        %v1263 = vld [vmem:[%s7 + $0x30] sm:$0xf]
        %v1264 = vld [vmem:[%s7 + $0x34] sm:$0xf]
        %v1265 = vld [vmem:[%s7 + $0x38] sm:$0xf]
        %v1266 = vld [vmem:[%s7 + $0x3c] sm:$0xf]
        %v1267 = vld [vmem:[%s8] sm:$0x1]
        %v1269 = vlaneseq
        %v1270 = vshrl.u32 %v1269, 7
        %v1271 = vsub.s32 0, %v1270
        %v1272 = vrot.slane %v1267, %v1271
        %v1290 = vunpack.c.l.b16 %v1251
        %v1291 = vunpack.c.l.b16 %v1252
        %v1292 = vunpack.c.l.b16 %v1253
        %v1293 = vunpack.c.l.b16 %v1254
        %v1294 = vunpack.c.l.b16 %v1255
        %v1295 = vunpack.c.l.b16 %v1256
        %v1296 = vunpack.c.l.b16 %v1257
        %v1297 = vunpack.c.l.b16 %v1258
        %v1298 = vunpack.c.l.b16 %v1259
        %v1299 = vunpack.c.l.b16 %v1260
        %v1300 = vunpack.c.l.b16 %v1261
        %v1301 = vunpack.c.l.b16 %v1262
        %v1302 = vunpack.c.l.b16 %v1263
        %v1303 = vunpack.c.l.b16 %v1264
        %v1304 = vunpack.c.l.b16 %v1265
        %v1305 = vunpack.c.l.b16 %v1266
        %v1306 = vpack.c.b16 %v1291, %v1290
        %v1307 = vpack.c.b16 %v1293, %v1292
        %v1308 = vpack.c.b16 %v1295, %v1294
        %v1309 = vpack.c.b16 %v1297, %v1296
        %v1310 = vpack.c.b16 %v1299, %v1298
        %v1311 = vpack.c.b16 %v1301, %v1300
        %v1312 = vpack.c.b16 %v1303, %v1302
        %v1313 = vpack.c.b16 %v1305, %v1304
        %1322 = vmatprep.subr.bf16.mxu0 0
        %1323 = vmatpush1.bf16.msra.mxu0 %v1306
        %1324 = vmatprep.subr.bf16.mxu0 0
        %1325 = vmatpush1.bf16.msra.mxu0 %v1307
        %1326 = vmatprep.subr.bf16.mxu0 0
        %1327 = vmatpush1.bf16.msra.mxu0 %v1308
        %1328 = vmatprep.subr.bf16.mxu0 0
        %1329 = vmatpush1.bf16.msra.mxu0 %v1309
        %1330 = vmatprep.subr.bf16.mxu0 0
        %1331 = vmatpush1.bf16.msra.mxu0 %v1310
        %1332 = vmatprep.subr.bf16.mxu0 0
        %1333 = vmatpush1.bf16.msra.mxu0 %v1311
        %1334 = vmatprep.subr.bf16.mxu0 0
        %1335 = vmatpush1.bf16.msra.mxu0 %v1312
        %1336 = vmatprep.subr.bf16.mxu0 0
        %1337 = vmatpush1.bf16.msra.mxu0 %v1313
        %1338 = vmatprep.subr.bf16.mxu0 0
        %1339 = vmatpush1.bf16.msra.mxu0 0
        %1340 = vmatprep.subr.bf16.mxu0 0
        %1341 = vmatpush1.bf16.msra.mxu0 0
        %1342 = vmatprep.subr.bf16.mxu0 0
        %1343 = vmatpush1.bf16.msra.mxu0 0
        %1344 = vmatprep.subr.bf16.mxu0 0
        %1345 = vmatpush1.bf16.msra.mxu0 0
        %1346 = vmatprep.subr.bf16.mxu0 0
        %1347 = vmatpush1.bf16.msra.mxu0 0
        %1348 = vmatprep.subr.bf16.mxu0 0
        %1349 = vmatpush1.bf16.msra.mxu0 0
        %1350 = vmatprep.subr.bf16.mxu0 0
        %1351 = vmatpush1.bf16.msra.mxu0 0
        %1352 = vmatprep.subr.bf16.mxu0 0
        %1353 = vmatpush1.bf16.msra.mxu0 0
        %1354 = vmatprep.mubr.bf16.mxu0 0
        %1355 = vmatmul.mubr.bf16.gmra.mrb[0].mxu0 %v1247
        %v1356 = vpop.f32.mrb[0].mxu0
        %v1357 = vadd.f32 %v1272, %v1356
        %v1358 = vpop.f32.mrb[0].mxu0
        %v1359 = vpop.f32.mrb[0].mxu0
        %v1360 = vadd.f32 %v1272, %v1359
        %v1361 = vpop.f32.mrb[0].mxu0
        %1362 = vmatprep.mubr.bf16.mxu0 0
        %1363 = vmatmul.mubr.bf16.gmra.mrb[0].mxu0 %v1248
        %v1364 = vpop.f32.mrb[0].mxu0
        %v1365 = vadd.f32 %v1272, %v1364
        %v1366 = vpop.f32.mrb[0].mxu0
        %v1367 = vpop.f32.mrb[0].mxu0
        %v1368 = vadd.f32 %v1272, %v1367
        %v1369 = vpop.f32.mrb[0].mxu0
        %1370 = vmatprep.mubr.bf16.mxu0 0
        %1371 = vmatmul.mubr.bf16.gmra.mrb[0].mxu0 %v1249
        %v1372 = vpop.f32.mrb[0].mxu0
        %v1373 = vadd.f32 %v1272, %v1372
        %v1374 = vpop.f32.mrb[0].mxu0
        %v1375 = vpop.f32.mrb[0].mxu0
        %v1376 = vadd.f32 %v1272, %v1375
        %v1377 = vpop.f32.mrb[0].mxu0
        %1378 = vmatprep.mubr.bf16.mxu0 0
        %1379 = vmatmul.mubr.bf16.gmra.mrb[0].mxu0 %v1250
        %v1380 = vpop.f32.mrb[0].mxu0
        %v1381 = vadd.f32 %v1272, %v1380
        %v1382 = vpop.f32.mrb[0].mxu0
        %v1383 = vpop.f32.mrb[0].mxu0
        %v1384 = vadd.f32 %v1272, %v1383
        %v1385 = vpop.f32.mrb[0].mxu0
        %1386 = vdwg.mxu0
        %v1387 = vtanh.pop %v1357
        %v1388 = vtanh.pop %v1360
        %v1389 = vtanh.pop %v1365
        %v1390 = vtanh.pop %v1368
        %v1391 = vtanh.pop %v1373
        %v1392 = vtanh.pop %v1376
        %v1393 = vtanh.pop %v1381
        %v1394 = vtanh.pop %v1384
        %v1395 = vld [vmem:[#allocation2] sm:$0x1]
        %v1396 = vld [vmem:[%s486] sm:$0xff]
        %v1397 = vld [vmem:[%s486 + $0x8] sm:$0xff]
        %v1398 = vld [vmem:[%s486 + $0x10] sm:$0xff]
        %v1399 = vld [vmem:[%s486 + $0x18] sm:$0xff]
        %v1400 = vld [vmem:[%s486 + $0x20] sm:$0xff]
        %v1401 = vld [vmem:[%s486 + $0x28] sm:$0xff]
        %v1402 = vld [vmem:[%s486 + $0x30] sm:$0xff]
        %v1403 = vld [vmem:[%s486 + $0x38] sm:$0xff]
        %1405 = vset.pattern.permute.xlu0 0
        %1406 = vperm.xlu0 %1405, %v1396
        %v1407 = vpop.permute.xlu0 %1406
        %1410 = vset.pattern.permute.xlu0 0
        %1411 = vperm.xlu0 %1410, %v1397
        %v1412 = vpop.permute.xlu0 %1411
        %1415 = vset.pattern.permute.xlu0 0
        %1416 = vperm.xlu0 %1415, %v1398
        %v1417 = vpop.permute.xlu0 %1416
        %1420 = vset.pattern.permute.xlu0 0
        %1421 = vperm.xlu0 %1420, %v1399
        %v1422 = vpop.permute.xlu0 %1421
        %1425 = vset.pattern.permute.xlu0 0
        %1426 = vperm.xlu0 %1425, %v1400
        %v1427 = vpop.permute.xlu0 %1426
        %1430 = vset.pattern.permute.xlu0 0
        %1431 = vperm.xlu0 %1430, %v1401
        %v1432 = vpop.permute.xlu0 %1431
        %1435 = vset.pattern.permute.xlu0 0
        %1436 = vperm.xlu0 %1435, %v1402
        %v1437 = vpop.permute.xlu0 %1436
        %1440 = vset.pattern.permute.xlu0 0
        %1441 = vperm.xlu0 %1440, %v1403
        %v1442 = vpop.permute.xlu0 %1441
        %v1444 = vmul.f32 %v1387, %v1407
        %v1445 = vmul.f32 %v1388, %v1412
        %v1446 = vmul.f32 %v1389, %v1417
        %v1447 = vmul.f32 %v1390, %v1422
        %v1448 = vmul.f32 %v1391, %v1427
        %v1449 = vmul.f32 %v1392, %v1432
        %v1450 = vmul.f32 %v1393, %v1437
        %v1451 = vmul.f32 %v1394, %v1442
        %v1452 = vadd.f32 %v1444, %v1445
        %v1453 = vadd.f32 %v1452, %v1446
        %v1454 = vadd.f32 %v1453, %v1447
        %v1455 = vadd.f32 %v1454, %v1448
        %v1456 = vadd.f32 %v1455, %v1449
        %v1457 = vadd.f32 %v1456, %v1450
        %v1458 = vadd.f32 %v1457, %v1451
        %v1459 = vrot.slane %v1458, 4
        %v1460 = vadd.f32 %v1458, %v1459
        %v1461 = vrot.slane %v1460, 2
        %v1462 = vadd.f32 %v1460, %v1461
        %v1463 = vrot.slane %v1462, 1
        %v1464 = vadd.f32 %v1462, %v1463
        %v1465 = vadd.f32 %v1395, %v1464
        %1466 = vst [vmem:[#allocation2] sm:$0x1] %v1465
        %p1467 = scmp.eq.s32.totalorder %s35, 1
        // Predicated region
        $region69: #{tpu_custom_call.1} parent=63 // pred_check
          %p1468 = pneg %p1467
        $region70: #{tpu_custom_call.1} parent=63 // pred_check_branch
          %1470 = sbr.rel (%p1468) target = $region72
        $region71: #{tpu_custom_call.1} parent=63 // pred_region
          %v1471 = vld [vmem:[#allocation2] sm:$0x1]
          %v1472 = vpack.c.bf16 %v1471, %v1471
          %v1473 = vld [vmem:[%s9] sm:$0xf]
          %v1474 = vld [vmem:[%s9 + $0x4] sm:$0xf]
          %v1475 = vld [vmem:[%s9 + $0x8] sm:$0xf]
          %v1476 = vld [vmem:[%s9 + $0xc] sm:$0xf]
          %v1477 = vld [vmem:[%s9 + $0x10] sm:$0xf]
          %v1478 = vld [vmem:[%s9 + $0x14] sm:$0xf]
          %v1479 = vld [vmem:[%s9 + $0x18] sm:$0xf]
          %v1480 = vld [vmem:[%s9 + $0x1c] sm:$0xf]
          %v1481 = vld [vmem:[%s9 + $0x20] sm:$0xf]
          %v1482 = vld [vmem:[%s9 + $0x24] sm:$0xf]
          %v1483 = vld [vmem:[%s9 + $0x28] sm:$0xf]
          %v1484 = vld [vmem:[%s9 + $0x2c] sm:$0xf]
          %v1485 = vld [vmem:[%s9 + $0x30] sm:$0xf]
          %v1486 = vld [vmem:[%s9 + $0x34] sm:$0xf]
          %v1487 = vld [vmem:[%s9 + $0x38] sm:$0xf]
          %v1488 = vld [vmem:[%s9 + $0x3c] sm:$0xf]
          %v1489 = vld [vmem:[%s10] sm:$0x1]
          %v1506 = vunpack.c.l.b16 %v1473
          %v1507 = vunpack.c.l.b16 %v1474
          %v1508 = vunpack.c.l.b16 %v1475
          %v1509 = vunpack.c.l.b16 %v1476
          %v1510 = vunpack.c.l.b16 %v1477
          %v1511 = vunpack.c.l.b16 %v1478
          %v1512 = vunpack.c.l.b16 %v1479
          %v1513 = vunpack.c.l.b16 %v1480
          %v1514 = vunpack.c.l.b16 %v1481
          %v1515 = vunpack.c.l.b16 %v1482
          %v1516 = vunpack.c.l.b16 %v1483
          %v1517 = vunpack.c.l.b16 %v1484
          %v1518 = vunpack.c.l.b16 %v1485
          %v1519 = vunpack.c.l.b16 %v1486
          %v1520 = vunpack.c.l.b16 %v1487
          %v1521 = vunpack.c.l.b16 %v1488
          %v1522 = vpack.c.b16 %v1507, %v1506
          %v1523 = vpack.c.b16 %v1509, %v1508
          %v1524 = vpack.c.b16 %v1511, %v1510
          %v1525 = vpack.c.b16 %v1513, %v1512
          %v1526 = vpack.c.b16 %v1515, %v1514
          %v1527 = vpack.c.b16 %v1517, %v1516
          %v1528 = vpack.c.b16 %v1519, %v1518
          %v1529 = vpack.c.b16 %v1521, %v1520
          %1538 = vmatprep.subr.bf16.mxu0 0
          %1539 = vmatpush1.bf16.msra.mxu0 %v1522
          %1540 = vmatprep.subr.bf16.mxu0 0
          %1541 = vmatpush1.bf16.msra.mxu0 %v1523
          %1542 = vmatprep.subr.bf16.mxu0 0
          %1543 = vmatpush1.bf16.msra.mxu0 %v1524
          %1544 = vmatprep.subr.bf16.mxu0 0
          %1545 = vmatpush1.bf16.msra.mxu0 %v1525
          %1546 = vmatprep.subr.bf16.mxu0 0
          %1547 = vmatpush1.bf16.msra.mxu0 %v1526
          %1548 = vmatprep.subr.bf16.mxu0 0
          %1549 = vmatpush1.bf16.msra.mxu0 %v1527
          %1550 = vmatprep.subr.bf16.mxu0 0
          %1551 = vmatpush1.bf16.msra.mxu0 %v1528
          %1552 = vmatprep.subr.bf16.mxu0 0
          %1553 = vmatpush1.bf16.msra.mxu0 %v1529
          %1554 = vmatprep.subr.bf16.mxu0 0
          %1555 = vmatpush1.bf16.msra.mxu0 0
          %1556 = vmatprep.subr.bf16.mxu0 0
          %1557 = vmatpush1.bf16.msra.mxu0 0
          %1558 = vmatprep.subr.bf16.mxu0 0
          %1559 = vmatpush1.bf16.msra.mxu0 0
          %1560 = vmatprep.subr.bf16.mxu0 0
          %1561 = vmatpush1.bf16.msra.mxu0 0
          %1562 = vmatprep.subr.bf16.mxu0 0
          %1563 = vmatpush1.bf16.msra.mxu0 0
          %1564 = vmatprep.subr.bf16.mxu0 0
          %1565 = vmatpush1.bf16.msra.mxu0 0
          %1566 = vmatprep.subr.bf16.mxu0 0
          %1567 = vmatpush1.bf16.msra.mxu0 0
          %1568 = vmatprep.subr.bf16.mxu0 0
          %1569 = vmatpush1.bf16.msra.mxu0 0
          %1570 = vmatprep.mubr.bf16.mxu0 0
          %1571 = vmatmul.mubr.bf16.gmra.mrb[0].mxu0 %v1472
          %v1572 = vpop.f32.mrb[0].mxu0
          %v1573 = vadd.f32 %v1489, %v1572
          %v1574 = vpop.f32.mrb[0].mxu0
          %v1575 = vpop.f32.mrb[0].mxu0
          %v1576 = vpop.f32.mrb[0].mxu0
          %1577 = vdwg.mxu0
          %1578 = vst [vmem:[%s467] sm:$0x1] %v1573
        $region72: #{tpu_custom_call.1} parent=63 // pred_fallthru
          _
        %s1579 = sand.u32 %s297, 1
        %s1580 = scalar_lea.sflag [#allocation4], %s1579
        %s1581 = sand.u32 %s297, 1
        %s1582 = smul.addr %s1581, 64
        %s1583 = scalar_lea.vmem [#allocation3], %s1582
        %s1584 = sand.u32 %s323, 1
        %s1585 = scalar_lea.sflag [#allocation6], %s1584
        %s1586 = sand.u32 %s323, 1
        %s1587 = scalar_lea.vmem [#allocation5], %s1586
        // Predicated region
        $region73: #{tpu_custom_call.1} parent=63 // pred_check
          %p1588 = pneg %p307
        $region74: #{tpu_custom_call.1} parent=63 // pred_check_branch
          %1590 = sbr.rel (%p1588) target = $region76
        $region75: #{tpu_custom_call.1} parent=63 // pred_region
          %s1591 = smul.u32 8, %s35
          %s1593 = ssub.s32 1024, 1024
          %1594 = vsyncadd %s1580, %s1593
          %s1595 = smul.addr %s34, 16
          %s1596 = sadd.s32 %s1591, %s1595
          %s1597 = smul.addr %s1596, 128
          %s1598 = scalar_lea.hbm %s11, %s1597
          %s1599 = sshll.u32 %s1583, 4
          %s1600 = int_to_ptr.vmem [resolvable:$true] %s1599
          %1605 = dma.vmem_to_hbm [thread:$0]  %s1600, 1024, %s1598, %s1580, 128, 128, 8
        $region76: #{tpu_custom_call.1} parent=63 // pred_fallthru
          _
        // Predicated region
        $region77: #{tpu_custom_call.1} parent=63 // pred_check
          %p1606 = pneg %p333
        $region78: #{tpu_custom_call.1} parent=63 // pred_check_branch
          %1608 = sbr.rel (%p1606) target = $region80
        $region79: #{tpu_custom_call.1} parent=63 // pred_region
          %s1610 = ssub.s32 16, 16
          %1611 = vsyncadd %s1585, %s1610
          %s1612 = smul.addr %s34, 16
          %s1613 = scalar_lea.hbm %s12, %s1612
          %s1615 = sshll.u32 %s1587, 4
          %s1616 = int_to_ptr.vmem [resolvable:$true] %s1615
          %1618 = dma.vmem_to_hbm [thread:$0]  %s1616, 16, %s1613, %s1585
        $region80: #{tpu_custom_call.1} parent=63 // pred_fallthru
          _
      $region64: #{tpu_custom_call.1} parent=5 // pred_fallthru
        _
      %p1619 = scmp.le.s32.totalorder 2, %s25
      // Predicated region
      $region81: #{tpu_custom_call.1} parent=5 // pred_check
        %p1620 = pneg %p1619
      $region82: #{tpu_custom_call.1} parent=5 // pred_check_branch
        %1622 = sbr.rel (%p1620) target = $region84
      $region83: #{tpu_custom_call.1} parent=5 // pred_region
        %s1623 = ssub.s32 %s25, 2
        // Predicated region
        $region85: #{tpu_custom_call.1} parent=83 // pred_check
          %p1624 = pneg %p313
        $region86: #{tpu_custom_call.1} parent=83 // pred_check_branch
          %1626 = sbr.rel (%p1624) target = $region88
        $region87: #{tpu_custom_call.1} parent=83 // pred_region
          %s1627 = sand.u32 %s298, 1
          %s1628 = scalar_lea.sflag [#allocation4], %s1627
          %s1629 = sand.u32 %s298, 1
          %s1630 = smul.addr %s1629, 64
          %s1631 = scalar_lea.vmem [#allocation3], %s1630
          %1632 = dma.done %s1628, 1024
        $region88: #{tpu_custom_call.1} parent=83 // pred_fallthru
          _
        // Predicated region
        $region89: #{tpu_custom_call.1} parent=83 // pred_check
          %p1633 = pneg %p339
        $region90: #{tpu_custom_call.1} parent=83 // pred_check_branch
          %1635 = sbr.rel (%p1633) target = $region92
        $region91: #{tpu_custom_call.1} parent=83 // pred_region
          %s1636 = sand.u32 %s324, 1
          %s1637 = scalar_lea.sflag [#allocation6], %s1636
          %s1638 = sand.u32 %s324, 1
          %s1639 = scalar_lea.vmem [#allocation5], %s1638
          %1640 = dma.done %s1637, 16
        $region92: #{tpu_custom_call.1} parent=83 // pred_fallthru
          _
      $region84: #{tpu_custom_call.1} parent=5 // pred_fallthru
        _
    $region6: #{tpu_custom_call.1} parent=1 // loop_footer
      %s29 = sadd.s32 1, %s25
    $region7: #{tpu_custom_call.1} parent=1 // loop_footer_branch
      %24 = sbr.rel target = $region3
    $region8: #{tpu_custom_call.1} parent=1 // loop_exit
      _
    %1641 = vsyncpa [#allocation4], 1
    %s1642 = scalar_lea.sflag [#allocation4], 1
    %1643 = vsyncpa %s1642, 1
    %1644 = vsyncpa [#allocation6], 1
    %s1645 = scalar_lea.sflag [#allocation6], 1
    %1646 = vsyncpa %s1645, 1

// kernel: tpu_custom_call.1
$region0: #{tpu_custom_call.1}
  #allocation0 [shape = 'u32[]', space=smem, size = 0x4, offset = 0x4, fixed_abs, tag = 'smem constant byte address 0x4 - core index']
  #allocation1 [shape = 'u32[144,128]{1,0:T(1,128)}', space=vmem, size = 0x12000, scoped, tag = 'internal scratch']
  #allocation2 [shape = 'f32[1,128]{1,0:T(1,128)}', space=vmem, size = 0x200, scoped, tag = 'scratch operand']
  %s0 = inlined_call_operand.vmem [shape: s32[2,128,1], index: 0, kind: input, shape index: {}]
  %s1 = inlined_call_operand.vmem [shape: f32[2,128,1], index: 1, kind: input, shape index: {}]
  %s2 = inlined_call_operand.vmem [shape: bf16[128,128], index: 2, kind: input, shape index: {}]
  %s3 = inlined_call_operand.vmem [shape: bf16[128,256], index: 3, kind: input, shape index: {}]
  %s4 = inlined_call_operand.vmem [shape: f32[1,256], index: 4, kind: input, shape index: {}]
  %s5 = inlined_call_operand.vmem [shape: bf16[256,128], index: 5, kind: input, shape index: {}]
  %s6 = inlined_call_operand.vmem [shape: f32[1,128], index: 6, kind: input, shape index: {}]
  %s7 = inlined_call_operand.vmem [shape: bf16[128,128], index: 7, kind: input, shape index: {}]
  %s8 = inlined_call_operand.vmem [shape: f32[1,128], index: 8, kind: input, shape index: {}]
  %s9 = inlined_call_operand.vmem [shape: bf16[128,128], index: 9, kind: input, shape index: {}]
  %s10 = inlined_call_operand.vmem [shape: f32[1,128], index: 10, kind: input, shape index: {}]
  %s11 = inlined_call_operand.hbm [shape: f32[2,128,128], index: 11, kind: output, shape index: {0}]
  %s12 = inlined_call_operand.hbm [shape: f32[2,1,128], index: 12, kind: output, shape index: {1}]
  %13 = xla_tuple %s11, %s12
  %s14 = sld [smem:[#allocation0]]
  $region93: #{tpu_custom_call.1} parent=0
    _
  %s16 = ssub.s32 1, %s14
  %s17 = scalar_select 0, %s16, %s14
  $region1: #{tpu_custom_call.1} parent=0
    #allocation3 [shape = 'u8[65536]{0}', space=vmem, size = 0x10000, scoped, tag = 'output window, operand 0']
    #allocation4 [shape = 's32[2]{0}', space=sflag, size = 0x8, scoped, tag = 'scoped memory for tpu_custom_call.1']
    #allocation5 [shape = 'u8[1024]{0}', space=vmem, size = 0x400, scoped, tag = 'output window, operand 1']
    #allocation6 [shape = 's32[2]{0}', space=sflag, size = 0x8, scoped, tag = 'scoped memory for tpu_custom_call.1']
    %18 = vsyncpa [#allocation4], 0
    %s19 = scalar_lea.sflag [#allocation4], 1
    %20 = vsyncpa %s19, 0
    %21 = vsyncpa [#allocation6], 0
    %s22 = scalar_lea.sflag [#allocation6], 1
    %23 = vsyncpa %s22, 0
    loop: start=0, step=1, limit=6
    $region2: #{tpu_custom_call.1} parent=1 // loop_pre_header
      _
    $region3: #{tpu_custom_call.1} parent=1 // loop_header
      %s25 = sphi 0, %s29
      %p26 = scmp.ge.s32.totalorder %s25, 6
      %s32 = sphi 0, %s44
      %s33 = sphi 0, %s40
      %s34 = sphi 0, %s32
      %s35 = sphi 0, %s33
      %s36 = sphi 0, %s34
      %s37 = sphi 0, %s35
      %s49 = sphi 0, %s51
      %s52 = sphi 0, %s49
      %s53 = sphi 0, %s52
      %s69 = sphi 0, %s53
      %s77 = sphi 0, %s79
      %s80 = sphi 0, %s77
      %s81 = sphi 0, %s80
      %s97 = sphi 0, %s81
      %s101 = sphi 0, %s101
      %s103 = sphi 0, %s101
      %s104 = sphi 0, %s103
      %s118 = sphi 0, %s104
      %s122 = sphi 0, %s122
      %s124 = sphi 0, %s122
      %s125 = sphi 0, %s124
      %s139 = sphi 0, %s125
      %s143 = sphi 0, %s143
      %s145 = sphi 0, %s143
      %s146 = sphi 0, %s145
      %s160 = sphi 0, %s146
      %s164 = sphi 0, %s164
      %s166 = sphi 0, %s164
      %s167 = sphi 0, %s166
      %s181 = sphi 0, %s167
      %s185 = sphi 0, %s185
      %s187 = sphi 0, %s185
      %s188 = sphi 0, %s187
      %s202 = sphi 0, %s188
      %s206 = sphi 0, %s206
      %s208 = sphi 0, %s206
      %s209 = sphi 0, %s208
      %s223 = sphi 0, %s209
      %s227 = sphi 0, %s227
      %s229 = sphi 0, %s227
      %s230 = sphi 0, %s229
      %s244 = sphi 0, %s230
      %s248 = sphi 0, %s248
      %s250 = sphi 0, %s248
      %s251 = sphi 0, %s250
      %s265 = sphi 0, %s251
      %s269 = sphi 0, %s269
      %s271 = sphi 0, %s269
      %s272 = sphi 0, %s271
      %s286 = sphi 0, %s272
      %s294 = sphi 0, %s296
      %s297 = sphi 0, %s294
      %s298 = sphi 0, %s297
      %s314 = sphi 0, %s298
      %s320 = sphi 0, %s322
      %s323 = sphi 0, %s320
      %s324 = sphi 0, %s323
      %s340 = sphi 0, %s324
    $region4: #{tpu_custom_call.1} parent=1 // loop_header_branch
      %28 = sbr.rel (%p26) target = $region8
    $region5: #{tpu_custom_call.1} parent=1 // loop_body
      %s30 = ssub.s32 %s25, 1
      %s31 = ssub.s32 %s25, 2
      %s38 = sadd.s32 1, %s33
      %p39 = scmp.ge.s32.totalorder %s38, 2
      %s40 = scalar_select %p39, 0, %s38
      %s41 = sadd.s32 1, %s32
      %s42 = scalar_select %p39, %s41, %s32
      %p43 = scmp.ge.s32.totalorder %s42, 2
      %s44 = scalar_select %p43, 0, %s42
      %s45 = ssub.s32 %s32, %s44
      %s46 = ssub.s32 %s33, %s40
      %s47 = sor.u32 %s45, %s46
      %p48 = scmp.eq.s32.totalorder %s47, 0
      %s50 = sadd.s32 %s49, 1
      %s51 = scalar_select %p48, %s49, %s50
      %p54 = pneg %p48
      %p55 = scmp.eq.s32.totalorder %s25, 3
      %p56 = por %p54, %p55
      %p57 = scmp.ne.s32.totalorder %s49, %s52
      %p58 = scmp.eq.s32.totalorder %s25, 0
      %p59 = por %p57, %p58
      %p60 = scmp.ne.s32.totalorder %s49, %s52
      %p61 = scmp.eq.s32.totalorder %s30, 3
      %p62 = por %p60, %p61
      %p63 = scmp.ne.s32.totalorder %s52, %s53
      %p64 = scmp.eq.s32.totalorder %s30, 0
      %p65 = por %p63, %p64
      %p66 = scmp.ne.s32.totalorder %s52, %s53
      %p67 = scmp.eq.s32.totalorder %s31, 3
      %p68 = por %p66, %p67
      %p70 = scmp.ne.s32.totalorder %s53, %s69
      %p71 = scmp.eq.s32.totalorder %s31, 0
      %p72 = por %p70, %p71
      %s73 = ssub.s32 %s32, %s44
      %s74 = ssub.s32 %s33, %s40
      %s75 = sor.u32 %s73, %s74
      %p76 = scmp.eq.s32.totalorder %s75, 0
      %s78 = sadd.s32 %s77, 1
      %s79 = scalar_select %p76, %s77, %s78
      %p82 = pneg %p76
      %p83 = scmp.eq.s32.totalorder %s25, 3
      %p84 = por %p82, %p83
      %p85 = scmp.ne.s32.totalorder %s77, %s80
      %p86 = scmp.eq.s32.totalorder %s25, 0
      %p87 = por %p85, %p86
      %p88 = scmp.ne.s32.totalorder %s77, %s80
      %p89 = scmp.eq.s32.totalorder %s30, 3
      %p90 = por %p88, %p89
      %p91 = scmp.ne.s32.totalorder %s80, %s81
      %p92 = scmp.eq.s32.totalorder %s30, 0
      %p93 = por %p91, %p92
      %p94 = scmp.ne.s32.totalorder %s80, %s81
      %p95 = scmp.eq.s32.totalorder %s31, 3
      %p96 = por %p94, %p95
      %p98 = scmp.ne.s32.totalorder %s81, %s97
      %p99 = scmp.eq.s32.totalorder %s31, 0
      %p100 = por %p98, %p99
      %s102 = sadd.s32 %s101, 1
      %p105 = scmp.eq.s32.totalorder %s25, 3
      %p106 = scmp.ne.s32.totalorder %s101, %s103
      %p107 = scmp.eq.s32.totalorder %s25, 0
      %p108 = por %p106, %p107
      %p109 = scmp.ne.s32.totalorder %s101, %s103
      %p110 = scmp.eq.s32.totalorder %s30, 3
      %p111 = por %p109, %p110
      %p112 = scmp.ne.s32.totalorder %s103, %s104
      %p113 = scmp.eq.s32.totalorder %s30, 0
      %p114 = por %p112, %p113
      %p115 = scmp.ne.s32.totalorder %s103, %s104
      %p116 = scmp.eq.s32.totalorder %s31, 3
      %p117 = por %p115, %p116
      %p119 = scmp.ne.s32.totalorder %s104, %s118
      %p120 = scmp.eq.s32.totalorder %s31, 0
      %p121 = por %p119, %p120
      %s123 = sadd.s32 %s122, 1
      %p126 = scmp.eq.s32.totalorder %s25, 3
      %p127 = scmp.ne.s32.totalorder %s122, %s124
      %p128 = scmp.eq.s32.totalorder %s25, 0
      %p129 = por %p127, %p128
      %p130 = scmp.ne.s32.totalorder %s122, %s124
      %p131 = scmp.eq.s32.totalorder %s30, 3
      %p132 = por %p130, %p131
      %p133 = scmp.ne.s32.totalorder %s124, %s125
      %p134 = scmp.eq.s32.totalorder %s30, 0
      %p135 = por %p133, %p134
      %p136 = scmp.ne.s32.totalorder %s124, %s125
      %p137 = scmp.eq.s32.totalorder %s31, 3
      %p138 = por %p136, %p137
      %p140 = scmp.ne.s32.totalorder %s125, %s139
      %p141 = scmp.eq.s32.totalorder %s31, 0
      %p142 = por %p140, %p141
      %s144 = sadd.s32 %s143, 1
      %p147 = scmp.eq.s32.totalorder %s25, 3
      %p148 = scmp.ne.s32.totalorder %s143, %s145
      %p149 = scmp.eq.s32.totalorder %s25, 0
      %p150 = por %p148, %p149
      %p151 = scmp.ne.s32.totalorder %s143, %s145
      %p152 = scmp.eq.s32.totalorder %s30, 3
      %p153 = por %p151, %p152
      %p154 = scmp.ne.s32.totalorder %s145, %s146
      %p155 = scmp.eq.s32.totalorder %s30, 0
      %p156 = por %p154, %p155
      %p157 = scmp.ne.s32.totalorder %s145, %s146
      %p158 = scmp.eq.s32.totalorder %s31, 3
      %p159 = por %p157, %p158
      %p161 = scmp.ne.s32.totalorder %s146, %s160
      %p162 = scmp.eq.s32.totalorder %s31, 0
      %p163 = por %p161, %p162
      %s165 = sadd.s32 %s164, 1
      %p168 = scmp.eq.s32.totalorder %s25, 3
      %p169 = scmp.ne.s32.totalorder %s164, %s166
      %p170 = scmp.eq.s32.totalorder %s25, 0
      %p171 = por %p169, %p170
      %p172 = scmp.ne.s32.totalorder %s164, %s166
      %p173 = scmp.eq.s32.totalorder %s30, 3
      %p174 = por %p172, %p173
      %p175 = scmp.ne.s32.totalorder %s166, %s167
      %p176 = scmp.eq.s32.totalorder %s30, 0
      %p177 = por %p175, %p176
      %p178 = scmp.ne.s32.totalorder %s166, %s167
      %p179 = scmp.eq.s32.totalorder %s31, 3
      %p180 = por %p178, %p179
      %p182 = scmp.ne.s32.totalorder %s167, %s181
      %p183 = scmp.eq.s32.totalorder %s31, 0
      %p184 = por %p182, %p183
      %s186 = sadd.s32 %s185, 1
      %p189 = scmp.eq.s32.totalorder %s25, 3
      %p190 = scmp.ne.s32.totalorder %s185, %s187
      %p191 = scmp.eq.s32.totalorder %s25, 0
      %p192 = por %p190, %p191
      %p193 = scmp.ne.s32.totalorder %s185, %s187
      %p194 = scmp.eq.s32.totalorder %s30, 3
      %p195 = por %p193, %p194
      %p196 = scmp.ne.s32.totalorder %s187, %s188
      %p197 = scmp.eq.s32.totalorder %s30, 0
      %p198 = por %p196, %p197
      %p199 = scmp.ne.s32.totalorder %s187, %s188
      %p200 = scmp.eq.s32.totalorder %s31, 3
      %p201 = por %p199, %p200
      %p203 = scmp.ne.s32.totalorder %s188, %s202
      %p204 = scmp.eq.s32.totalorder %s31, 0
      %p205 = por %p203, %p204
      %s207 = sadd.s32 %s206, 1
      %p210 = scmp.eq.s32.totalorder %s25, 3
      %p211 = scmp.ne.s32.totalorder %s206, %s208
      %p212 = scmp.eq.s32.totalorder %s25, 0
      %p213 = por %p211, %p212
      %p214 = scmp.ne.s32.totalorder %s206, %s208
      %p215 = scmp.eq.s32.totalorder %s30, 3
      %p216 = por %p214, %p215
      %p217 = scmp.ne.s32.totalorder %s208, %s209
      %p218 = scmp.eq.s32.totalorder %s30, 0
      %p219 = por %p217, %p218
      %p220 = scmp.ne.s32.totalorder %s208, %s209
      %p221 = scmp.eq.s32.totalorder %s31, 3
      %p222 = por %p220, %p221
      %p224 = scmp.ne.s32.totalorder %s209, %s223
      %p225 = scmp.eq.s32.totalorder %s31, 0
      %p226 = por %p224, %p225
      %s228 = sadd.s32 %s227, 1
      %p231 = scmp.eq.s32.totalorder %s25, 3
      %p232 = scmp.ne.s32.totalorder %s227, %s229
      %p233 = scmp.eq.s32.totalorder %s25, 0
      %p234 = por %p232, %p233
      %p235 = scmp.ne.s32.totalorder %s227, %s229
      %p236 = scmp.eq.s32.totalorder %s30, 3
      %p237 = por %p235, %p236
      %p238 = scmp.ne.s32.totalorder %s229, %s230
      %p239 = scmp.eq.s32.totalorder %s30, 0
      %p240 = por %p238, %p239
      %p241 = scmp.ne.s32.totalorder %s229, %s230
      %p242 = scmp.eq.s32.totalorder %s31, 3
      %p243 = por %p241, %p242
      %p245 = scmp.ne.s32.totalorder %s230, %s244
      %p246 = scmp.eq.s32.totalorder %s31, 0
      %p247 = por %p245, %p246
      %s249 = sadd.s32 %s248, 1
      %p252 = scmp.eq.s32.totalorder %s25, 3
      %p253 = scmp.ne.s32.totalorder %s248, %s250
      %p254 = scmp.eq.s32.totalorder %s25, 0
      %p255 = por %p253, %p254
      %p256 = scmp.ne.s32.totalorder %s248, %s250
      %p257 = scmp.eq.s32.totalorder %s30, 3
      %p258 = por %p256, %p257
      %p259 = scmp.ne.s32.totalorder %s250, %s251
      %p260 = scmp.eq.s32.totalorder %s30, 0
      %p261 = por %p259, %p260
      %p262 = scmp.ne.s32.totalorder %s250, %s251
      %p263 = scmp.eq.s32.totalorder %s31, 3
      %p264 = por %p262, %p263
      %p266 = scmp.ne.s32.totalorder %s251, %s265
      %p267 = scmp.eq.s32.totalorder %s31, 0
      %p268 = por %p266, %p267
      %s270 = sadd.s32 %s269, 1
      %p273 = scmp.eq.s32.totalorder %s25, 3
      %p274 = scmp.ne.s32.totalorder %s269, %s271
      %p275 = scmp.eq.s32.totalorder %s25, 0
      %p276 = por %p274, %p275
      %p277 = scmp.ne.s32.totalorder %s269, %s271
      %p278 = scmp.eq.s32.totalorder %s30, 3
      %p279 = por %p277, %p278
      %p280 = scmp.ne.s32.totalorder %s271, %s272
      %p281 = scmp.eq.s32.totalorder %s30, 0
      %p282 = por %p280, %p281
      %p283 = scmp.ne.s32.totalorder %s271, %s272
      %p284 = scmp.eq.s32.totalorder %s31, 3
      %p285 = por %p283, %p284
      %p287 = scmp.ne.s32.totalorder %s272, %s286
      %p288 = scmp.eq.s32.totalorder %s31, 0
      %p289 = por %p287, %p288
      %s290 = ssub.s32 %s32, %s44
      %s291 = ssub.s32 %s33, %s40
      %s292 = sor.u32 %s290, %s291
      %p293 = scmp.eq.s32.totalorder %s292, 0
      %s295 = sadd.s32 %s294, 1
      %s296 = scalar_select %p293, %s294, %s295
      %p299 = pneg %p293
      %p300 = scmp.eq.s32.totalorder %s25, 3
      %p301 = por %p299, %p300
      %p302 = scmp.ne.s32.totalorder %s294, %s297
      %p303 = scmp.eq.s32.totalorder %s25, 0
      %p304 = por %p302, %p303
      %p305 = scmp.ne.s32.totalorder %s294, %s297
      %p306 = scmp.eq.s32.totalorder %s30, 3
      %p307 = por %p305, %p306
      %p308 = scmp.ne.s32.totalorder %s297, %s298
      %p309 = scmp.eq.s32.totalorder %s30, 0
      %p310 = por %p308, %p309
      %p311 = scmp.ne.s32.totalorder %s297, %s298
      %p312 = scmp.eq.s32.totalorder %s31, 3
      %p313 = por %p311, %p312
      %p315 = scmp.ne.s32.totalorder %s298, %s314
      %p316 = scmp.eq.s32.totalorder %s31, 0
      %p317 = por %p315, %p316
      %s318 = ssub.s32 %s32, %s44
      %p319 = scmp.eq.s32.totalorder %s318, 0
      %s321 = sadd.s32 %s320, 1
      %s322 = scalar_select %p319, %s320, %s321
      %p325 = pneg %p319
      %p326 = scmp.eq.s32.totalorder %s25, 3
      %p327 = por %p325, %p326
      %p328 = scmp.ne.s32.totalorder %s320, %s323
      %p329 = scmp.eq.s32.totalorder %s25, 0
      %p330 = por %p328, %p329
      %p331 = scmp.ne.s32.totalorder %s320, %s323
      %p332 = scmp.eq.s32.totalorder %s30, 3
      %p333 = por %p331, %p332
      %p334 = scmp.ne.s32.totalorder %s323, %s324
      %p335 = scmp.eq.s32.totalorder %s30, 0
      %p336 = por %p334, %p335
      %p337 = scmp.ne.s32.totalorder %s323, %s324
      %p338 = scmp.eq.s32.totalorder %s31, 3
      %p339 = por %p337, %p338
      %p341 = scmp.ne.s32.totalorder %s324, %s340
      %p342 = scmp.eq.s32.totalorder %s31, 0
      %p343 = por %p341, %p342
      %p344 = scmp.le.s32.totalorder 1, %s25
      %p345 = scmp.lt.s32.totalorder %s25, 5
      %p346 = pnand %p344, %p345
      %p347 = pneg %p346
      // Predicated region
      $region9: #{tpu_custom_call.1} parent=5 // pred_check
        _
      $region10: #{tpu_custom_call.1} parent=5 // pred_check_branch
        %349 = sbr.rel (%p346) target = $region12
      $region11: #{tpu_custom_call.1} parent=5 // pred_region
        %s350 = ssub.s32 %s25, 1
        // Predicated region
        $region13: #{tpu_custom_call.1} parent=11 // pred_check
          %p351 = pneg %p114
        $region14: #{tpu_custom_call.1} parent=11 // pred_check_branch
          %353 = sbr.rel (%p351) target = $region16
        $region15: #{tpu_custom_call.1} parent=11 // pred_region
          _
        $region16: #{tpu_custom_call.1} parent=11 // pred_fallthru
          _
        // Predicated region
        $region17: #{tpu_custom_call.1} parent=11 // pred_check
          %p354 = pneg %p135
        $region18: #{tpu_custom_call.1} parent=11 // pred_check_branch
          %356 = sbr.rel (%p354) target = $region20
        $region19: #{tpu_custom_call.1} parent=11 // pred_region
          _
        $region20: #{tpu_custom_call.1} parent=11 // pred_fallthru
          _
        // Predicated region
        $region21: #{tpu_custom_call.1} parent=11 // pred_check
          %p357 = pneg %p156
        $region22: #{tpu_custom_call.1} parent=11 // pred_check_branch
          %359 = sbr.rel (%p357) target = $region24
        $region23: #{tpu_custom_call.1} parent=11 // pred_region
          _
        $region24: #{tpu_custom_call.1} parent=11 // pred_fallthru
          _
        // Predicated region
        $region25: #{tpu_custom_call.1} parent=11 // pred_check
          %p360 = pneg %p177
        $region26: #{tpu_custom_call.1} parent=11 // pred_check_branch
          %362 = sbr.rel (%p360) target = $region28
        $region27: #{tpu_custom_call.1} parent=11 // pred_region
          _
        $region28: #{tpu_custom_call.1} parent=11 // pred_fallthru
          _
        // Predicated region
        $region29: #{tpu_custom_call.1} parent=11 // pred_check
          %p363 = pneg %p198
        $region30: #{tpu_custom_call.1} parent=11 // pred_check_branch
          %365 = sbr.rel (%p363) target = $region32
        $region31: #{tpu_custom_call.1} parent=11 // pred_region
          _
        $region32: #{tpu_custom_call.1} parent=11 // pred_fallthru
          _
        // Predicated region
        $region33: #{tpu_custom_call.1} parent=11 // pred_check
          %p366 = pneg %p219
        $region34: #{tpu_custom_call.1} parent=11 // pred_check_branch
          %368 = sbr.rel (%p366) target = $region36
        $region35: #{tpu_custom_call.1} parent=11 // pred_region
          _
        $region36: #{tpu_custom_call.1} parent=11 // pred_fallthru
          _
        // Predicated region
        $region37: #{tpu_custom_call.1} parent=11 // pred_check
          %p369 = pneg %p240
        $region38: #{tpu_custom_call.1} parent=11 // pred_check_branch
          %371 = sbr.rel (%p369) target = $region40
        $region39: #{tpu_custom_call.1} parent=11 // pred_region
          _
        $region40: #{tpu_custom_call.1} parent=11 // pred_fallthru
          _
        // Predicated region
        $region41: #{tpu_custom_call.1} parent=11 // pred_check
          %p372 = pneg %p261
        $region42: #{tpu_custom_call.1} parent=11 // pred_check_branch
          %374 = sbr.rel (%p372) target = $region44
        $region43: #{tpu_custom_call.1} parent=11 // pred_region
          _
        $region44: #{tpu_custom_call.1} parent=11 // pred_fallthru
          _
        // Predicated region
        $region45: #{tpu_custom_call.1} parent=11 // pred_check
          %p375 = pneg %p282
        $region46: #{tpu_custom_call.1} parent=11 // pred_check_branch
          %377 = sbr.rel (%p375) target = $region48
        $region47: #{tpu_custom_call.1} parent=11 // pred_region
          _
        $region48: #{tpu_custom_call.1} parent=11 // pred_fallthru
          _
      $region12: #{tpu_custom_call.1} parent=5 // pred_fallthru
        _
      %p378 = scmp.lt.s32.totalorder %s25, 4
      // Predicated region
      $region49: #{tpu_custom_call.1} parent=5 // pred_check
        %p379 = pneg %p378
      $region50: #{tpu_custom_call.1} parent=5 // pred_check_branch
        %381 = sbr.rel (%p379) target = $region52
      $region51: #{tpu_custom_call.1} parent=5 // pred_region
        // Predicated region
        $region53: #{tpu_custom_call.1} parent=51 // pred_check
          %p382 = pneg %p59
        $region54: #{tpu_custom_call.1} parent=51 // pred_check_branch
          %384 = sbr.rel (%p382) target = $region56
        $region55: #{tpu_custom_call.1} parent=51 // pred_region
          %s385 = smul.u32 8, %s33
          %p386 = scmp.lt.s32.totalorder %s32, 1
          %s387 = scalar_select %p386, %s32, 1
          %p388 = scmp.lt.s32.totalorder %s385, 15
          %s389 = scalar_select %p388, %s385, 15
          %s390 = smul.addr %s387, 16
          %s391 = sadd.s32 %s389, %s390
          %s392 = smul.addr %s391, 8
          %s393 = scalar_lea.vmem %s0, %s392
          %s394 = smul.u32 8, %s33
        $region56: #{tpu_custom_call.1} parent=51 // pred_fallthru
          _
        // Predicated region
        $region57: #{tpu_custom_call.1} parent=51 // pred_check
          %p395 = pneg %p87
        $region58: #{tpu_custom_call.1} parent=51 // pred_check_branch
          %397 = sbr.rel (%p395) target = $region60
        $region59: #{tpu_custom_call.1} parent=51 // pred_region
          %s398 = smul.u32 8, %s33
          %p399 = scmp.lt.s32.totalorder %s32, 1
          %s400 = scalar_select %p399, %s32, 1
          %p401 = scmp.lt.s32.totalorder %s398, 15
          %s402 = scalar_select %p401, %s398, 15
          %s403 = smul.addr %s400, 16
          %s404 = sadd.s32 %s402, %s403
          %s405 = smul.addr %s404, 8
          %s406 = scalar_lea.vmem %s1, %s405
          %s407 = smul.u32 8, %s33
        $region60: #{tpu_custom_call.1} parent=51 // pred_fallthru
          _
      $region52: #{tpu_custom_call.1} parent=5 // pred_fallthru
        _
      %p408 = scmp.le.s32.totalorder 1, %s25
      %p409 = scmp.lt.s32.totalorder %s25, 5
      %p410 = pnand %p408, %p409
      %p411 = pneg %p410
      // Predicated region
      $region61: #{tpu_custom_call.1} parent=5 // pred_check
        _
      $region62: #{tpu_custom_call.1} parent=5 // pred_check_branch
        %413 = sbr.rel (%p410) target = $region64
      $region63: #{tpu_custom_call.1} parent=5 // pred_region
        %s414 = ssub.s32 %s25, 1
        %s415 = smul.u32 8, %s35
        %p416 = scmp.lt.s32.totalorder %s34, 1
        %s417 = scalar_select %p416, %s34, 1
        %p418 = scmp.lt.s32.totalorder %s415, 15
        %s419 = scalar_select %p418, %s415, 15
        %s420 = smul.addr %s417, 16
        %s421 = sadd.s32 %s419, %s420
        %s422 = smul.addr %s421, 8
        %s423 = scalar_lea.vmem %s0, %s422
        %p424 = pneg %p65
        %p425 = pneg %p62
        %s426 = smul.u32 8, %s35
        %p427 = scmp.lt.s32.totalorder %s34, 1
        %s428 = scalar_select %p427, %s34, 1
        %p429 = scmp.lt.s32.totalorder %s426, 15
        %s430 = scalar_select %p429, %s426, 15
        %s431 = smul.addr %s428, 16
        %s432 = sadd.s32 %s430, %s431
        %s433 = smul.addr %s432, 8
        %s434 = scalar_lea.vmem %s1, %s433
        %p435 = pneg %p93
        %p436 = pneg %p90
        %p437 = pneg %p114
        %p438 = pneg %p111
        %p439 = pneg %p135
        %p440 = pneg %p132
        %p441 = pneg %p156
        %p442 = pneg %p153
        %p443 = pneg %p177
        %p444 = pneg %p174
        %p445 = pneg %p198
        %p446 = pneg %p195
        %p447 = pneg %p219
        %p448 = pneg %p216
        %p449 = pneg %p240
        %p450 = pneg %p237
        %p451 = pneg %p261
        %p452 = pneg %p258
        %p453 = pneg %p282
        %p454 = pneg %p279
        %p455 = pneg %p310
        %p456 = pneg %p307
        %s457 = sand.u32 %s297, 1
        %s458 = scalar_lea.sflag [#allocation4], %s457
        %s459 = sand.u32 %s297, 1
        %s460 = smul.addr %s459, 64
        %s461 = scalar_lea.vmem [#allocation3], %s460
        %p462 = pneg %p336
        %p463 = pneg %p333
        %s464 = sand.u32 %s323, 1
        %s465 = scalar_lea.sflag [#allocation6], %s464
        %s466 = sand.u32 %s323, 1
        %s467 = scalar_lea.vmem [#allocation5], %s466
        %s468 = smul.u32 8, %s35
        %p469 = scmp.lt.s32.totalorder %s34, 1
        %s470 = scalar_select %p469, %s34, 1
        %p471 = scmp.lt.s32.totalorder %s468, 15
        %s472 = scalar_select %p471, %s468, 15
        %s473 = smul.addr %s470, 16
        %s474 = sadd.s32 %s472, %s473
        %s475 = smul.addr %s474, 8
        %s476 = scalar_lea.vmem %s0, %s475
        %s477 = smul.u32 8, %s35
        %s478 = smul.u32 8, %s35
        %p479 = scmp.lt.s32.totalorder %s34, 1
        %s480 = scalar_select %p479, %s34, 1
        %p481 = scmp.lt.s32.totalorder %s478, 15
        %s482 = scalar_select %p481, %s478, 15
        %s483 = smul.addr %s480, 16
        %s484 = sadd.s32 %s482, %s483
        %s485 = smul.addr %s484, 8
        %s486 = scalar_lea.vmem %s1, %s485
        %s487 = smul.u32 8, %s35
        %s488 = smul.u32 8, %s35
        %p490 = scmp.eq.s32.totalorder %s35, 0
        // Predicated region
        $region65: #{tpu_custom_call.1} parent=63 // pred_check
          %p491 = pneg %p490
        $region66: #{tpu_custom_call.1} parent=63 // pred_check_branch
          %493 = sbr.rel (%p491) target = $region68
        $region67: #{tpu_custom_call.1} parent=63 // pred_region
          %494 = vst [vmem:[#allocation2] sm:$0x1] 0.0
        $region68: #{tpu_custom_call.1} parent=63 // pred_fallthru
          _
        %v495 = vld [vmem:[%s476] sm:$0xff]
        %v496 = vld [vmem:[%s476 + $0x8] sm:$0xff]
        %v497 = vld [vmem:[%s476 + $0x10] sm:$0xff]
        %v498 = vld [vmem:[%s476 + $0x18] sm:$0xff]
        %v499 = vld [vmem:[%s476 + $0x20] sm:$0xff]
        %v500 = vld [vmem:[%s476 + $0x28] sm:$0xff]
        %v501 = vld [vmem:[%s476 + $0x30] sm:$0xff]
        %v502 = vld [vmem:[%s476 + $0x38] sm:$0xff]
        %v503 = vlaneseq
        %v504 = vand.u32 %v503, 127
        %505 = vset.pattern.permute.xlu0 0
        %506 = vperm.xlu0 %505, %v495
        %v507 = vpop.permute.xlu0 %506
        %508 = vset.pattern.permute.xlu0 0
        %509 = vperm.xlu0 %508, %v496
        %v510 = vpop.permute.xlu0 %509
        %511 = vset.pattern.permute.xlu0 0
        %512 = vperm.xlu0 %511, %v497
        %v513 = vpop.permute.xlu0 %512
        %514 = vset.pattern.permute.xlu0 0
        %515 = vperm.xlu0 %514, %v498
        %v516 = vpop.permute.xlu0 %515
        %517 = vset.pattern.permute.xlu0 0
        %518 = vperm.xlu0 %517, %v499
        %v519 = vpop.permute.xlu0 %518
        %520 = vset.pattern.permute.xlu0 0
        %521 = vperm.xlu0 %520, %v500
        %v522 = vpop.permute.xlu0 %521
        %523 = vset.pattern.permute.xlu0 0
        %524 = vperm.xlu0 %523, %v501
        %v525 = vpop.permute.xlu0 %524
        %526 = vset.pattern.permute.xlu0 0
        %527 = vperm.xlu0 %526, %v502
        %v528 = vpop.permute.xlu0 %527
        %vm529 = vcmp.eq.s32.totalorder %v507, %v504
        %vm530 = vcmp.eq.s32.totalorder %v510, %v504
        %vm531 = vcmp.eq.s32.totalorder %v513, %v504
        %vm532 = vcmp.eq.s32.totalorder %v516, %v504
        %vm533 = vcmp.eq.s32.totalorder %v519, %v504
        %vm534 = vcmp.eq.s32.totalorder %v522, %v504
        %vm535 = vcmp.eq.s32.totalorder %v525, %v504
        %vm536 = vcmp.eq.s32.totalorder %v528, %v504
        %v537 = vsel %vm529, 1, 0
        %v538 = vsel %vm530, 1, 0
        %v539 = vsel %vm531, 1, 0
        %v540 = vsel %vm532, 1, 0
        %v541 = vsel %vm533, 1, 0
        %v542 = vsel %vm534, 1, 0
        %v543 = vsel %vm535, 1, 0
        %v544 = vsel %vm536, 1, 0
        %v545 = vcvt.s32.f32 %v537
        %v546 = vcvt.s32.f32 %v538
        %v547 = vcvt.s32.f32 %v539
        %v548 = vcvt.s32.f32 %v540
        %v549 = vcvt.s32.f32 %v541
        %v550 = vcvt.s32.f32 %v542
        %v551 = vcvt.s32.f32 %v543
        %v552 = vcvt.s32.f32 %v544
        %v553 = vpack.c.bf16 %v546, %v545
        %v554 = vpack.c.bf16 %v548, %v547
        %v555 = vpack.c.bf16 %v550, %v549
        %v556 = vpack.c.bf16 %v552, %v551
        %v557 = vld [vmem:[%s2] sm:$0xf]
        %v558 = vld [vmem:[%s2 + $0x4] sm:$0xf]
        %v559 = vld [vmem:[%s2 + $0x8] sm:$0xf]
        %v560 = vld [vmem:[%s2 + $0xc] sm:$0xf]
        %v561 = vld [vmem:[%s2 + $0x10] sm:$0xf]
        %v562 = vld [vmem:[%s2 + $0x14] sm:$0xf]
        %v563 = vld [vmem:[%s2 + $0x18] sm:$0xf]
        %v564 = vld [vmem:[%s2 + $0x1c] sm:$0xf]
        %v565 = vld [vmem:[%s2 + $0x20] sm:$0xf]
        %v566 = vld [vmem:[%s2 + $0x24] sm:$0xf]
        %v567 = vld [vmem:[%s2 + $0x28] sm:$0xf]
        %v568 = vld [vmem:[%s2 + $0x2c] sm:$0xf]
        %v569 = vld [vmem:[%s2 + $0x30] sm:$0xf]
        %v570 = vld [vmem:[%s2 + $0x34] sm:$0xf]
        %v571 = vld [vmem:[%s2 + $0x38] sm:$0xf]
        %v572 = vld [vmem:[%s2 + $0x3c] sm:$0xf]
        %v589 = vunpack.c.l.b16 %v557
        %v590 = vunpack.c.l.b16 %v558
        %v591 = vunpack.c.l.b16 %v559
        %v592 = vunpack.c.l.b16 %v560
        %v593 = vunpack.c.l.b16 %v561
        %v594 = vunpack.c.l.b16 %v562
        %v595 = vunpack.c.l.b16 %v563
        %v596 = vunpack.c.l.b16 %v564
        %v597 = vunpack.c.l.b16 %v565
        %v598 = vunpack.c.l.b16 %v566
        %v599 = vunpack.c.l.b16 %v567
        %v600 = vunpack.c.l.b16 %v568
        %v601 = vunpack.c.l.b16 %v569
        %v602 = vunpack.c.l.b16 %v570
        %v603 = vunpack.c.l.b16 %v571
        %v604 = vunpack.c.l.b16 %v572
        %v605 = vpack.c.b16 %v590, %v589
        %v606 = vpack.c.b16 %v592, %v591
        %v607 = vpack.c.b16 %v594, %v593
        %v608 = vpack.c.b16 %v596, %v595
        %v609 = vpack.c.b16 %v598, %v597
        %v610 = vpack.c.b16 %v600, %v599
        %v611 = vpack.c.b16 %v602, %v601
        %v612 = vpack.c.b16 %v604, %v603
        %621 = vmatprep.subr.bf16.mxu0 0
        %622 = vmatpush1.bf16.msra.mxu0 %v605
        %623 = vmatprep.subr.bf16.mxu0 0
        %624 = vmatpush1.bf16.msra.mxu0 %v606
        %625 = vmatprep.subr.bf16.mxu0 0
        %626 = vmatpush1.bf16.msra.mxu0 %v607
        %627 = vmatprep.subr.bf16.mxu0 0
        %628 = vmatpush1.bf16.msra.mxu0 %v608
        %629 = vmatprep.subr.bf16.mxu0 0
        %630 = vmatpush1.bf16.msra.mxu0 %v609
        %631 = vmatprep.subr.bf16.mxu0 0
        %632 = vmatpush1.bf16.msra.mxu0 %v610
        %633 = vmatprep.subr.bf16.mxu0 0
        %634 = vmatpush1.bf16.msra.mxu0 %v611
        %635 = vmatprep.subr.bf16.mxu0 0
        %636 = vmatpush1.bf16.msra.mxu0 %v612
        %637 = vmatprep.subr.bf16.mxu0 0
        %638 = vmatpush1.bf16.msra.mxu0 0
        %639 = vmatprep.subr.bf16.mxu0 0
        %640 = vmatpush1.bf16.msra.mxu0 0
        %641 = vmatprep.subr.bf16.mxu0 0
        %642 = vmatpush1.bf16.msra.mxu0 0
        %643 = vmatprep.subr.bf16.mxu0 0
        %644 = vmatpush1.bf16.msra.mxu0 0
        %645 = vmatprep.subr.bf16.mxu0 0
        %646 = vmatpush1.bf16.msra.mxu0 0
        %647 = vmatprep.subr.bf16.mxu0 0
        %648 = vmatpush1.bf16.msra.mxu0 0
        %649 = vmatprep.subr.bf16.mxu0 0
        %650 = vmatpush1.bf16.msra.mxu0 0
        %651 = vmatprep.subr.bf16.mxu0 0
        %652 = vmatpush1.bf16.msra.mxu0 0
        %653 = vmatprep.mubr.bf16.mxu0 0
        %654 = vmatmul.mubr.bf16.gmra.mrb[0].mxu0 %v553
        %v655 = vpop.f32.mrb[0].mxu0
        %v656 = vadd.f32 0.0, %v655
        %v657 = vpop.f32.mrb[0].mxu0
        %v658 = vpop.f32.mrb[0].mxu0
        %v659 = vadd.f32 0.0, %v658
        %v660 = vpop.f32.mrb[0].mxu0
        %661 = vmatprep.mubr.bf16.mxu0 0
        %662 = vmatmul.mubr.bf16.gmra.mrb[0].mxu0 %v554
        %v663 = vpop.f32.mrb[0].mxu0
        %v664 = vadd.f32 0.0, %v663
        %v665 = vpop.f32.mrb[0].mxu0
        %v666 = vpop.f32.mrb[0].mxu0
        %v667 = vadd.f32 0.0, %v666
        %v668 = vpop.f32.mrb[0].mxu0
        %669 = vmatprep.mubr.bf16.mxu0 0
        %670 = vmatmul.mubr.bf16.gmra.mrb[0].mxu0 %v555
        %v671 = vpop.f32.mrb[0].mxu0
        %v672 = vadd.f32 0.0, %v671
        %v673 = vpop.f32.mrb[0].mxu0
        %v674 = vpop.f32.mrb[0].mxu0
        %v675 = vadd.f32 0.0, %v674
        %v676 = vpop.f32.mrb[0].mxu0
        %677 = vmatprep.mubr.bf16.mxu0 0
        %678 = vmatmul.mubr.bf16.gmra.mrb[0].mxu0 %v556
        %v679 = vpop.f32.mrb[0].mxu0
        %v680 = vadd.f32 0.0, %v679
        %v681 = vpop.f32.mrb[0].mxu0
        %v682 = vpop.f32.mrb[0].mxu0
        %v683 = vadd.f32 0.0, %v682
        %v684 = vpop.f32.mrb[0].mxu0
        %685 = vdwg.mxu0
        %v686 = vpack.c.bf16 %v659, %v656
        %v687 = vpack.c.bf16 %v667, %v664
        %v688 = vpack.c.bf16 %v675, %v672
        %v689 = vpack.c.bf16 %v683, %v680
        %v690 = vld [vmem:[%s3] sm:$0xff]
        %v691 = vld [vmem:[%s3 + $0x8] sm:$0xff]
        %v692 = vld [vmem:[%s3 + $0x10] sm:$0xff]
        %v693 = vld [vmem:[%s3 + $0x18] sm:$0xff]
        %v694 = vld [vmem:[%s3 + $0x20] sm:$0xff]
        %v695 = vld [vmem:[%s3 + $0x28] sm:$0xff]
        %v696 = vld [vmem:[%s3 + $0x30] sm:$0xff]
        %v697 = vld [vmem:[%s3 + $0x38] sm:$0xff]
        %v698 = vld [vmem:[%s3 + $0x40] sm:$0xff]
        %v699 = vld [vmem:[%s3 + $0x48] sm:$0xff]
        %v700 = vld [vmem:[%s3 + $0x50] sm:$0xff]
        %v701 = vld [vmem:[%s3 + $0x58] sm:$0xff]
        %v702 = vld [vmem:[%s3 + $0x60] sm:$0xff]
        %v703 = vld [vmem:[%s3 + $0x68] sm:$0xff]
        %v704 = vld [vmem:[%s3 + $0x70] sm:$0xff]
        %v705 = vld [vmem:[%s3 + $0x78] sm:$0xff]
        %v706 = vld [vmem:[%s4] sm:$0x3]
        %v708 = vlaneseq
        %v709 = vshrl.u32 %v708, 7
        %v710 = vsub.s32 0, %v709
        %v711 = vrot.slane %v706, %v710
        %v712 = vlaneseq
        %v713 = vshrl.u32 %v712, 7
        %v714 = vsub.s32 1, %v713
        %v715 = vrot.slane %v706, %v714
        %v734 = vunpack.c.l.b16 %v690
        %v735 = vunpack.c.h.b16 %v690
        %v736 = vunpack.c.l.b16 %v691
        %v737 = vunpack.c.h.b16 %v691
        %v738 = vunpack.c.l.b16 %v692
        %v739 = vunpack.c.h.b16 %v692
        %v740 = vunpack.c.l.b16 %v693
        %v741 = vunpack.c.h.b16 %v693
        %v742 = vunpack.c.l.b16 %v694
        %v743 = vunpack.c.h.b16 %v694
        %v744 = vunpack.c.l.b16 %v695
        %v745 = vunpack.c.h.b16 %v695
        %v746 = vunpack.c.l.b16 %v696
        %v747 = vunpack.c.h.b16 %v696
        %v748 = vunpack.c.l.b16 %v697
        %v749 = vunpack.c.h.b16 %v697
        %v750 = vunpack.c.l.b16 %v698
        %v751 = vunpack.c.h.b16 %v698
        %v752 = vunpack.c.l.b16 %v699
        %v753 = vunpack.c.h.b16 %v699
        %v754 = vunpack.c.l.b16 %v700
        %v755 = vunpack.c.h.b16 %v700
        %v756 = vunpack.c.l.b16 %v701
        %v757 = vunpack.c.h.b16 %v701
        %v758 = vunpack.c.l.b16 %v702
        %v759 = vunpack.c.h.b16 %v702
        %v760 = vunpack.c.l.b16 %v703
        %v761 = vunpack.c.h.b16 %v703
        %v762 = vunpack.c.l.b16 %v704
        %v763 = vunpack.c.h.b16 %v704
        %v764 = vunpack.c.l.b16 %v705
        %v765 = vunpack.c.h.b16 %v705
        %v766 = vpack.c.b16 %v736, %v734
        %v767 = vpack.c.b16 %v737, %v735
        %v768 = vpack.c.b16 %v740, %v738
        %v769 = vpack.c.b16 %v741, %v739
        %v770 = vpack.c.b16 %v744, %v742
        %v771 = vpack.c.b16 %v745, %v743
        %v772 = vpack.c.b16 %v748, %v746
        %v773 = vpack.c.b16 %v749, %v747
        %v774 = vpack.c.b16 %v752, %v750
        %v775 = vpack.c.b16 %v753, %v751
        %v776 = vpack.c.b16 %v756, %v754
        %v777 = vpack.c.b16 %v757, %v755
        %v778 = vpack.c.b16 %v760, %v758
        %v779 = vpack.c.b16 %v761, %v759
        %v780 = vpack.c.b16 %v764, %v762
        %v781 = vpack.c.b16 %v765, %v763
        %798 = vmatprep.subr.bf16.mxu0 %v767
        %799 = vmatpush1.bf16.msra.mxu0 %v766
        %800 = vmatprep.subr.bf16.mxu0 %v769
        %801 = vmatpush1.bf16.msra.mxu0 %v768
        %802 = vmatprep.subr.bf16.mxu0 %v771
        %803 = vmatpush1.bf16.msra.mxu0 %v770
        %804 = vmatprep.subr.bf16.mxu0 %v773
        %805 = vmatpush1.bf16.msra.mxu0 %v772
        %806 = vmatprep.subr.bf16.mxu0 %v775
        %807 = vmatpush1.bf16.msra.mxu0 %v774
        %808 = vmatprep.subr.bf16.mxu0 %v777
        %809 = vmatpush1.bf16.msra.mxu0 %v776
        %810 = vmatprep.subr.bf16.mxu0 %v779
        %811 = vmatpush1.bf16.msra.mxu0 %v778
        %812 = vmatprep.subr.bf16.mxu0 %v781
        %813 = vmatpush1.bf16.msra.mxu0 %v780
        %814 = vmatprep.subr.bf16.mxu0 0
        %815 = vmatpush1.bf16.msra.mxu0 0
        %816 = vmatprep.subr.bf16.mxu0 0
        %817 = vmatpush1.bf16.msra.mxu0 0
        %818 = vmatprep.subr.bf16.mxu0 0
        %819 = vmatpush1.bf16.msra.mxu0 0
        %820 = vmatprep.subr.bf16.mxu0 0
        %821 = vmatpush1.bf16.msra.mxu0 0
        %822 = vmatprep.subr.bf16.mxu0 0
        %823 = vmatpush1.bf16.msra.mxu0 0
        %824 = vmatprep.subr.bf16.mxu0 0
        %825 = vmatpush1.bf16.msra.mxu0 0
        %826 = vmatprep.subr.bf16.mxu0 0
        %827 = vmatpush1.bf16.msra.mxu0 0
        %828 = vmatprep.subr.bf16.mxu0 0
        %829 = vmatpush1.bf16.msra.mxu0 0
        %830 = vmatprep.mubr.bf16.mxu0 0
        %831 = vmatmul.mubr.bf16.gmra.mrb[0].mxu0 %v686
        %v832 = vpop.f32.mrb[0].mxu0
        %v833 = vadd.f32 %v711, %v832
        %v834 = vpop.f32.mrb[0].mxu0
        %v835 = vadd.f32 %v715, %v834
        %v836 = vpop.f32.mrb[0].mxu0
        %v837 = vadd.f32 %v711, %v836
        %v838 = vpop.f32.mrb[0].mxu0
        %v839 = vadd.f32 %v715, %v838
        %840 = vmatprep.mubr.bf16.mxu0 0
        %841 = vmatmul.mubr.bf16.gmra.mrb[0].mxu0 %v687
        %v842 = vpop.f32.mrb[0].mxu0
        %v843 = vadd.f32 %v711, %v842
        %v844 = vpop.f32.mrb[0].mxu0
        %v845 = vadd.f32 %v715, %v844
        %v846 = vpop.f32.mrb[0].mxu0
        %v847 = vadd.f32 %v711, %v846
        %v848 = vpop.f32.mrb[0].mxu0
        %v849 = vadd.f32 %v715, %v848
        %850 = vmatprep.mubr.bf16.mxu0 0
        %851 = vmatmul.mubr.bf16.gmra.mrb[0].mxu0 %v688
        %v852 = vpop.f32.mrb[0].mxu0
        %v853 = vadd.f32 %v711, %v852
        %v854 = vpop.f32.mrb[0].mxu0
        %v855 = vadd.f32 %v715, %v854
        %v856 = vpop.f32.mrb[0].mxu0
        %v857 = vadd.f32 %v711, %v856
        %v858 = vpop.f32.mrb[0].mxu0
        %v859 = vadd.f32 %v715, %v858
        %860 = vmatprep.mubr.bf16.mxu0 0
        %861 = vmatmul.mubr.bf16.gmra.mrb[0].mxu0 %v689
        %v862 = vpop.f32.mrb[0].mxu0
        %v863 = vadd.f32 %v711, %v862
        %v864 = vpop.f32.mrb[0].mxu0
        %v865 = vadd.f32 %v715, %v864
        %v866 = vpop.f32.mrb[0].mxu0
        %v867 = vadd.f32 %v711, %v866
        %v868 = vpop.f32.mrb[0].mxu0
        %v869 = vadd.f32 %v715, %v868
        %870 = vdwg.mxu0
        %v871 = vmul.f32 %v833, %v833
        %v872 = vmul.f32 %v835, %v835
        %v873 = vmul.f32 %v837, %v837
        %v874 = vmul.f32 %v839, %v839
        %v875 = vmul.f32 %v843, %v843
        %v876 = vmul.f32 %v845, %v845
        %v877 = vmul.f32 %v847, %v847
        %v878 = vmul.f32 %v849, %v849
        %v879 = vmul.f32 %v853, %v853
        %v880 = vmul.f32 %v855, %v855
        %v881 = vmul.f32 %v857, %v857
        %v882 = vmul.f32 %v859, %v859
        %v883 = vmul.f32 %v863, %v863
        %v884 = vmul.f32 %v865, %v865
        %v885 = vmul.f32 %v867, %v867
        %v886 = vmul.f32 %v869, %v869
        %v887 = vmul.f32 %v833, %v871
        %v888 = vmul.f32 %v835, %v872
        %v889 = vmul.f32 %v837, %v873
        %v890 = vmul.f32 %v839, %v874
        %v891 = vmul.f32 %v843, %v875
        %v892 = vmul.f32 %v845, %v876
        %v893 = vmul.f32 %v847, %v877
        %v894 = vmul.f32 %v849, %v878
        %v895 = vmul.f32 %v853, %v879
        %v896 = vmul.f32 %v855, %v880
        %v897 = vmul.f32 %v857, %v881
        %v898 = vmul.f32 %v859, %v882
        %v899 = vmul.f32 %v863, %v883
        %v900 = vmul.f32 %v865, %v884
        %v901 = vmul.f32 %v867, %v885
        %v902 = vmul.f32 %v869, %v886
        %v903 = vmul.f32 %v887, 0.044715
        %v904 = vmul.f32 %v888, 0.044715
        %v905 = vmul.f32 %v889, 0.044715
        %v906 = vmul.f32 %v890, 0.044715
        %v907 = vmul.f32 %v891, 0.044715
        %v908 = vmul.f32 %v892, 0.044715
        %v909 = vmul.f32 %v893, 0.044715
        %v910 = vmul.f32 %v894, 0.044715
        %v911 = vmul.f32 %v895, 0.044715
        %v912 = vmul.f32 %v896, 0.044715
        %v913 = vmul.f32 %v897, 0.044715
        %v914 = vmul.f32 %v898, 0.044715
        %v915 = vmul.f32 %v899, 0.044715
        %v916 = vmul.f32 %v900, 0.044715
        %v917 = vmul.f32 %v901, 0.044715
        %v918 = vmul.f32 %v902, 0.044715
        %v919 = vadd.f32 %v833, %v903
        %v920 = vadd.f32 %v835, %v904
        %v921 = vadd.f32 %v837, %v905
        %v922 = vadd.f32 %v839, %v906
        %v923 = vadd.f32 %v843, %v907
        %v924 = vadd.f32 %v845, %v908
        %v925 = vadd.f32 %v847, %v909
        %v926 = vadd.f32 %v849, %v910
        %v927 = vadd.f32 %v853, %v911
        %v928 = vadd.f32 %v855, %v912
        %v929 = vadd.f32 %v857, %v913
        %v930 = vadd.f32 %v859, %v914
        %v931 = vadd.f32 %v863, %v915
        %v932 = vadd.f32 %v865, %v916
        %v933 = vadd.f32 %v867, %v917
        %v934 = vadd.f32 %v869, %v918
        %v935 = vmul.f32 %v919, 0.7978846
        %v936 = vmul.f32 %v920, 0.7978846
        %v937 = vmul.f32 %v921, 0.7978846
        %v938 = vmul.f32 %v922, 0.7978846
        %v939 = vmul.f32 %v923, 0.7978846
        %v940 = vmul.f32 %v924, 0.7978846
        %v941 = vmul.f32 %v925, 0.7978846
        %v942 = vmul.f32 %v926, 0.7978846
        %v943 = vmul.f32 %v927, 0.7978846
        %v944 = vmul.f32 %v928, 0.7978846
        %v945 = vmul.f32 %v929, 0.7978846
        %v946 = vmul.f32 %v930, 0.7978846
        %v947 = vmul.f32 %v931, 0.7978846
        %v948 = vmul.f32 %v932, 0.7978846
        %v949 = vmul.f32 %v933, 0.7978846
        %v950 = vmul.f32 %v934, 0.7978846
        %v951 = vtanh.pop %v935
        %v952 = vtanh.pop %v936
        %v953 = vtanh.pop %v937
        %v954 = vtanh.pop %v938
        %v955 = vtanh.pop %v939
        %v956 = vtanh.pop %v940
        %v957 = vtanh.pop %v941
        %v958 = vtanh.pop %v942
        %v959 = vtanh.pop %v943
        %v960 = vtanh.pop %v944
        %v961 = vtanh.pop %v945
        %v962 = vtanh.pop %v946
        %v963 = vtanh.pop %v947
        %v964 = vtanh.pop %v948
        %v965 = vtanh.pop %v949
        %v966 = vtanh.pop %v950
        %v967 = vadd.f32 %v951, 1.0
        %v968 = vadd.f32 %v952, 1.0
        %v969 = vadd.f32 %v953, 1.0
        %v970 = vadd.f32 %v954, 1.0
        %v971 = vadd.f32 %v955, 1.0
        %v972 = vadd.f32 %v956, 1.0
        %v973 = vadd.f32 %v957, 1.0
        %v974 = vadd.f32 %v958, 1.0
        %v975 = vadd.f32 %v959, 1.0
        %v976 = vadd.f32 %v960, 1.0
        %v977 = vadd.f32 %v961, 1.0
        %v978 = vadd.f32 %v962, 1.0
        %v979 = vadd.f32 %v963, 1.0
        %v980 = vadd.f32 %v964, 1.0
        %v981 = vadd.f32 %v965, 1.0
        %v982 = vadd.f32 %v966, 1.0
        %v983 = vmul.f32 %v967, 0.5
        %v984 = vmul.f32 %v968, 0.5
        %v985 = vmul.f32 %v969, 0.5
        %v986 = vmul.f32 %v970, 0.5
        %v987 = vmul.f32 %v971, 0.5
        %v988 = vmul.f32 %v972, 0.5
        %v989 = vmul.f32 %v973, 0.5
        %v990 = vmul.f32 %v974, 0.5
        %v991 = vmul.f32 %v975, 0.5
        %v992 = vmul.f32 %v976, 0.5
        %v993 = vmul.f32 %v977, 0.5
        %v994 = vmul.f32 %v978, 0.5
        %v995 = vmul.f32 %v979, 0.5
        %v996 = vmul.f32 %v980, 0.5
        %v997 = vmul.f32 %v981, 0.5
        %v998 = vmul.f32 %v982, 0.5
        %v999 = vmul.f32 %v833, %v983
        %v1000 = vmul.f32 %v835, %v984
        %v1001 = vmul.f32 %v837, %v985
        %v1002 = vmul.f32 %v839, %v986
        %v1003 = vmul.f32 %v843, %v987
        %v1004 = vmul.f32 %v845, %v988
        %v1005 = vmul.f32 %v847, %v989
        %v1006 = vmul.f32 %v849, %v990
        %v1007 = vmul.f32 %v853, %v991
        %v1008 = vmul.f32 %v855, %v992
        %v1009 = vmul.f32 %v857, %v993
        %v1010 = vmul.f32 %v859, %v994
        %v1011 = vmul.f32 %v863, %v995
        %v1012 = vmul.f32 %v865, %v996
        %v1013 = vmul.f32 %v867, %v997
        %v1014 = vmul.f32 %v869, %v998
        %v1015 = vpack.c.bf16 %v1001, %v999
        %v1016 = vpack.c.bf16 %v1002, %v1000
        %v1017 = vpack.c.bf16 %v1005, %v1003
        %v1018 = vpack.c.bf16 %v1006, %v1004
        %v1019 = vpack.c.bf16 %v1009, %v1007
        %v1020 = vpack.c.bf16 %v1010, %v1008
        %v1021 = vpack.c.bf16 %v1013, %v1011
        %v1022 = vpack.c.bf16 %v1014, %v1012
        %v1023 = vld [vmem:[%s5] sm:$0xf]
        %v1024 = vld [vmem:[%s5 + $0x4] sm:$0xf]
        %v1025 = vld [vmem:[%s5 + $0x8] sm:$0xf]
        %v1026 = vld [vmem:[%s5 + $0xc] sm:$0xf]
        %v1027 = vld [vmem:[%s5 + $0x10] sm:$0xf]
        %v1028 = vld [vmem:[%s5 + $0x14] sm:$0xf]
        %v1029 = vld [vmem:[%s5 + $0x18] sm:$0xf]
        %v1030 = vld [vmem:[%s5 + $0x1c] sm:$0xf]
        %v1031 = vld [vmem:[%s5 + $0x20] sm:$0xf]
        %v1032 = vld [vmem:[%s5 + $0x24] sm:$0xf]
        %v1033 = vld [vmem:[%s5 + $0x28] sm:$0xf]
        %v1034 = vld [vmem:[%s5 + $0x2c] sm:$0xf]
        %v1035 = vld [vmem:[%s5 + $0x30] sm:$0xf]
        %v1036 = vld [vmem:[%s5 + $0x34] sm:$0xf]
        %v1037 = vld [vmem:[%s5 + $0x38] sm:$0xf]
        %v1038 = vld [vmem:[%s5 + $0x3c] sm:$0xf]
        %v1039 = vld [vmem:[%s5 + $0x40] sm:$0xf]
        %v1040 = vld [vmem:[%s5 + $0x44] sm:$0xf]
        %v1041 = vld [vmem:[%s5 + $0x48] sm:$0xf]
        %v1042 = vld [vmem:[%s5 + $0x4c] sm:$0xf]
        %v1043 = vld [vmem:[%s5 + $0x50] sm:$0xf]
        %v1044 = vld [vmem:[%s5 + $0x54] sm:$0xf]
        %v1045 = vld [vmem:[%s5 + $0x58] sm:$0xf]
        %v1046 = vld [vmem:[%s5 + $0x5c] sm:$0xf]
        %v1047 = vld [vmem:[%s5 + $0x60] sm:$0xf]
        %v1048 = vld [vmem:[%s5 + $0x64] sm:$0xf]
        %v1049 = vld [vmem:[%s5 + $0x68] sm:$0xf]
        %v1050 = vld [vmem:[%s5 + $0x6c] sm:$0xf]
        %v1051 = vld [vmem:[%s5 + $0x70] sm:$0xf]
        %v1052 = vld [vmem:[%s5 + $0x74] sm:$0xf]
        %v1053 = vld [vmem:[%s5 + $0x78] sm:$0xf]
        %v1054 = vld [vmem:[%s5 + $0x7c] sm:$0xf]
        %v1087 = vunpack.c.l.b16 %v1023
        %v1088 = vunpack.c.l.b16 %v1024
        %v1089 = vunpack.c.l.b16 %v1025
        %v1090 = vunpack.c.l.b16 %v1026
        %v1091 = vunpack.c.l.b16 %v1027
        %v1092 = vunpack.c.l.b16 %v1028
        %v1093 = vunpack.c.l.b16 %v1029
        %v1094 = vunpack.c.l.b16 %v1030
        %v1095 = vunpack.c.l.b16 %v1031
        %v1096 = vunpack.c.l.b16 %v1032
        %v1097 = vunpack.c.l.b16 %v1033
        %v1098 = vunpack.c.l.b16 %v1034
        %v1099 = vunpack.c.l.b16 %v1035
        %v1100 = vunpack.c.l.b16 %v1036
        %v1101 = vunpack.c.l.b16 %v1037
        %v1102 = vunpack.c.l.b16 %v1038
        %v1103 = vunpack.c.l.b16 %v1039
        %v1104 = vunpack.c.l.b16 %v1040
        %v1105 = vunpack.c.l.b16 %v1041
        %v1106 = vunpack.c.l.b16 %v1042
        %v1107 = vunpack.c.l.b16 %v1043
        %v1108 = vunpack.c.l.b16 %v1044
        %v1109 = vunpack.c.l.b16 %v1045
        %v1110 = vunpack.c.l.b16 %v1046
        %v1111 = vunpack.c.l.b16 %v1047
        %v1112 = vunpack.c.l.b16 %v1048
        %v1113 = vunpack.c.l.b16 %v1049
        %v1114 = vunpack.c.l.b16 %v1050
        %v1115 = vunpack.c.l.b16 %v1051
        %v1116 = vunpack.c.l.b16 %v1052
        %v1117 = vunpack.c.l.b16 %v1053
        %v1118 = vunpack.c.l.b16 %v1054
        %v1119 = vpack.c.b16 %v1088, %v1087
        %v1120 = vpack.c.b16 %v1090, %v1089
        %v1121 = vpack.c.b16 %v1092, %v1091
        %v1122 = vpack.c.b16 %v1094, %v1093
        %v1123 = vpack.c.b16 %v1096, %v1095
        %v1124 = vpack.c.b16 %v1098, %v1097
        %v1125 = vpack.c.b16 %v1100, %v1099
        %v1126 = vpack.c.b16 %v1102, %v1101
        %v1127 = vpack.c.b16 %v1104, %v1103
        %v1128 = vpack.c.b16 %v1106, %v1105
        %v1129 = vpack.c.b16 %v1108, %v1107
        %v1130 = vpack.c.b16 %v1110, %v1109
        %v1131 = vpack.c.b16 %v1112, %v1111
        %v1132 = vpack.c.b16 %v1114, %v1113
        %v1133 = vpack.c.b16 %v1116, %v1115
        %v1134 = vpack.c.b16 %v1118, %v1117
        %1151 = vmatprep.subr.bf16.mxu0 0
        %1152 = vmatpush1.bf16.msra.mxu0 %v1119
        %1153 = vmatprep.subr.bf16.mxu0 0
        %1154 = vmatpush1.bf16.msra.mxu0 %v1120
        %1155 = vmatprep.subr.bf16.mxu0 0
        %1156 = vmatpush1.bf16.msra.mxu0 %v1121
        %1157 = vmatprep.subr.bf16.mxu0 0
        %1158 = vmatpush1.bf16.msra.mxu0 %v1122
        %1159 = vmatprep.subr.bf16.mxu0 0
        %1160 = vmatpush1.bf16.msra.mxu0 %v1123
        %1161 = vmatprep.subr.bf16.mxu0 0
        %1162 = vmatpush1.bf16.msra.mxu0 %v1124
        %1163 = vmatprep.subr.bf16.mxu0 0
        %1164 = vmatpush1.bf16.msra.mxu0 %v1125
        %1165 = vmatprep.subr.bf16.mxu0 0
        %1166 = vmatpush1.bf16.msra.mxu0 %v1126
        %1167 = vmatprep.subr.bf16.mxu0 0
        %1168 = vmatpush1.bf16.msra.mxu0 %v1127
        %1169 = vmatprep.subr.bf16.mxu0 0
        %1170 = vmatpush1.bf16.msra.mxu0 %v1128
        %1171 = vmatprep.subr.bf16.mxu0 0
        %1172 = vmatpush1.bf16.msra.mxu0 %v1129
        %1173 = vmatprep.subr.bf16.mxu0 0
        %1174 = vmatpush1.bf16.msra.mxu0 %v1130
        %1175 = vmatprep.subr.bf16.mxu0 0
        %1176 = vmatpush1.bf16.msra.mxu0 %v1131
        %1177 = vmatprep.subr.bf16.mxu0 0
        %1178 = vmatpush1.bf16.msra.mxu0 %v1132
        %1179 = vmatprep.subr.bf16.mxu0 0
        %1180 = vmatpush1.bf16.msra.mxu0 %v1133
        %1181 = vmatprep.subr.bf16.mxu0 0
        %1182 = vmatpush1.bf16.msra.mxu0 %v1134
        %1183 = vmatprep.mubr.bf16.mxu0 %v1016
        %1184 = vmatmul.mubr.bf16.gmra.mrb[0].mxu0 %v1015
        %v1185 = vpop.f32.mrb[0].mxu0
        %v1186 = vadd.f32 0.0, %v1185
        %v1187 = vpop.f32.mrb[0].mxu0
        %v1188 = vpop.f32.mrb[0].mxu0
        %v1189 = vadd.f32 0.0, %v1188
        %v1190 = vpop.f32.mrb[0].mxu0
        %1191 = vmatprep.mubr.bf16.mxu0 %v1018
        %1192 = vmatmul.mubr.bf16.gmra.mrb[0].mxu0 %v1017
        %v1193 = vpop.f32.mrb[0].mxu0
        %v1194 = vadd.f32 0.0, %v1193
        %v1195 = vpop.f32.mrb[0].mxu0
        %v1196 = vpop.f32.mrb[0].mxu0
        %v1197 = vadd.f32 0.0, %v1196
        %v1198 = vpop.f32.mrb[0].mxu0
        %1199 = vmatprep.mubr.bf16.mxu0 %v1020
        %1200 = vmatmul.mubr.bf16.gmra.mrb[0].mxu0 %v1019
        %v1201 = vpop.f32.mrb[0].mxu0
        %v1202 = vadd.f32 0.0, %v1201
        %v1203 = vpop.f32.mrb[0].mxu0
        %v1204 = vpop.f32.mrb[0].mxu0
        %v1205 = vadd.f32 0.0, %v1204
        %v1206 = vpop.f32.mrb[0].mxu0
        %1207 = vmatprep.mubr.bf16.mxu0 %v1022
        %1208 = vmatmul.mubr.bf16.gmra.mrb[0].mxu0 %v1021
        %v1209 = vpop.f32.mrb[0].mxu0
        %v1210 = vadd.f32 0.0, %v1209
        %v1211 = vpop.f32.mrb[0].mxu0
        %v1212 = vpop.f32.mrb[0].mxu0
        %v1213 = vadd.f32 0.0, %v1212
        %v1214 = vpop.f32.mrb[0].mxu0
        %1215 = vdwg.mxu0
        %v1216 = vadd.f32 %v656, %v1186
        %v1217 = vadd.f32 %v659, %v1189
        %v1218 = vadd.f32 %v664, %v1194
        %v1219 = vadd.f32 %v667, %v1197
        %v1220 = vadd.f32 %v672, %v1202
        %v1221 = vadd.f32 %v675, %v1205
        %v1222 = vadd.f32 %v680, %v1210
        %v1223 = vadd.f32 %v683, %v1213
        %v1224 = vld [vmem:[%s6] sm:$0x1]
        %v1226 = vlaneseq
        %v1227 = vshrl.u32 %v1226, 7
        %v1228 = vsub.s32 0, %v1227
        %v1229 = vrot.slane %v1224, %v1228
        %v1231 = vadd.f32 %v1216, %v1229
        %v1232 = vadd.f32 %v1217, %v1229
        %v1233 = vadd.f32 %v1218, %v1229
        %v1234 = vadd.f32 %v1219, %v1229
        %v1235 = vadd.f32 %v1220, %v1229
        %v1236 = vadd.f32 %v1221, %v1229
        %v1237 = vadd.f32 %v1222, %v1229
        %v1238 = vadd.f32 %v1223, %v1229
        %1239 = vst [vmem:[%s461] sm:$0xff] %v1231
        %1240 = vst [vmem:[%s461 + $0x8] sm:$0xff] %v1232
        %1241 = vst [vmem:[%s461 + $0x10] sm:$0xff] %v1233
        %1242 = vst [vmem:[%s461 + $0x18] sm:$0xff] %v1234
        %1243 = vst [vmem:[%s461 + $0x20] sm:$0xff] %v1235
        %1244 = vst [vmem:[%s461 + $0x28] sm:$0xff] %v1236
        %1245 = vst [vmem:[%s461 + $0x30] sm:$0xff] %v1237
        %1246 = vst [vmem:[%s461 + $0x38] sm:$0xff] %v1238
        %v1247 = vpack.c.bf16 %v1232, %v1231
        %v1248 = vpack.c.bf16 %v1234, %v1233
        %v1249 = vpack.c.bf16 %v1236, %v1235
        %v1250 = vpack.c.bf16 %v1238, %v1237
        %v1251 = vld [vmem:[%s7] sm:$0xf]
        %v1252 = vld [vmem:[%s7 + $0x4] sm:$0xf]
        %v1253 = vld [vmem:[%s7 + $0x8] sm:$0xf]
        %v1254 = vld [vmem:[%s7 + $0xc] sm:$0xf]
        %v1255 = vld [vmem:[%s7 + $0x10] sm:$0xf]
        %v1256 = vld [vmem:[%s7 + $0x14] sm:$0xf]
        %v1257 = vld [vmem:[%s7 + $0x18] sm:$0xf]
        %v1258 = vld [vmem:[%s7 + $0x1c] sm:$0xf]
        %v1259 = vld [vmem:[%s7 + $0x20] sm:$0xf]
        %v1260 = vld [vmem:[%s7 + $0x24] sm:$0xf]
        %v1261 = vld [vmem:[%s7 + $0x28] sm:$0xf]
        %v1262 = vld [vmem:[%s7 + $0x2c] sm:$0xf]
        %v1263 = vld [vmem:[%s7 + $0x30] sm:$0xf]
        %v1264 = vld [vmem:[%s7 + $0x34] sm:$0xf]
        %v1265 = vld [vmem:[%s7 + $0x38] sm:$0xf]
        %v1266 = vld [vmem:[%s7 + $0x3c] sm:$0xf]
        %v1267 = vld [vmem:[%s8] sm:$0x1]
        %v1269 = vlaneseq
        %v1270 = vshrl.u32 %v1269, 7
        %v1271 = vsub.s32 0, %v1270
        %v1272 = vrot.slane %v1267, %v1271
        %v1290 = vunpack.c.l.b16 %v1251
        %v1291 = vunpack.c.l.b16 %v1252
        %v1292 = vunpack.c.l.b16 %v1253
        %v1293 = vunpack.c.l.b16 %v1254
        %v1294 = vunpack.c.l.b16 %v1255
        %v1295 = vunpack.c.l.b16 %v1256
        %v1296 = vunpack.c.l.b16 %v1257
        %v1297 = vunpack.c.l.b16 %v1258
        %v1298 = vunpack.c.l.b16 %v1259
        %v1299 = vunpack.c.l.b16 %v1260
        %v1300 = vunpack.c.l.b16 %v1261
        %v1301 = vunpack.c.l.b16 %v1262
        %v1302 = vunpack.c.l.b16 %v1263
        %v1303 = vunpack.c.l.b16 %v1264
        %v1304 = vunpack.c.l.b16 %v1265
        %v1305 = vunpack.c.l.b16 %v1266
        %v1306 = vpack.c.b16 %v1291, %v1290
        %v1307 = vpack.c.b16 %v1293, %v1292
        %v1308 = vpack.c.b16 %v1295, %v1294
        %v1309 = vpack.c.b16 %v1297, %v1296
        %v1310 = vpack.c.b16 %v1299, %v1298
        %v1311 = vpack.c.b16 %v1301, %v1300
        %v1312 = vpack.c.b16 %v1303, %v1302
        %v1313 = vpack.c.b16 %v1305, %v1304
        %1322 = vmatprep.subr.bf16.mxu0 0
        %1323 = vmatpush1.bf16.msra.mxu0 %v1306
        %1324 = vmatprep.subr.bf16.mxu0 0
        %1325 = vmatpush1.bf16.msra.mxu0 %v1307
        %1326 = vmatprep.subr.bf16.mxu0 0
        %1327 = vmatpush1.bf16.msra.mxu0 %v1308
        %1328 = vmatprep.subr.bf16.mxu0 0
        %1329 = vmatpush1.bf16.msra.mxu0 %v1309
        %1330 = vmatprep.subr.bf16.mxu0 0
        %1331 = vmatpush1.bf16.msra.mxu0 %v1310
        %1332 = vmatprep.subr.bf16.mxu0 0
        %1333 = vmatpush1.bf16.msra.mxu0 %v1311
        %1334 = vmatprep.subr.bf16.mxu0 0
        %1335 = vmatpush1.bf16.msra.mxu0 %v1312
        %1336 = vmatprep.subr.bf16.mxu0 0
        %1337 = vmatpush1.bf16.msra.mxu0 %v1313
        %1338 = vmatprep.subr.bf16.mxu0 0
        %1339 = vmatpush1.bf16.msra.mxu0 0
        %1340 = vmatprep.subr.bf16.mxu0 0
        %1341 = vmatpush1.bf16.msra.mxu0 0
        %1342 = vmatprep.subr.bf16.mxu0 0
        %1343 = vmatpush1.bf16.msra.mxu0 0
        %1344 = vmatprep.subr.bf16.mxu0 0
        %1345 = vmatpush1.bf16.msra.mxu0 0
        %1346 = vmatprep.subr.bf16.mxu0 0
        %1347 = vmatpush1.bf16.msra.mxu0 0
        %1348 = vmatprep.subr.bf16.mxu0 0
        %1349 = vmatpush1.bf16.msra.mxu0 0
        %1350 = vmatprep.subr.bf16.mxu0 0
        %1351 = vmatpush1.bf16.msra.mxu0 0
        %1352 = vmatprep.subr.bf16.mxu0 0
        %1353 = vmatpush1.bf16.msra.mxu0 0
        %1354 = vmatprep.mubr.bf16.mxu0 0
        %1355 = vmatmul.mubr.bf16.gmra.mrb[0].mxu0 %v1247
        %v1356 = vpop.f32.mrb[0].mxu0
        %v1357 = vadd.f32 %v1272, %v1356
        %v1358 = vpop.f32.mrb[0].mxu0
        %v1359 = vpop.f32.mrb[0].mxu0
        %v1360 = vadd.f32 %v1272, %v1359
        %v1361 = vpop.f32.mrb[0].mxu0
        %1362 = vmatprep.mubr.bf16.mxu0 0
        %1363 = vmatmul.mubr.bf16.gmra.mrb[0].mxu0 %v1248
        %v1364 = vpop.f32.mrb[0].mxu0
        %v1365 = vadd.f32 %v1272, %v1364
        %v1366 = vpop.f32.mrb[0].mxu0
        %v1367 = vpop.f32.mrb[0].mxu0
        %v1368 = vadd.f32 %v1272, %v1367
        %v1369 = vpop.f32.mrb[0].mxu0
        %1370 = vmatprep.mubr.bf16.mxu0 0
        %1371 = vmatmul.mubr.bf16.gmra.mrb[0].mxu0 %v1249
        %v1372 = vpop.f32.mrb[0].mxu0
        %v1373 = vadd.f32 %v1272, %v1372
        %v1374 = vpop.f32.mrb[0].mxu0
        %v1375 = vpop.f32.mrb[0].mxu0
        %v1376 = vadd.f32 %v1272, %v1375
        %v1377 = vpop.f32.mrb[0].mxu0
        %1378 = vmatprep.mubr.bf16.mxu0 0
        %1379 = vmatmul.mubr.bf16.gmra.mrb[0].mxu0 %v1250
        %v1380 = vpop.f32.mrb[0].mxu0
        %v1381 = vadd.f32 %v1272, %v1380
        %v1382 = vpop.f32.mrb[0].mxu0
        %v1383 = vpop.f32.mrb[0].mxu0
        %v1384 = vadd.f32 %v1272, %v1383
        %v1385 = vpop.f32.mrb[0].mxu0
        %1386 = vdwg.mxu0
        %v1387 = vtanh.pop %v1357
        %v1388 = vtanh.pop %v1360
        %v1389 = vtanh.pop %v1365
        %v1390 = vtanh.pop %v1368
        %v1391 = vtanh.pop %v1373
        %v1392 = vtanh.pop %v1376
        %v1393 = vtanh.pop %v1381
        %v1394 = vtanh.pop %v1384
        %v1395 = vld [vmem:[#allocation2] sm:$0x1]
        %v1396 = vld [vmem:[%s486] sm:$0xff]
        %v1397 = vld [vmem:[%s486 + $0x8] sm:$0xff]
        %v1398 = vld [vmem:[%s486 + $0x10] sm:$0xff]
        %v1399 = vld [vmem:[%s486 + $0x18] sm:$0xff]
        %v1400 = vld [vmem:[%s486 + $0x20] sm:$0xff]
        %v1401 = vld [vmem:[%s486 + $0x28] sm:$0xff]
        %v1402 = vld [vmem:[%s486 + $0x30] sm:$0xff]
        %v1403 = vld [vmem:[%s486 + $0x38] sm:$0xff]
        %1405 = vset.pattern.permute.xlu0 0
        %1406 = vperm.xlu0 %1405, %v1396
        %v1407 = vpop.permute.xlu0 %1406
        %1410 = vset.pattern.permute.xlu0 0
        %1411 = vperm.xlu0 %1410, %v1397
        %v1412 = vpop.permute.xlu0 %1411
        %1415 = vset.pattern.permute.xlu0 0
        %1416 = vperm.xlu0 %1415, %v1398
        %v1417 = vpop.permute.xlu0 %1416
        %1420 = vset.pattern.permute.xlu0 0
        %1421 = vperm.xlu0 %1420, %v1399
        %v1422 = vpop.permute.xlu0 %1421
        %1425 = vset.pattern.permute.xlu0 0
        %1426 = vperm.xlu0 %1425, %v1400
        %v1427 = vpop.permute.xlu0 %1426
        %1430 = vset.pattern.permute.xlu0 0
        %1431 = vperm.xlu0 %1430, %v1401
        %v1432 = vpop.permute.xlu0 %1431
        %1435 = vset.pattern.permute.xlu0 0
        %1436 = vperm.xlu0 %1435, %v1402
        %v1437 = vpop.permute.xlu0 %1436
        %1440 = vset.pattern.permute.xlu0 0
        %1441 = vperm.xlu0 %1440, %v1403
        %v1442 = vpop.permute.xlu0 %1441
        %v1444 = vmul.f32 %v1387, %v1407
        %v1445 = vmul.f32 %v1388, %v1412
        %v1446 = vmul.f32 %v1389, %v1417
        %v1447 = vmul.f32 %v1390, %v1422
        %v1448 = vmul.f32 %v1391, %v1427
        %v1449 = vmul.f32 %v1392, %v1432
        %v1450 = vmul.f32 %v1393, %v1437
        %v1451 = vmul.f32 %v1394, %v1442
        %v1452 = vadd.f32 %v1444, %v1445
        %v1453 = vadd.f32 %v1452, %v1446
        %v1454 = vadd.f32 %v1453, %v1447
        %v1455 = vadd.f32 %v1454, %v1448
        %v1456 = vadd.f32 %v1455, %v1449
        %v1457 = vadd.f32 %v1456, %v1450
        %v1458 = vadd.f32 %v1457, %v1451
        %v1459 = vrot.slane %v1458, 4
        %v1460 = vadd.f32 %v1458, %v1459
        %v1461 = vrot.slane %v1460, 2
        %v1462 = vadd.f32 %v1460, %v1461
        %v1463 = vrot.slane %v1462, 1
        %v1464 = vadd.f32 %v1462, %v1463
        %v1465 = vadd.f32 %v1395, %v1464
        %1466 = vst [vmem:[#allocation2] sm:$0x1] %v1465
        %p1467 = scmp.eq.s32.totalorder %s35, 1
        // Predicated region
        $region69: #{tpu_custom_call.1} parent=63 // pred_check
          %p1468 = pneg %p1467
        $region70: #{tpu_custom_call.1} parent=63 // pred_check_branch
          %1470 = sbr.rel (%p1468) target = $region72
        $region71: #{tpu_custom_call.1} parent=63 // pred_region
          %v1471 = vld [vmem:[#allocation2] sm:$0x1]
          %v1472 = vpack.c.bf16 %v1471, %v1471
          %v1473 = vld [vmem:[%s9] sm:$0xf]
          %v1474 = vld [vmem:[%s9 + $0x4] sm:$0xf]
          %v1475 = vld [vmem:[%s9 + $0x8] sm:$0xf]
          %v1476 = vld [vmem:[%s9 + $0xc] sm:$0xf]
          %v1477 = vld [vmem:[%s9 + $0x10] sm:$0xf]
          %v1478 = vld [vmem:[%s9 + $0x14] sm:$0xf]
          %v1479 = vld [vmem:[%s9 + $0x18] sm:$0xf]
          %v1480 = vld [vmem:[%s9 + $0x1c] sm:$0xf]
          %v1481 = vld [vmem:[%s9 + $0x20] sm:$0xf]
          %v1482 = vld [vmem:[%s9 + $0x24] sm:$0xf]
          %v1483 = vld [vmem:[%s9 + $0x28] sm:$0xf]
          %v1484 = vld [vmem:[%s9 + $0x2c] sm:$0xf]
          %v1485 = vld [vmem:[%s9 + $0x30] sm:$0xf]
          %v1486 = vld [vmem:[%s9 + $0x34] sm:$0xf]
          %v1487 = vld [vmem:[%s9 + $0x38] sm:$0xf]
          %v1488 = vld [vmem:[%s9 + $0x3c] sm:$0xf]
          %v1489 = vld [vmem:[%s10] sm:$0x1]
          %v1506 = vunpack.c.l.b16 %v1473
          %v1507 = vunpack.c.l.b16 %v1474
          %v1508 = vunpack.c.l.b16 %v1475
          %v1509 = vunpack.c.l.b16 %v1476
          %v1510 = vunpack.c.l.b16 %v1477
          %v1511 = vunpack.c.l.b16 %v1478
          %v1512 = vunpack.c.l.b16 %v1479
          %v1513 = vunpack.c.l.b16 %v1480
          %v1514 = vunpack.c.l.b16 %v1481
          %v1515 = vunpack.c.l.b16 %v1482
          %v1516 = vunpack.c.l.b16 %v1483
          %v1517 = vunpack.c.l.b16 %v1484
          %v1518 = vunpack.c.l.b16 %v1485
          %v1519 = vunpack.c.l.b16 %v1486
          %v1520 = vunpack.c.l.b16 %v1487
          %v1521 = vunpack.c.l.b16 %v1488
          %v1522 = vpack.c.b16 %v1507, %v1506
          %v1523 = vpack.c.b16 %v1509, %v1508
          %v1524 = vpack.c.b16 %v1511, %v1510
          %v1525 = vpack.c.b16 %v1513, %v1512
          %v1526 = vpack.c.b16 %v1515, %v1514
          %v1527 = vpack.c.b16 %v1517, %v1516
          %v1528 = vpack.c.b16 %v1519, %v1518
          %v1529 = vpack.c.b16 %v1521, %v1520
          %1538 = vmatprep.subr.bf16.mxu0 0
          %1539 = vmatpush1.bf16.msra.mxu0 %v1522
          %1540 = vmatprep.subr.bf16.mxu0 0
          %1541 = vmatpush1.bf16.msra.mxu0 %v1523
          %1542 = vmatprep.subr.bf16.mxu0 0
          %1543 = vmatpush1.bf16.msra.mxu0 %v1524
          %1544 = vmatprep.subr.bf16.mxu0 0
          %1545 = vmatpush1.bf16.msra.mxu0 %v1525
          %1546 = vmatprep.subr.bf16.mxu0 0
          %1547 = vmatpush1.bf16.msra.mxu0 %v1526
          %1548 = vmatprep.subr.bf16.mxu0 0
          %1549 = vmatpush1.bf16.msra.mxu0 %v1527
          %1550 = vmatprep.subr.bf16.mxu0 0
          %1551 = vmatpush1.bf16.msra.mxu0 %v1528
          %1552 = vmatprep.subr.bf16.mxu0 0
          %1553 = vmatpush1.bf16.msra.mxu0 %v1529
          %1554 = vmatprep.subr.bf16.mxu0 0
          %1555 = vmatpush1.bf16.msra.mxu0 0
          %1556 = vmatprep.subr.bf16.mxu0 0
          %1557 = vmatpush1.bf16.msra.mxu0 0
          %1558 = vmatprep.subr.bf16.mxu0 0
          %1559 = vmatpush1.bf16.msra.mxu0 0
          %1560 = vmatprep.subr.bf16.mxu0 0
          %1561 = vmatpush1.bf16.msra.mxu0 0
          %1562 = vmatprep.subr.bf16.mxu0 0
          %1563 = vmatpush1.bf16.msra.mxu0 0
          %1564 = vmatprep.subr.bf16.mxu0 0
          %1565 = vmatpush1.bf16.msra.mxu0 0
          %1566 = vmatprep.subr.bf16.mxu0 0
          %1567 = vmatpush1.bf16.msra.mxu0 0
          %1568 = vmatprep.subr.bf16.mxu0 0
          %1569 = vmatpush1.bf16.msra.mxu0 0
          %1570 = vmatprep.mubr.bf16.mxu0 0
          %1571 = vmatmul.mubr.bf16.gmra.mrb[0].mxu0 %v1472
          %v1572 = vpop.f32.mrb[0].mxu0
          %v1573 = vadd.f32 %v1489, %v1572
          %v1574 = vpop.f32.mrb[0].mxu0
          %v1575 = vpop.f32.mrb[0].mxu0
          %v1576 = vpop.f32.mrb[0].mxu0
          %1577 = vdwg.mxu0
          %1578 = vst [vmem:[%s467] sm:$0x1] %v1573
        $region72: #{tpu_custom_call.1} parent=63 // pred_fallthru
          _
        %s1579 = sand.u32 %s297, 1
        %s1580 = scalar_lea.sflag [#allocation4], %s1579
        %s1581 = sand.u32 %s297, 1
        %s1582 = smul.addr %s1581, 64
        %s1583 = scalar_lea.vmem [#allocation3], %s1582
        %s1584 = sand.u32 %s323, 1
        %s1585 = scalar_lea.sflag [#allocation6], %s1584
        %s1586 = sand.u32 %s323, 1
        %s1587 = scalar_lea.vmem [#allocation5], %s1586
        // Predicated region
        $region73: #{tpu_custom_call.1} parent=63 // pred_check
          %p1588 = pneg %p307
        $region74: #{tpu_custom_call.1} parent=63 // pred_check_branch
          %1590 = sbr.rel (%p1588) target = $region76
        $region75: #{tpu_custom_call.1} parent=63 // pred_region
          %s1591 = smul.u32 8, %s35
          %s1593 = ssub.s32 1024, 1024
          %1594 = vsyncadd %s1580, %s1593
          %s1595 = smul.addr %s34, 16
          %s1596 = sadd.s32 %s1591, %s1595
          %s1597 = smul.addr %s1596, 128
          %s1598 = scalar_lea.hbm %s11, %s1597
          %s1599 = sshll.u32 %s1583, 4
          %s1600 = int_to_ptr.vmem [resolvable:$true] %s1599
          %1605 = dma.vmem_to_hbm [thread:$0]  %s1600, 1024, %s1598, %s1580, 128, 128, 8
        $region76: #{tpu_custom_call.1} parent=63 // pred_fallthru
          _
        // Predicated region
        $region77: #{tpu_custom_call.1} parent=63 // pred_check
          %p1606 = pneg %p333
        $region78: #{tpu_custom_call.1} parent=63 // pred_check_branch
          %1608 = sbr.rel (%p1606) target = $region80
        $region79: #{tpu_custom_call.1} parent=63 // pred_region
          %s1610 = ssub.s32 16, 16
          %1611 = vsyncadd %s1585, %s1610
          %s1612 = smul.addr %s34, 16
          %s1613 = scalar_lea.hbm %s12, %s1612
          %s1615 = sshll.u32 %s1587, 4
          %s1616 = int_to_ptr.vmem [resolvable:$true] %s1615
          %1618 = dma.vmem_to_hbm [thread:$0]  %s1616, 16, %s1613, %s1585
        $region80: #{tpu_custom_call.1} parent=63 // pred_fallthru
          _
      $region64: #{tpu_custom_call.1} parent=5 // pred_fallthru
        _
      %p1619 = scmp.le.s32.totalorder 2, %s25
      // Predicated region
      $region81: #{tpu_custom_call.1} parent=5 // pred_check
        %p1620 = pneg %p1619
      $region82: #{tpu_custom_call.1} parent=5 // pred_check_branch
        %1622 = sbr.rel (%p1620) target = $region84
      $region83: #{tpu_custom_call.1} parent=5 // pred_region
        %s1623 = ssub.s32 %s25, 2
        // Predicated region
        $region85: #{tpu_custom_call.1} parent=83 // pred_check
          %p1624 = pneg %p313
        $region86: #{tpu_custom_call.1} parent=83 // pred_check_branch
          %1626 = sbr.rel (%p1624) target = $region88
        $region87: #{tpu_custom_call.1} parent=83 // pred_region
          %s1627 = sand.u32 %s298, 1
          %s1628 = scalar_lea.sflag [#allocation4], %s1627
          %s1629 = sand.u32 %s298, 1
          %s1630 = smul.addr %s1629, 64
          %s1631 = scalar_lea.vmem [#allocation3], %s1630
          %1632 = dma.done %s1628, 1024
        $region88: #{tpu_custom_call.1} parent=83 // pred_fallthru
          _
        // Predicated region
        $region89: #{tpu_custom_call.1} parent=83 // pred_check
          %p1633 = pneg %p339
        $region90: #{tpu_custom_call.1} parent=83 // pred_check_branch
          %1635 = sbr.rel (%p1633) target = $region92
        $region91: #{tpu_custom_call.1} parent=83 // pred_region
          %s1636 = sand.u32 %s324, 1
          %s1637 = scalar_lea.sflag [#allocation6], %s1636
          %s1638 = sand.u32 %s324, 1
          %s1639 = scalar_lea.vmem [#allocation5], %s1638
          %1640 = dma.done %s1637, 16
        $region92: #{tpu_custom_call.1} parent=83 // pred_fallthru
          _
      $region84: #{tpu_custom_call.1} parent=5 // pred_fallthru
        _
    $region6: #{tpu_custom_call.1} parent=1 // loop_footer
      %s29 = sadd.s32 1, %s25
    $region7: #{tpu_custom_call.1} parent=1 // loop_footer_branch
      %24 = sbr.rel target = $region3
    $region8: #{tpu_custom_call.1} parent=1 // loop_exit
      _
    %1641 = vsyncpa [#allocation4], 1
    %s1642 = scalar_lea.sflag [#allocation4], 1
    %1643 = vsyncpa %s1642, 1
    %1644 = vsyncpa [#allocation6], 1
    %s1645 = scalar_lea.sflag [#allocation6], 1
    %1646 = vsyncpa %s1645, 1

</llo_original>
